<compile_context>
chip_gen: v7x
topology: tpu7x:2x2x1
jax: 0.10.0
libtpu: 0.0.40
codegen_flags: <defaults>
</compile_context>

<pallas_src>
import numpy as np
import jax
import jax.numpy as jnp
from jax.experimental import pallas as pl
from jax.experimental.pallas import tpu as pltpu

W = 32                                                             # module "width"
NF = W // 4                                                        # 8 Fourier freqs / coord
B_FREQ = (np.pi * (2.0 ** np.arange(NF))).astype(np.float32)       # (8,) reference freqs
_PI = float(np.float32(np.pi))
_HIGHEST = jax.lax.Precision.HIGHEST                               # wrapper folds / reference only


def _gelu_tanh(x):
    # tanh-form GELU: one EUP tanh + a handful of VALU ops.
    c = 0.7978845608028654  # sqrt(2/pi)
    return 0.5 * x * (1.0 + jnp.tanh(c * (x + 0.044715 * (x * x * x))))


def _split_bf16(a):
    """Split f32 array into (hi, lo) with hi exactly bf16-representable."""
    hi = a.astype(jnp.bfloat16).astype(jnp.float32)
    return hi, a - hi


def _dot3(a_hi, a_lo, w_hi, w_lo):
    """~f32-accurate matmul from three single-pass bf16 MXU products."""
    return (jnp.dot(a_hi, w_hi, preferred_element_type=jnp.float32)
            + jnp.dot(a_hi, w_lo, preferred_element_type=jnp.float32)
            + jnp.dot(a_lo, w_hi, preferred_element_type=jnp.float32))


# ---------------------------------------------------------------------------
# Pallas kernel: one tile of TM points, all folded/split weights in VMEM.
# ---------------------------------------------------------------------------
def iphi_kernel(xd_ref, f2_ref, offs_ref,
                w1_hi_ref, w1_lo_ref, b1_ref,
                w2_hi_ref, w2_lo_ref, b2_ref,
                w3_hi_ref, w3_lo_ref, b3_ref,
                out_ref):
    xd = xd_ref[...]                                   # (TM, 4) = [x, y, angle, radius]

    # --- Fourier phase: exact single-pass MXU expansion ---------------------
    # arg[:, 8d+k]      = pi*2^k * xd[:, d]            (sin block)
    # arg[:, 32+8d+k]   = pi*2^k * xd[:, d] + pi/2     (cos block)
    t = xd * _PI
    t_hi, r1 = _split_bf16(t)
    t_mid, t_lo = _split_bf16(r1)
    lhs = jnp.concatenate([t_hi, t_mid, t_lo], axis=-1)            # (TM, 12)
    arg = (jnp.dot(lhs, f2_ref[...], preferred_element_type=jnp.float32)
           + offs_ref[...])                                        # (TM, 64)
    s = jnp.sin(arg)                                               # [sin | cos]

    # --- fc0 + fc_no_code + fc1 (folded, fused with sin/cos contraction) ----
    feat = jnp.concatenate([s, xd], axis=-1)                       # (TM, 68)
    f_hi, f_lo = _split_bf16(feat)
    h = _gelu_tanh(_dot3(f_hi, f_lo, w1_hi_ref[...], w1_lo_ref[...]) + b1_ref[...])

    # --- fc2 -> gelu ---------------------------------------------------------
    h_hi, h_lo = _split_bf16(h)
    h = _gelu_tanh(_dot3(h_hi, h_lo, w2_hi_ref[...], w2_lo_ref[...]) + b2_ref[...])

    # --- fc3 (zero-padded to 128 output lanes, only lanes 0:2 are real) -----
    h_hi, h_lo = _split_bf16(h)
    o = _dot3(h_hi, h_lo, w3_hi_ref[...], w3_lo_ref[...]) + b3_ref[...]

    x2 = xd[:, 0:2]                                                # original coordinates
    out_ref[...] = (x2 + x2 * o[:, 0:2]).astype(out_ref.dtype)


# ---------------------------------------------------------------------------
# Wrapper helpers
# ---------------------------------------------------------------------------
def _round_up(a, m):
    return ((a + m - 1) // m) * m


def _cdiv(a, b):
    return (a + b - 1) // b


def _choose_tm(rows, tm_req):
    """Row-tile size: as big as requested (multiple of 128), but keep >= 2 grid
    steps when rows allow, and prefer an EVEN step count so both v7x
    TensorCores get balanced work."""
    tm = max(128, _round_up(tm_req, 128))
    if rows <= 128:
        return 128
    tm = min(tm, _round_up(_cdiv(rows, 2), 128))       # >= 2 steps
    steps = _cdiv(rows, tm)
    if steps > 1 and steps % 2 == 1:                   # try to make the step count even
        alt = _round_up(_cdiv(rows, steps + 1), 128)
        if alt >= 128 and _cdiv(rows, alt) % 2 == 0:
            tm = alt
    return tm


def _fold_params(params):
    """Fold fc0 -> fc_no_code -> fc1 into one affine map fused with the sin/cos
    contraction, split all big weights into exactly-bf16-representable hi/lo
    pairs, and build the exact power-of-two phase matrix.  O(params) work."""
    w0, b0, wnc, bnc, w1, b1, w2, b2, w3, b3 = params

    wf = jnp.dot(wnc, w1, precision=_HIGHEST)                      # (3W, 4W)
    bf = jnp.dot(bnc, w1, precision=_HIGHEST) + b1                 # (1, 4W)
    wxd = jnp.dot(w0, wf[:W], precision=_HIGHEST)                  # (4, 4W)
    b1s = jnp.dot(b0, wf[:W], precision=_HIGHEST) + bf             # (1, 4W)
    # fused first-layer weight, rows ordered to match feat = [sin(32)|cos(32)|xd(4)]
    w1s = jnp.concatenate([wf[W:2 * W], wf[2 * W:3 * W], wxd], axis=0)   # (68, 4W)

    w3p = jnp.pad(w3, ((0, 0), (0, 4 * W - 2)))                    # (4W, 4W)
    b3p = jnp.pad(b3, ((0, 0), (0, 4 * W - 2)))                    # (1, 4W)

    # Phase matrix (12, 64): rows = [t_hi | t_mid | t_lo] x coord, entries are
    # EXACT powers of two (pi is folded into the LHS in f32 inside the kernel).
    f2_np = np.zeros((12, 2 * W), np.float32)
    two_k = (2.0 ** np.arange(NF)).astype(np.float32)
    for split in range(3):
        for d in range(4):
            r = 4 * split + d
            f2_np[r, d * NF:(d + 1) * NF] = two_k                  # sin block
            f2_np[r, W + d * NF:W + (d + 1) * NF] = two_k          # cos block
    offs_np = np.concatenate([np.zeros((W,), np.float32),
                              np.full((W,), np.pi / 2, np.float32)]).reshape(1, 2 * W)

    def split(w):
        hi = w.astype(jnp.bfloat16).astype(jnp.float32)
        return hi, w - hi

    w1_hi, w1_lo = split(w1s)
    w2_hi, w2_lo = split(w2)
    w3_hi, w3_lo = split(w3p)

    return (jnp.asarray(f2_np), jnp.asarray(offs_np),
            w1_hi, w1_lo, b1s, w2_hi, w2_lo, b2, w3_hi, w3_lo, b3p)


# ---------------------------------------------------------------------------
# Wrapper
# ---------------------------------------------------------------------------
def iphi_pallas(x, params, tm=512):
    bsz, n, _ = x.shape
    rows = bsz * n
    tm = _choose_tm(rows, tm)
    rows_p = _round_up(rows, tm)

    # cheap per-point prep (angle / radius) stays in plain JAX glue
    dx = x - jnp.array([0.5, 0.5], x.dtype)
    angle = jnp.arctan2(dx[..., 1], dx[..., 0])
    radius = jnp.sqrt(jnp.sum(dx * dx, axis=-1))
    xd = jnp.stack([x[..., 0], x[..., 1], angle, radius], axis=-1).reshape(rows, 4)
    xd = jnp.pad(xd, ((0, rows_p - rows), (0, 0)))                 # zero rows are harmless

    weights = _fold_params(params)

    def full(a):
        return pl.BlockSpec(a.shape, lambda i: (0, 0))             # all weights are 2-D

    wbytes = sum(int(np.prod(w.shape)) * 4 for w in weights)
    cost = pl.CostEstimate(
        flops=int(2 * rows_p * (12 * 64 + 3 * (68 * 128 + 2 * 128 * 128))),
        transcendentals=int(rows_p * (64 + 2 * 128)),
        bytes_accessed=int(rows_p * (16 + 8) + wbytes),
    )

    out = pl.pallas_call(
        iphi_kernel,
        out_shape=jax.ShapeDtypeStruct((rows_p, 2), x.dtype),
        grid=(rows_p // tm,),
        in_specs=[pl.BlockSpec((tm, 4), lambda i: (i, 0))] + [full(w) for w in weights],
        out_specs=pl.BlockSpec((tm, 2), lambda i: (i, 0)),
        compiler_params=pltpu.CompilerParams(dimension_semantics=("parallel",)),
        cost_estimate=cost,
    )(xd, *weights)

    return out[:rows].reshape(bsz, n, 2)


# ---------------------------------------------------------------------------
# Pure-JAX reference (mirrors the PyTorch forward with code=None, exact GELU)
# ---------------------------------------------------------------------------
def iphi_reference(x, params):
    w0, b0, wnc, bnc, w1, b1, w2, b2, w3, b3 = params
    center = jnp.array([0.5, 0.5], x.dtype)
    angle = jnp.arctan2(x[..., 1] - 0.5, x[..., 0] - 0.5)
    radius = jnp.linalg.norm(x - center, axis=-1)
    xd = jnp.stack([x[..., 0], x[..., 1], angle, radius], axis=-1)
    b, n, d = xd.shape
    bf = jnp.asarray(B_FREQ).reshape(1, 1, 1, NF)
    x_sin = jnp.sin(bf * xd[..., None]).reshape(b, n, d * NF)
    x_cos = jnp.cos(bf * xd[..., None]).reshape(b, n, d * NF)
    h0 = jnp.dot(xd, w0, precision=_HIGHEST) + b0
    xf = jnp.concatenate([h0, x_sin, x_cos], axis=-1)
    h = jnp.dot(xf, wnc, precision=_HIGHEST) + bnc
    h = jnp.dot(h, w1, precision=_HIGHEST) + b1
    h = jax.nn.gelu(h, approximate=False)
    h = jnp.dot(h, w2, precision=_HIGHEST) + b2
    h = jax.nn.gelu(h, approximate=False)
    o = jnp.dot(h, w3, precision=_HIGHEST) + b3
    return x + x * o


# ---------------------------------------------------------------------------
# Deterministic parameter init (PyTorch Linear-style uniform bounds)
# ---------------------------------------------------------------------------
def init_params(key):
    ks = jax.random.split(key, 10)

    def lin(kw, kb, fin, fout):
        bound = 1.0 / np.sqrt(fin)
        w = jax.random.uniform(kw, (fin, fout), jnp.float32, -bound, bound)
        b = jax.random.uniform(kb, (1, fout), jnp.float32, -bound, bound)
        return w, b

    w0, b0 = lin(ks[0], ks[1], 4, W)
    wnc, bnc = lin(ks[2], ks[3], 3 * W, 4 * W)
    w1, b1 = lin(ks[4], ks[5], 4 * W, 4 * W)
    w2, b2 = lin(ks[6], ks[7], 4 * W, 4 * W)
    w3, b3 = lin(ks[8], ks[9], 4 * W, 2)
    return (w0, b0, wnc, bnc, w1, b1, w2, b2, w3, b3)


if __name__ == "__main__":
    key = jax.random.PRNGKey(0)
    kx, kp = jax.random.split(key)
    # batch=2, n_points=64, coords=2  (small, consistent with the module)
    x = jax.random.uniform(kx, (2, 64, 2), jnp.float32)
    params = init_params(kp)

    out = iphi_pallas(x, params)
    out = jax.block_until_ready(out)

    ref = iphi_reference(x, params)
    err = float(jnp.max(jnp.abs(out - ref)))
    assert out.shape == x.shape, (out.shape, x.shape)
    # tolerance accounts for tanh-form GELU vs the exact-erf GELU of the reference
    assert err < 2e-3, f"max abs err {err}"
    print("KERNEL_OK")
</pallas_src>

<mosaic_0001>
module attributes {stable_mosaic.version = 11 : i64} {
  func.func @iphi_kernel(%arg0: i32, %arg1: memref<128x4xf32, #tpu.memory_space<vmem>>, %arg2: memref<12x64xf32, #tpu.memory_space<vmem>>, %arg3: memref<1x64xf32, #tpu.memory_space<vmem>>, %arg4: memref<68x128xf32, #tpu.memory_space<vmem>>, %arg5: memref<68x128xf32, #tpu.memory_space<vmem>>, %arg6: memref<1x128xf32, #tpu.memory_space<vmem>>, %arg7: memref<128x128xf32, #tpu.memory_space<vmem>>, %arg8: memref<128x128xf32, #tpu.memory_space<vmem>>, %arg9: memref<1x128xf32, #tpu.memory_space<vmem>>, %arg10: memref<128x128xf32, #tpu.memory_space<vmem>>, %arg11: memref<128x128xf32, #tpu.memory_space<vmem>>, %arg12: memref<1x128xf32, #tpu.memory_space<vmem>>, %arg13: memref<128x2xf32, #tpu.memory_space<vmem>>) attributes {dimension_semantics = [#tpu.dimension_semantics<parallel>], iteration_bounds = array<i64: 1>, scalar_prefetch = 0 : i64, scratch_operands = 0 : i64, tpu.core_type = #tpu.core_type<tc>, window_params = [{transform_indices = @transform_0, window_bounds = array<i64: 128, 4>}, {pipeline_mode = #tpu.pipeline_mode<synchronous>, transform_indices = @transform_1, window_bounds = array<i64: 12, 64>}, {pipeline_mode = #tpu.pipeline_mode<synchronous>, transform_indices = @transform_2, window_bounds = array<i64: 1, 64>}, {pipeline_mode = #tpu.pipeline_mode<synchronous>, transform_indices = @transform_3, window_bounds = array<i64: 68, 128>}, {pipeline_mode = #tpu.pipeline_mode<synchronous>, transform_indices = @transform_4, window_bounds = array<i64: 68, 128>}, {pipeline_mode = #tpu.pipeline_mode<synchronous>, transform_indices = @transform_5, window_bounds = array<i64: 1, 128>}, {pipeline_mode = #tpu.pipeline_mode<synchronous>, transform_indices = @transform_6, window_bounds = array<i64: 128, 128>}, {pipeline_mode = #tpu.pipeline_mode<synchronous>, transform_indices = @transform_7, window_bounds = array<i64: 128, 128>}, {pipeline_mode = #tpu.pipeline_mode<synchronous>, transform_indices = @transform_8, window_bounds = array<i64: 1, 128>}, {pipeline_mode = #tpu.pipeline_mode<synchronous>, transform_indices = @transform_9, window_bounds = array<i64: 128, 128>}, {pipeline_mode = #tpu.pipeline_mode<synchronous>, transform_indices = @transform_10, window_bounds = array<i64: 128, 128>}, {pipeline_mode = #tpu.pipeline_mode<synchronous>, transform_indices = @transform_11, window_bounds = array<i64: 1, 128>}, {transform_indices = @transform_12, window_bounds = array<i64: 128, 2>}]} {
    %c0 = arith.constant 0 : index
    %c0_0 = arith.constant 0 : index
    %0 = vector.load %arg1[%c0, %c0_0] : memref<128x4xf32, #tpu.memory_space<vmem>>, vector<128x4xf32>
    %cst = arith.constant 3.14159274 : f32
    %1 = vector.broadcast %cst : f32 to vector<128x4xf32>
    %2 = arith.mulf %0, %1 : vector<128x4xf32>
    %3 = arith.truncf %2 : vector<128x4xf32> to vector<128x4xbf16>
    %4 = arith.extf %3 : vector<128x4xbf16> to vector<128x4xf32>
    %5 = arith.subf %2, %4 : vector<128x4xf32>
    %6 = arith.truncf %5 : vector<128x4xf32> to vector<128x4xbf16>
    %7 = arith.extf %6 : vector<128x4xbf16> to vector<128x4xf32>
    %8 = arith.subf %5, %7 : vector<128x4xf32>
    %9 = tpu.concatenate %4, %7, %8 in 1 : vector<128x4xf32>, vector<128x4xf32>, vector<128x4xf32> -> vector<128x12xf32>
    %c0_1 = arith.constant 0 : index
    %c0_2 = arith.constant 0 : index
    %10 = vector.load %arg2[%c0_1, %c0_2] : memref<12x64xf32, #tpu.memory_space<vmem>>, vector<12x64xf32>
    %cst_3 = arith.constant dense<0.000000e+00> : vector<128x64xf32>
    %11 = tpu.matmul %9, %10, %cst_3 {dimension_numbers = #tpu.dot_dimension_numbers<[1], [0], [0], [1], [0, 0, 1, 1], [], []>} : vector<128x12xf32>, vector<12x64xf32>, vector<128x64xf32> -> vector<128x64xf32>
    %c0_4 = arith.constant 0 : index
    %c0_5 = arith.constant 0 : index
    %12 = vector.load %arg3[%c0_4, %c0_5] : memref<1x64xf32, #tpu.memory_space<vmem>>, vector<1x64xf32>
    %13 = vector.broadcast %12 : vector<1x64xf32> to vector<128x64xf32>
    %14 = arith.addf %11, %13 : vector<128x64xf32>
    %15 = math.sin %14 : vector<128x64xf32>
    %16 = tpu.concatenate %15, %0 in 1 : vector<128x64xf32>, vector<128x4xf32> -> vector<128x68xf32>
    %17 = arith.truncf %16 : vector<128x68xf32> to vector<128x68xbf16>
    %18 = arith.extf %17 : vector<128x68xbf16> to vector<128x68xf32>
    %19 = arith.subf %16, %18 : vector<128x68xf32>
    %c0_6 = arith.constant 0 : index
    %c0_7 = arith.constant 0 : index
    %20 = vector.load %arg4[%c0_6, %c0_7] : memref<68x128xf32, #tpu.memory_space<vmem>>, vector<68x128xf32>
    %c0_8 = arith.constant 0 : index
    %c0_9 = arith.constant 0 : index
    %21 = vector.load %arg5[%c0_8, %c0_9] : memref<68x128xf32, #tpu.memory_space<vmem>>, vector<68x128xf32>
    %cst_10 = arith.constant dense<0.000000e+00> : vector<128x128xf32>
    %22 = tpu.matmul %18, %20, %cst_10 {dimension_numbers = #tpu.dot_dimension_numbers<[1], [0], [0], [1], [0, 0, 1, 1], [], []>} : vector<128x68xf32>, vector<68x128xf32>, vector<128x128xf32> -> vector<128x128xf32>
    %cst_11 = arith.constant dense<0.000000e+00> : vector<128x128xf32>
    %23 = tpu.matmul %18, %21, %cst_11 {dimension_numbers = #tpu.dot_dimension_numbers<[1], [0], [0], [1], [0, 0, 1, 1], [], []>} : vector<128x68xf32>, vector<68x128xf32>, vector<128x128xf32> -> vector<128x128xf32>
    %24 = arith.addf %22, %23 : vector<128x128xf32>
    %cst_12 = arith.constant dense<0.000000e+00> : vector<128x128xf32>
    %25 = tpu.matmul %19, %20, %cst_12 {dimension_numbers = #tpu.dot_dimension_numbers<[1], [0], [0], [1], [0, 0, 1, 1], [], []>} : vector<128x68xf32>, vector<68x128xf32>, vector<128x128xf32> -> vector<128x128xf32>
    %26 = arith.addf %24, %25 : vector<128x128xf32>
    %c0_13 = arith.constant 0 : index
    %c0_14 = arith.constant 0 : index
    %27 = vector.load %arg6[%c0_13, %c0_14] : memref<1x128xf32, #tpu.memory_space<vmem>>, vector<1x128xf32>
    %28 = vector.broadcast %27 : vector<1x128xf32> to vector<128x128xf32>
    %29 = arith.addf %26, %28 : vector<128x128xf32>
    %cst_15 = arith.constant 5.000000e-01 : f32
    %30 = vector.broadcast %cst_15 : f32 to vector<128x128xf32>
    %31 = arith.mulf %30, %29 : vector<128x128xf32>
    %32 = arith.mulf %29, %29 : vector<128x128xf32>
    %33 = arith.mulf %32, %29 : vector<128x128xf32>
    %cst_16 = arith.constant 4.471500e-02 : f32
    %34 = vector.broadcast %cst_16 : f32 to vector<128x128xf32>
    %35 = arith.mulf %34, %33 : vector<128x128xf32>
    %36 = arith.addf %29, %35 : vector<128x128xf32>
    %cst_17 = arith.constant 0.797884583 : f32
    %37 = vector.broadcast %cst_17 : f32 to vector<128x128xf32>
    %38 = arith.mulf %37, %36 : vector<128x128xf32>
    %39 = math.tanh %38 : vector<128x128xf32>
    %cst_18 = arith.constant 1.000000e+00 : f32
    %40 = vector.broadcast %cst_18 : f32 to vector<128x128xf32>
    %41 = arith.addf %40, %39 : vector<128x128xf32>
    %42 = arith.mulf %31, %41 : vector<128x128xf32>
    %43 = arith.truncf %42 : vector<128x128xf32> to vector<128x128xbf16>
    %44 = arith.extf %43 : vector<128x128xbf16> to vector<128x128xf32>
    %45 = arith.subf %42, %44 : vector<128x128xf32>
    %c0_19 = arith.constant 0 : index
    %c0_20 = arith.constant 0 : index
    %46 = vector.load %arg7[%c0_19, %c0_20] : memref<128x128xf32, #tpu.memory_space<vmem>>, vector<128x128xf32>
    %c0_21 = arith.constant 0 : index
    %c0_22 = arith.constant 0 : index
    %47 = vector.load %arg8[%c0_21, %c0_22] : memref<128x128xf32, #tpu.memory_space<vmem>>, vector<128x128xf32>
    %cst_23 = arith.constant dense<0.000000e+00> : vector<128x128xf32>
    %48 = tpu.matmul %44, %46, %cst_23 {dimension_numbers = #tpu.dot_dimension_numbers<[1], [0], [0], [1], [0, 0, 1, 1], [], []>} : vector<128x128xf32>, vector<128x128xf32>, vector<128x128xf32> -> vector<128x128xf32>
    %cst_24 = arith.constant dense<0.000000e+00> : vector<128x128xf32>
    %49 = tpu.matmul %44, %47, %cst_24 {dimension_numbers = #tpu.dot_dimension_numbers<[1], [0], [0], [1], [0, 0, 1, 1], [], []>} : vector<128x128xf32>, vector<128x128xf32>, vector<128x128xf32> -> vector<128x128xf32>
    %50 = arith.addf %48, %49 : vector<128x128xf32>
    %cst_25 = arith.constant dense<0.000000e+00> : vector<128x128xf32>
    %51 = tpu.matmul %45, %46, %cst_25 {dimension_numbers = #tpu.dot_dimension_numbers<[1], [0], [0], [1], [0, 0, 1, 1], [], []>} : vector<128x128xf32>, vector<128x128xf32>, vector<128x128xf32> -> vector<128x128xf32>
    %52 = arith.addf %50, %51 : vector<128x128xf32>
    %c0_26 = arith.constant 0 : index
    %c0_27 = arith.constant 0 : index
    %53 = vector.load %arg9[%c0_26, %c0_27] : memref<1x128xf32, #tpu.memory_space<vmem>>, vector<1x128xf32>
    %54 = vector.broadcast %53 : vector<1x128xf32> to vector<128x128xf32>
    %55 = arith.addf %52, %54 : vector<128x128xf32>
    %cst_28 = arith.constant 5.000000e-01 : f32
    %56 = vector.broadcast %cst_28 : f32 to vector<128x128xf32>
    %57 = arith.mulf %56, %55 : vector<128x128xf32>
    %58 = arith.mulf %55, %55 : vector<128x128xf32>
    %59 = arith.mulf %58, %55 : vector<128x128xf32>
    %cst_29 = arith.constant 4.471500e-02 : f32
    %60 = vector.broadcast %cst_29 : f32 to vector<128x128xf32>
    %61 = arith.mulf %60, %59 : vector<128x128xf32>
    %62 = arith.addf %55, %61 : vector<128x128xf32>
    %cst_30 = arith.constant 0.797884583 : f32
    %63 = vector.broadcast %cst_30 : f32 to vector<128x128xf32>
    %64 = arith.mulf %63, %62 : vector<128x128xf32>
    %65 = math.tanh %64 : vector<128x128xf32>
    %cst_31 = arith.constant 1.000000e+00 : f32
    %66 = vector.broadcast %cst_31 : f32 to vector<128x128xf32>
    %67 = arith.addf %66, %65 : vector<128x128xf32>
    %68 = arith.mulf %57, %67 : vector<128x128xf32>
    %69 = arith.truncf %68 : vector<128x128xf32> to vector<128x128xbf16>
    %70 = arith.extf %69 : vector<128x128xbf16> to vector<128x128xf32>
    %71 = arith.subf %68, %70 : vector<128x128xf32>
    %c0_32 = arith.constant 0 : index
    %c0_33 = arith.constant 0 : index
    %72 = vector.load %arg10[%c0_32, %c0_33] : memref<128x128xf32, #tpu.memory_space<vmem>>, vector<128x128xf32>
    %c0_34 = arith.constant 0 : index
    %c0_35 = arith.constant 0 : index
    %73 = vector.load %arg11[%c0_34, %c0_35] : memref<128x128xf32, #tpu.memory_space<vmem>>, vector<128x128xf32>
    %cst_36 = arith.constant dense<0.000000e+00> : vector<128x128xf32>
    %74 = tpu.matmul %70, %72, %cst_36 {dimension_numbers = #tpu.dot_dimension_numbers<[1], [0], [0], [1], [0, 0, 1, 1], [], []>} : vector<128x128xf32>, vector<128x128xf32>, vector<128x128xf32> -> vector<128x128xf32>
    %cst_37 = arith.constant dense<0.000000e+00> : vector<128x128xf32>
    %75 = tpu.matmul %70, %73, %cst_37 {dimension_numbers = #tpu.dot_dimension_numbers<[1], [0], [0], [1], [0, 0, 1, 1], [], []>} : vector<128x128xf32>, vector<128x128xf32>, vector<128x128xf32> -> vector<128x128xf32>
    %76 = arith.addf %74, %75 : vector<128x128xf32>
    %cst_38 = arith.constant dense<0.000000e+00> : vector<128x128xf32>
    %77 = tpu.matmul %71, %72, %cst_38 {dimension_numbers = #tpu.dot_dimension_numbers<[1], [0], [0], [1], [0, 0, 1, 1], [], []>} : vector<128x128xf32>, vector<128x128xf32>, vector<128x128xf32> -> vector<128x128xf32>
    %78 = arith.addf %76, %77 : vector<128x128xf32>
    %c0_39 = arith.constant 0 : index
    %c0_40 = arith.constant 0 : index
    %79 = vector.load %arg12[%c0_39, %c0_40] : memref<1x128xf32, #tpu.memory_space<vmem>>, vector<1x128xf32>
    %80 = vector.broadcast %79 : vector<1x128xf32> to vector<128x128xf32>
    %81 = arith.addf %78, %80 : vector<128x128xf32>
    %82 = vector.extract_strided_slice %0 {offsets = [0, 0], sizes = [128, 2], strides = [1, 1]} : vector<128x4xf32> to vector<128x2xf32>
    %83 = vector.extract_strided_slice %81 {offsets = [0, 0], sizes = [128, 2], strides = [1, 1]} : vector<128x128xf32> to vector<128x2xf32>
    %84 = arith.mulf %82, %83 : vector<128x2xf32>
    %85 = arith.addf %82, %84 : vector<128x2xf32>
    %c0_41 = arith.constant 0 : index
    %c0_42 = arith.constant 0 : index
    %86 = vector.load %arg13[%c0_41, %c0_42] : memref<128x2xf32, #tpu.memory_space<vmem>>, vector<128x2xf32>
    tpu.vector_store %arg13[%c0_41, %c0_42], %85 {strides = array<i32>} : memref<128x2xf32, #tpu.memory_space<vmem>>, vector<128x2xf32>,
    return
  }
  func.func @transform_0(%arg0: i32) -> (i32, i32) {
    %c0_i32 = arith.constant 0 : i32
    %c0_i32_0 = arith.constant 0 : i32
    return %arg0, %c0_i32 : i32, i32
  }
  func.func @transform_1(%arg0: i32) -> (i32, i32) {
    %c0_i32 = arith.constant 0 : i32
    %c0_i32_0 = arith.constant 0 : i32
    %c0_i32_1 = arith.constant 0 : i32
    return %c0_i32, %c0_i32_0 : i32, i32
  }
  func.func @transform_2(%arg0: i32) -> (i32, i32) {
    %c0_i32 = arith.constant 0 : i32
    %c0_i32_0 = arith.constant 0 : i32
    %c0_i32_1 = arith.constant 0 : i32
    return %c0_i32, %c0_i32_0 : i32, i32
  }
  func.func @transform_3(%arg0: i32) -> (i32, i32) {
    %c0_i32 = arith.constant 0 : i32
    %c0_i32_0 = arith.constant 0 : i32
    %c0_i32_1 = arith.constant 0 : i32
    return %c0_i32, %c0_i32_0 : i32, i32
  }
  func.func @transform_4(%arg0: i32) -> (i32, i32) {
    %c0_i32 = arith.constant 0 : i32
    %c0_i32_0 = arith.constant 0 : i32
    %c0_i32_1 = arith.constant 0 : i32
    return %c0_i32, %c0_i32_0 : i32, i32
  }
  func.func @transform_5(%arg0: i32) -> (i32, i32) {
    %c0_i32 = arith.constant 0 : i32
    %c0_i32_0 = arith.constant 0 : i32
    %c0_i32_1 = arith.constant 0 : i32
    return %c0_i32, %c0_i32_0 : i32, i32
  }
  func.func @transform_6(%arg0: i32) -> (i32, i32) {
    %c0_i32 = arith.constant 0 : i32
    %c0_i32_0 = arith.constant 0 : i32
    %c0_i32_1 = arith.constant 0 : i32
    return %c0_i32, %c0_i32_0 : i32, i32
  }
  func.func @transform_7(%arg0: i32) -> (i32, i32) {
    %c0_i32 = arith.constant 0 : i32
    %c0_i32_0 = arith.constant 0 : i32
    %c0_i32_1 = arith.constant 0 : i32
    return %c0_i32, %c0_i32_0 : i32, i32
  }
  func.func @transform_8(%arg0: i32) -> (i32, i32) {
    %c0_i32 = arith.constant 0 : i32
    %c0_i32_0 = arith.constant 0 : i32
    %c0_i32_1 = arith.constant 0 : i32
    return %c0_i32, %c0_i32_0 : i32, i32
  }
  func.func @transform_9(%arg0: i32) -> (i32, i32) {
    %c0_i32 = arith.constant 0 : i32
    %c0_i32_0 = arith.constant 0 : i32
    %c0_i32_1 = arith.constant 0 : i32
    return %c0_i32, %c0_i32_0 : i32, i32
  }
  func.func @transform_10(%arg0: i32) -> (i32, i32) {
    %c0_i32 = arith.constant 0 : i32
    %c0_i32_0 = arith.constant 0 : i32
    %c0_i32_1 = arith.constant 0 : i32
    return %c0_i32, %c0_i32_0 : i32, i32
  }
  func.func @transform_11(%arg0: i32) -> (i32, i32) {
    %c0_i32 = arith.constant 0 : i32
    %c0_i32_0 = arith.constant 0 : i32
    %c0_i32_1 = arith.constant 0 : i32
    return %c0_i32, %c0_i32_0 : i32, i32
  }
  func.func @transform_12(%arg0: i32) -> (i32, i32) {
    %c0_i32 = arith.constant 0 : i32
    %c0_i32_0 = arith.constant 0 : i32
    return %arg0, %c0_i32 : i32, i32
  }
}

</mosaic_0001>

<llo_original>
// kernel: tpu_custom_call.1
$region0: #{tpu_custom_call.1}
  #allocation0 [shape = 'u32[]', space=smem, size = 0x4, offset = 0x4, fixed_abs, tag = 'smem constant byte address 0x4 - core index']
  #allocation1 [shape = 'u32[144,128]{1,0:T(1,128)}', space=vmem, size = 0x12000, scoped, tag = 'internal scratch']
  %s0 = inlined_call_operand.vmem [shape: f32[128,4], index: 0, kind: input, shape index: {}]
  %s1 = inlined_call_operand.vmem [shape: f32[12,64], index: 1, kind: input, shape index: {}]
  %s2 = inlined_call_operand.vmem [shape: f32[1,64], index: 2, kind: input, shape index: {}]
  %s3 = inlined_call_operand.hbm [shape: f32[68,128], index: 3, kind: input, shape index: {}]
  %s4 = inlined_call_operand.hbm [shape: f32[68,128], index: 4, kind: input, shape index: {}]
  %s5 = inlined_call_operand.vmem [shape: f32[1,128], index: 5, kind: input, shape index: {}]
  %s6 = inlined_call_operand.vmem [shape: f32[128,128], index: 6, kind: input, shape index: {}]
  %s7 = inlined_call_operand.hbm [shape: f32[128,128], index: 7, kind: input, shape index: {}]
  %s8 = inlined_call_operand.vmem [shape: f32[1,128], index: 8, kind: input, shape index: {}]
  %s9 = inlined_call_operand.hbm [shape: f32[128,128], index: 9, kind: input, shape index: {}]
  %s10 = inlined_call_operand.hbm [shape: f32[128,128], index: 10, kind: input, shape index: {}]
  %s11 = inlined_call_operand.vmem [shape: f32[1,128], index: 11, kind: input, shape index: {}]
  %s12 = inlined_call_operand.vmem [shape: f32[128,2], index: 12, kind: output, shape index: {}]
  %s13 = sld [smem:[#allocation0]]
  $region78: #{tpu_custom_call.1} parent=0
    _
  %s15 = ssub.s32 1, %s13
  %s16 = scalar_select 0, %s15, %s13
  $region1: #{tpu_custom_call.1} parent=0
    #allocation2 [shape = 'u8[36864]{0}', space=vmem, size = 0x9000, scoped, tag = 'input window, operand 3, single buffered']
    #allocation3 [shape = 's32[1]{0}', space=sflag, size = 0x4, scoped, tag = 'scoped memory for tpu_custom_call.1']
    #allocation4 [shape = 'u8[36864]{0}', space=vmem, size = 0x9000, scoped, tag = 'input window, operand 4, single buffered']
    #allocation5 [shape = 's32[1]{0}', space=sflag, size = 0x4, scoped, tag = 'scoped memory for tpu_custom_call.1']
    #allocation6 [shape = 'u8[65536]{0}', space=vmem, size = 0x10000, scoped, tag = 'input window, operand 7, single buffered']
    #allocation7 [shape = 'u8[65536]{0}', space=vmem, size = 0x10000, scoped, tag = 'input window, operand 9, single buffered']
    #allocation8 [shape = 's32[1]{0}', space=sflag, size = 0x4, scoped, tag = 'scoped memory for tpu_custom_call.1']
    #allocation9 [shape = 'u8[65536]{0}', space=vmem, size = 0x10000, scoped, tag = 'input window, operand 10, single buffered']
    %17 = vsyncpa [#allocation3], 0
    %18 = vsyncpa [#allocation5], 0
    %19 = vsyncpa [#allocation8], 0
    // Predicated region
    $region2: #{tpu_custom_call.1} parent=1 // pred_check
      _
    $region3: #{tpu_custom_call.1} parent=1 // pred_check_branch
      %21 = sbr.rel (0) target = $region5
    $region4: #{tpu_custom_call.1} parent=1 // pred_region
      _
    $region5: #{tpu_custom_call.1} parent=1 // pred_fallthru
      _
    // Predicated region
    $region6: #{tpu_custom_call.1} parent=1 // pred_check
      _
    $region7: #{tpu_custom_call.1} parent=1 // pred_check_branch
      %23 = sbr.rel (0) target = $region9
    $region8: #{tpu_custom_call.1} parent=1 // pred_region
      _
    $region9: #{tpu_custom_call.1} parent=1 // pred_fallthru
      _
    // Predicated region
    $region10: #{tpu_custom_call.1} parent=1 // pred_check
      _
    $region11: #{tpu_custom_call.1} parent=1 // pred_check_branch
      %25 = sbr.rel (0) target = $region13
    $region12: #{tpu_custom_call.1} parent=1 // pred_region
      _
    $region13: #{tpu_custom_call.1} parent=1 // pred_fallthru
      _
    // Predicated region
    $region14: #{tpu_custom_call.1} parent=1 // pred_check
      _
    $region15: #{tpu_custom_call.1} parent=1 // pred_check_branch
      %27 = sbr.rel (0) target = $region17
    $region16: #{tpu_custom_call.1} parent=1 // pred_region
      %s29 = ssub.s32 1152, 1152
      %30 = vsyncadd [#allocation3], %s29
      %s31 = sshll.u32 [#allocation2], 4
      %s32 = int_to_ptr.vmem [resolvable:$true] %s31
      %37 = dma.hbm_to_vmem [thread:$0]  %s3, 1152, %s32, [#allocation3], 128, 128, 8
    $region17: #{tpu_custom_call.1} parent=1 // pred_fallthru
      _
    // Predicated region
    $region18: #{tpu_custom_call.1} parent=1 // pred_check
      _
    $region19: #{tpu_custom_call.1} parent=1 // pred_check_branch
      %39 = sbr.rel (0) target = $region21
    $region20: #{tpu_custom_call.1} parent=1 // pred_region
      %s41 = ssub.s32 1152, 1152
      %42 = vsyncadd [#allocation5], %s41
      %s43 = sshll.u32 [#allocation4], 4
      %s44 = int_to_ptr.vmem [resolvable:$true] %s43
      %49 = dma.hbm_to_vmem [thread:$0]  %s4, 1152, %s44, [#allocation5], 128, 128, 8
    $region21: #{tpu_custom_call.1} parent=1 // pred_fallthru
      _
    // Predicated region
    $region22: #{tpu_custom_call.1} parent=1 // pred_check
      _
    $region23: #{tpu_custom_call.1} parent=1 // pred_check_branch
      %51 = sbr.rel (0) target = $region25
    $region24: #{tpu_custom_call.1} parent=1 // pred_region
      _
    $region25: #{tpu_custom_call.1} parent=1 // pred_fallthru
      _
    // Predicated region
    $region26: #{tpu_custom_call.1} parent=1 // pred_check
      _
    $region27: #{tpu_custom_call.1} parent=1 // pred_check_branch
      %53 = sbr.rel (0) target = $region29
    $region28: #{tpu_custom_call.1} parent=1 // pred_region
      _
    $region29: #{tpu_custom_call.1} parent=1 // pred_fallthru
      _
    // Predicated region
    $region30: #{tpu_custom_call.1} parent=1 // pred_check
      _
    $region31: #{tpu_custom_call.1} parent=1 // pred_check_branch
      %55 = sbr.rel (0) target = $region33
    $region32: #{tpu_custom_call.1} parent=1 // pred_region
      %s57 = ssub.s32 2048, 2048
      %58 = vsyncadd [#allocation5], %s57
      %s59 = sshll.u32 [#allocation6], 4
      %s60 = int_to_ptr.vmem [resolvable:$true] %s59
      %65 = dma.hbm_to_vmem [thread:$0]  %s7, 2048, %s60, [#allocation5], 128, 128, 8
    $region33: #{tpu_custom_call.1} parent=1 // pred_fallthru
      _
    // Predicated region
    $region34: #{tpu_custom_call.1} parent=1 // pred_check
      _
    $region35: #{tpu_custom_call.1} parent=1 // pred_check_branch
      %67 = sbr.rel (0) target = $region37
    $region36: #{tpu_custom_call.1} parent=1 // pred_region
      _
    $region37: #{tpu_custom_call.1} parent=1 // pred_fallthru
      _
    // Predicated region
    $region38: #{tpu_custom_call.1} parent=1 // pred_check
      _
    $region39: #{tpu_custom_call.1} parent=1 // pred_check_branch
      %69 = sbr.rel (0) target = $region41
    $region40: #{tpu_custom_call.1} parent=1 // pred_region
      %s71 = ssub.s32 2048, 2048
      %72 = vsyncadd [#allocation8], %s71
      %s73 = sshll.u32 [#allocation7], 4
      %s74 = int_to_ptr.vmem [resolvable:$true] %s73
      %79 = dma.hbm_to_vmem [thread:$0]  %s9, 2048, %s74, [#allocation8], 128, 128, 8
    $region41: #{tpu_custom_call.1} parent=1 // pred_fallthru
      _
    // Predicated region
    $region42: #{tpu_custom_call.1} parent=1 // pred_check
      _
    $region43: #{tpu_custom_call.1} parent=1 // pred_check_branch
      %81 = sbr.rel (0) target = $region45
    $region44: #{tpu_custom_call.1} parent=1 // pred_region
      %s83 = ssub.s32 2048, 2048
      %84 = vsyncadd [#allocation8], %s83
      %s85 = sshll.u32 [#allocation9], 4
      %s86 = int_to_ptr.vmem [resolvable:$true] %s85
      %91 = dma.hbm_to_vmem [thread:$0]  %s10, 2048, %s86, [#allocation8], 128, 128, 8
    $region45: #{tpu_custom_call.1} parent=1 // pred_fallthru
      _
    // Predicated region
    $region46: #{tpu_custom_call.1} parent=1 // pred_check
      _
    $region47: #{tpu_custom_call.1} parent=1 // pred_check_branch
      %93 = sbr.rel (0) target = $region49
    $region48: #{tpu_custom_call.1} parent=1 // pred_region
      _
    $region49: #{tpu_custom_call.1} parent=1 // pred_fallthru
      _
    // Predicated region
    $region50: #{tpu_custom_call.1} parent=1 // pred_check
      _
    $region51: #{tpu_custom_call.1} parent=1 // pred_check_branch
      %95 = sbr.rel (0) target = $region53
    $region52: #{tpu_custom_call.1} parent=1 // pred_region
      %96 = dma.done [#allocation3], 1152
    $region53: #{tpu_custom_call.1} parent=1 // pred_fallthru
      _
    // Predicated region
    $region54: #{tpu_custom_call.1} parent=1 // pred_check
      _
    $region55: #{tpu_custom_call.1} parent=1 // pred_check_branch
      %98 = sbr.rel (0) target = $region57
    $region56: #{tpu_custom_call.1} parent=1 // pred_region
      %99 = dma.done [#allocation5], 1152
    $region57: #{tpu_custom_call.1} parent=1 // pred_fallthru
      _
    // Predicated region
    $region58: #{tpu_custom_call.1} parent=1 // pred_check
      _
    $region59: #{tpu_custom_call.1} parent=1 // pred_check_branch
      %101 = sbr.rel (0) target = $region61
    $region60: #{tpu_custom_call.1} parent=1 // pred_region
      %102 = dma.done [#allocation5], 2048
    $region61: #{tpu_custom_call.1} parent=1 // pred_fallthru
      _
    // Predicated region
    $region62: #{tpu_custom_call.1} parent=1 // pred_check
      _
    $region63: #{tpu_custom_call.1} parent=1 // pred_check_branch
      %104 = sbr.rel (0) target = $region65
    $region64: #{tpu_custom_call.1} parent=1 // pred_region
      %105 = dma.done [#allocation8], 2048
    $region65: #{tpu_custom_call.1} parent=1 // pred_fallthru
      _
    // Predicated region
    $region66: #{tpu_custom_call.1} parent=1 // pred_check
      _
    $region67: #{tpu_custom_call.1} parent=1 // pred_check_branch
      %107 = sbr.rel (0) target = $region69
    $region68: #{tpu_custom_call.1} parent=1 // pred_region
      %108 = dma.done [#allocation8], 2048
    $region69: #{tpu_custom_call.1} parent=1 // pred_fallthru
      _
    %v109 = vld [vmem:[%s0] sm:$0xff]
    %v110 = vld [vmem:[%s0 + $0x8] sm:$0xff]
    %v111 = vld [vmem:[%s0 + $0x10] sm:$0xff]
    %v112 = vld [vmem:[%s0 + $0x18] sm:$0xff]
    %v113 = vld [vmem:[%s0 + $0x20] sm:$0xff]
    %v114 = vld [vmem:[%s0 + $0x28] sm:$0xff]
    %v115 = vld [vmem:[%s0 + $0x30] sm:$0xff]
    %v116 = vld [vmem:[%s0 + $0x38] sm:$0xff]
    %v117 = vld [vmem:[%s0 + $0x40] sm:$0xff]
    %v118 = vld [vmem:[%s0 + $0x48] sm:$0xff]
    %v119 = vld [vmem:[%s0 + $0x50] sm:$0xff]
    %v120 = vld [vmem:[%s0 + $0x58] sm:$0xff]
    %v121 = vld [vmem:[%s0 + $0x60] sm:$0xff]
    %v122 = vld [vmem:[%s0 + $0x68] sm:$0xff]
    %v123 = vld [vmem:[%s0 + $0x70] sm:$0xff]
    %v124 = vld [vmem:[%s0 + $0x78] sm:$0xff]
    %v125 = vmul.f32 %v109, 3.1415927
    %v126 = vmul.f32 %v110, 3.1415927
    %v127 = vmul.f32 %v111, 3.1415927
    %v128 = vmul.f32 %v112, 3.1415927
    %v129 = vmul.f32 %v113, 3.1415927
    %v130 = vmul.f32 %v114, 3.1415927
    %v131 = vmul.f32 %v115, 3.1415927
    %v132 = vmul.f32 %v116, 3.1415927
    %v133 = vmul.f32 %v117, 3.1415927
    %v134 = vmul.f32 %v118, 3.1415927
    %v135 = vmul.f32 %v119, 3.1415927
    %v136 = vmul.f32 %v120, 3.1415927
    %v137 = vmul.f32 %v121, 3.1415927
    %v138 = vmul.f32 %v122, 3.1415927
    %v139 = vmul.f32 %v123, 3.1415927
    %v140 = vmul.f32 %v124, 3.1415927
    %v141 = vpack.c.bf16 %v126, %v125
    %v142 = vpack.c.bf16 %v128, %v127
    %v143 = vpack.c.bf16 %v130, %v129
    %v144 = vpack.c.bf16 %v132, %v131
    %v145 = vpack.c.bf16 %v134, %v133
    %v146 = vpack.c.bf16 %v136, %v135
    %v147 = vpack.c.bf16 %v138, %v137
    %v148 = vpack.c.bf16 %v140, %v139
    %v149 = vunpack.c.l.bf16 %v141
    %v150 = vunpack.c.h.bf16 %v141
    %v151 = vunpack.c.l.bf16 %v142
    %v152 = vunpack.c.h.bf16 %v142
    %v153 = vunpack.c.l.bf16 %v143
    %v154 = vunpack.c.h.bf16 %v143
    %v155 = vunpack.c.l.bf16 %v144
    %v156 = vunpack.c.h.bf16 %v144
    %v157 = vunpack.c.l.bf16 %v145
    %v158 = vunpack.c.h.bf16 %v145
    %v159 = vunpack.c.l.bf16 %v146
    %v160 = vunpack.c.h.bf16 %v146
    %v161 = vunpack.c.l.bf16 %v147
    %v162 = vunpack.c.h.bf16 %v147
    %v163 = vunpack.c.l.bf16 %v148
    %v164 = vunpack.c.h.bf16 %v148
    %v165 = vsub.f32 %v125, %v149
    %v166 = vsub.f32 %v126, %v150
    %v167 = vsub.f32 %v127, %v151
    %v168 = vsub.f32 %v128, %v152
    %v169 = vsub.f32 %v129, %v153
    %v170 = vsub.f32 %v130, %v154
    %v171 = vsub.f32 %v131, %v155
    %v172 = vsub.f32 %v132, %v156
    %v173 = vsub.f32 %v133, %v157
    %v174 = vsub.f32 %v134, %v158
    %v175 = vsub.f32 %v135, %v159
    %v176 = vsub.f32 %v136, %v160
    %v177 = vsub.f32 %v137, %v161
    %v178 = vsub.f32 %v138, %v162
    %v179 = vsub.f32 %v139, %v163
    %v180 = vsub.f32 %v140, %v164
    %v181 = vpack.c.bf16 %v166, %v165
    %v182 = vpack.c.bf16 %v168, %v167
    %v183 = vpack.c.bf16 %v170, %v169
    %v184 = vpack.c.bf16 %v172, %v171
    %v185 = vpack.c.bf16 %v174, %v173
    %v186 = vpack.c.bf16 %v176, %v175
    %v187 = vpack.c.bf16 %v178, %v177
    %v188 = vpack.c.bf16 %v180, %v179
    %v189 = vunpack.c.l.bf16 %v181
    %v190 = vunpack.c.h.bf16 %v181
    %v191 = vunpack.c.l.bf16 %v182
    %v192 = vunpack.c.h.bf16 %v182
    %v193 = vunpack.c.l.bf16 %v183
    %v194 = vunpack.c.h.bf16 %v183
    %v195 = vunpack.c.l.bf16 %v184
    %v196 = vunpack.c.h.bf16 %v184
    %v197 = vunpack.c.l.bf16 %v185
    %v198 = vunpack.c.h.bf16 %v185
    %v199 = vunpack.c.l.bf16 %v186
    %v200 = vunpack.c.h.bf16 %v186
    %v201 = vunpack.c.l.bf16 %v187
    %v202 = vunpack.c.h.bf16 %v187
    %v203 = vunpack.c.l.bf16 %v188
    %v204 = vunpack.c.h.bf16 %v188
    %v205 = vsub.f32 %v165, %v189
    %v206 = vsub.f32 %v166, %v190
    %v207 = vsub.f32 %v167, %v191
    %v208 = vsub.f32 %v168, %v192
    %v209 = vsub.f32 %v169, %v193
    %v210 = vsub.f32 %v170, %v194
    %v211 = vsub.f32 %v171, %v195
    %v212 = vsub.f32 %v172, %v196
    %v213 = vsub.f32 %v173, %v197
    %v214 = vsub.f32 %v174, %v198
    %v215 = vsub.f32 %v175, %v199
    %v216 = vsub.f32 %v176, %v200
    %v217 = vsub.f32 %v177, %v201
    %v218 = vsub.f32 %v178, %v202
    %v219 = vsub.f32 %v179, %v203
    %v220 = vsub.f32 %v180, %v204
    %237 = vrot.lane.b32.xlu0 %v189, 4
    %v238 = vpop.permute.xlu0 %237
    %239 = vrot.lane.b32.xlu0 %v190, 4
    %v240 = vpop.permute.xlu0 %239
    %241 = vrot.lane.b32.xlu0 %v191, 4
    %v242 = vpop.permute.xlu0 %241
    %243 = vrot.lane.b32.xlu0 %v192, 4
    %v244 = vpop.permute.xlu0 %243
    %245 = vrot.lane.b32.xlu0 %v193, 4
    %v246 = vpop.permute.xlu0 %245
    %247 = vrot.lane.b32.xlu0 %v194, 4
    %v248 = vpop.permute.xlu0 %247
    %249 = vrot.lane.b32.xlu0 %v195, 4
    %v250 = vpop.permute.xlu0 %249
    %251 = vrot.lane.b32.xlu0 %v196, 4
    %v252 = vpop.permute.xlu0 %251
    %253 = vrot.lane.b32.xlu0 %v197, 4
    %v254 = vpop.permute.xlu0 %253
    %255 = vrot.lane.b32.xlu0 %v198, 4
    %v256 = vpop.permute.xlu0 %255
    %257 = vrot.lane.b32.xlu0 %v199, 4
    %v258 = vpop.permute.xlu0 %257
    %259 = vrot.lane.b32.xlu0 %v200, 4
    %v260 = vpop.permute.xlu0 %259
    %261 = vrot.lane.b32.xlu0 %v201, 4
    %v262 = vpop.permute.xlu0 %261
    %263 = vrot.lane.b32.xlu0 %v202, 4
    %v264 = vpop.permute.xlu0 %263
    %265 = vrot.lane.b32.xlu0 %v203, 4
    %v266 = vpop.permute.xlu0 %265
    %267 = vrot.lane.b32.xlu0 %v204, 4
    %v268 = vpop.permute.xlu0 %267
    %301 = vrot.lane.b32.xlu0 %v205, 8
    %v302 = vpop.permute.xlu0 %301
    %303 = vrot.lane.b32.xlu0 %v206, 8
    %v304 = vpop.permute.xlu0 %303
    %305 = vrot.lane.b32.xlu0 %v207, 8
    %v306 = vpop.permute.xlu0 %305
    %307 = vrot.lane.b32.xlu0 %v208, 8
    %v308 = vpop.permute.xlu0 %307
    %309 = vrot.lane.b32.xlu0 %v209, 8
    %v310 = vpop.permute.xlu0 %309
    %311 = vrot.lane.b32.xlu0 %v210, 8
    %v312 = vpop.permute.xlu0 %311
    %313 = vrot.lane.b32.xlu0 %v211, 8
    %v314 = vpop.permute.xlu0 %313
    %315 = vrot.lane.b32.xlu0 %v212, 8
    %v316 = vpop.permute.xlu0 %315
    %317 = vrot.lane.b32.xlu0 %v213, 8
    %v318 = vpop.permute.xlu0 %317
    %319 = vrot.lane.b32.xlu0 %v214, 8
    %v320 = vpop.permute.xlu0 %319
    %321 = vrot.lane.b32.xlu0 %v215, 8
    %v322 = vpop.permute.xlu0 %321
    %323 = vrot.lane.b32.xlu0 %v216, 8
    %v324 = vpop.permute.xlu0 %323
    %325 = vrot.lane.b32.xlu0 %v217, 8
    %v326 = vpop.permute.xlu0 %325
    %327 = vrot.lane.b32.xlu0 %v218, 8
    %v328 = vpop.permute.xlu0 %327
    %329 = vrot.lane.b32.xlu0 %v219, 8
    %v330 = vpop.permute.xlu0 %329
    %331 = vrot.lane.b32.xlu0 %v220, 8
    %v332 = vpop.permute.xlu0 %331
    %vm349 = vcmask 31744
    %v350 = vsel %vm349, %v149, %v238
    %v351 = vsel %vm349, %v150, %v240
    %v352 = vsel %vm349, %v151, %v242
    %v353 = vsel %vm349, %v152, %v244
    %v354 = vsel %vm349, %v153, %v246
    %v355 = vsel %vm349, %v154, %v248
    %v356 = vsel %vm349, %v155, %v250
    %v357 = vsel %vm349, %v156, %v252
    %v358 = vsel %vm349, %v157, %v254
    %v359 = vsel %vm349, %v158, %v256
    %v360 = vsel %vm349, %v159, %v258
    %v361 = vsel %vm349, %v160, %v260
    %v362 = vsel %vm349, %v161, %v262
    %v363 = vsel %vm349, %v162, %v264
    %v364 = vsel %vm349, %v163, %v266
    %v365 = vsel %vm349, %v164, %v268
    %vm366 = vcmask 64512
    %v367 = vsel %vm366, %v350, %v302
    %v368 = vsel %vm366, %v351, %v304
    %v369 = vsel %vm366, %v352, %v306
    %v370 = vsel %vm366, %v353, %v308
    %v371 = vsel %vm366, %v354, %v310
    %v372 = vsel %vm366, %v355, %v312
    %v373 = vsel %vm366, %v356, %v314
    %v374 = vsel %vm366, %v357, %v316
    %v375 = vsel %vm366, %v358, %v318
    %v376 = vsel %vm366, %v359, %v320
    %v377 = vsel %vm366, %v360, %v322
    %v378 = vsel %vm366, %v361, %v324
    %v379 = vsel %vm366, %v362, %v326
    %v380 = vsel %vm366, %v363, %v328
    %v381 = vsel %vm366, %v364, %v330
    %v382 = vsel %vm366, %v365, %v332
    %v383 = vld [vmem:[%s1] sm:$0xff]
    %v384 = vld [vmem:[%s1 + $0x8] sm:$0xf]
    %v385 = vld [vmem:[%s2] sm:$0x1]
    %v387 = vlaneseq
    %v388 = vshrl.u32 %v387, 7
    %v389 = vsub.s32 0, %v388
    %v390 = vrot.slane %v385, %v389
    %vm392 = vcmask 97280
    %v394 = vsel %vm392, %v367, 0
    %v397 = vsel %vm392, %v368, 0
    %v400 = vsel %vm392, %v369, 0
    %v403 = vsel %vm392, %v370, 0
    %v406 = vsel %vm392, %v371, 0
    %v409 = vsel %vm392, %v372, 0
    %v412 = vsel %vm392, %v373, 0
    %v415 = vsel %vm392, %v374, 0
    %v418 = vsel %vm392, %v375, 0
    %v421 = vsel %vm392, %v376, 0
    %v424 = vsel %vm392, %v377, 0
    %v427 = vsel %vm392, %v378, 0
    %v430 = vsel %vm392, %v379, 0
    %v433 = vsel %vm392, %v380, 0
    %v436 = vsel %vm392, %v381, 0
    %v439 = vsel %vm392, %v382, 0
    %vm441 = vcmask 1043456
    %v443 = vsel %vm441, %v384, 0
    %445 = vmatprep.subr.mxu0 0.0
    %446 = vmatpush1.msra.mxu0 %v383
    %447 = vmatprep.subr.mxu0 0.0
    %448 = vmatpush1.msra.mxu0 %v443
    %449 = vmatprep.subr.mxu0 0.0
    %450 = vmatpush1.msra.mxu0 0.0
    %451 = vmatprep.subr.mxu0 0.0
    %452 = vmatpush1.msra.mxu0 0.0
    %453 = vmatprep.subr.mxu0 0.0
    %454 = vmatpush1.msra.mxu0 0.0
    %455 = vmatprep.subr.mxu0 0.0
    %456 = vmatpush1.msra.mxu0 0.0
    %457 = vmatprep.subr.mxu0 0.0
    %458 = vmatpush1.msra.mxu0 0.0
    %459 = vmatprep.subr.mxu0 0.0
    %460 = vmatpush1.msra.mxu0 0.0
    %461 = vmatprep.subr.mxu0 0.0
    %462 = vmatpush1.msra.mxu0 0.0
    %463 = vmatprep.subr.mxu0 0.0
    %464 = vmatpush1.msra.mxu0 0.0
    %465 = vmatprep.subr.mxu0 0.0
    %466 = vmatpush1.msra.mxu0 0.0
    %467 = vmatprep.subr.mxu0 0.0
    %468 = vmatpush1.msra.mxu0 0.0
    %469 = vmatprep.subr.mxu0 0.0
    %470 = vmatpush1.msra.mxu0 0.0
    %471 = vmatprep.subr.mxu0 0.0
    %472 = vmatpush1.msra.mxu0 0.0
    %473 = vmatprep.subr.mxu0 0.0
    %474 = vmatpush1.msra.mxu0 0.0
    %475 = vmatprep.subr.mxu0 0.0
    %476 = vmatpush1.msra.mxu0 0.0
    %477 = vmatprep.subr.mxu0 0.0
    %478 = vmatpush1.msra.mxu0 0.0
    %479 = vmatprep.subr.mxu0 0.0
    %480 = vmatpush1.msra.mxu0 0.0
    %481 = vmatprep.subr.mxu0 0.0
    %482 = vmatpush1.msra.mxu0 0.0
    %483 = vmatprep.subr.mxu0 0.0
    %484 = vmatpush1.msra.mxu0 0.0
    %485 = vmatprep.subr.mxu0 0.0
    %486 = vmatpush1.msra.mxu0 0.0
    %487 = vmatprep.subr.mxu0 0.0
    %488 = vmatpush1.msra.mxu0 0.0
    %489 = vmatprep.subr.mxu0 0.0
    %490 = vmatpush1.msra.mxu0 0.0
    %491 = vmatprep.subr.mxu0 0.0
    %492 = vmatpush1.msra.mxu0 0.0
    %493 = vmatprep.subr.mxu0 0.0
    %494 = vmatpush1.msra.mxu0 0.0
    %495 = vmatprep.subr.mxu0 0.0
    %496 = vmatpush1.msra.mxu0 0.0
    %497 = vmatprep.subr.mxu0 0.0
    %498 = vmatpush1.msra.mxu0 0.0
    %499 = vmatprep.subr.mxu0 0.0
    %500 = vmatpush1.msra.mxu0 0.0
    %501 = vmatprep.subr.mxu0 0.0
    %502 = vmatpush1.msra.mxu0 0.0
    %503 = vmatprep.subr.mxu0 0.0
    %504 = vmatpush1.msra.mxu0 0.0
    %505 = vmatprep.subr.mxu0 0.0
    %506 = vmatpush1.msra.mxu0 0.0
    %507 = vmatprep.subr.mxu0 0.0
    %508 = vmatpush1.msra.mxu0 0.0
    %509 = vmatprep.mubr.f32.mxu0 0.0
    %510 = vmatmul.mubr.f32.gmra.mrb[0].mxu0 %v394
    %v511 = vpop.f32.mrb[0].mxu0
    %v512 = vadd.f32 %v390, %v511
    %v513 = vpop.f32.mrb[0].mxu0
    %514 = vmatprep.mubr.f32.mxu0 0.0
    %515 = vmatmul.mubr.f32.gmra.mrb[0].mxu0 %v397
    %v516 = vpop.f32.mrb[0].mxu0
    %v517 = vadd.f32 %v390, %v516
    %v518 = vpop.f32.mrb[0].mxu0
    %519 = vmatprep.mubr.f32.mxu0 0.0
    %520 = vmatmul.mubr.f32.gmra.mrb[0].mxu0 %v400
    %v521 = vpop.f32.mrb[0].mxu0
    %v522 = vadd.f32 %v390, %v521
    %v523 = vpop.f32.mrb[0].mxu0
    %524 = vmatprep.mubr.f32.mxu0 0.0
    %525 = vmatmul.mubr.f32.gmra.mrb[0].mxu0 %v403
    %v526 = vpop.f32.mrb[0].mxu0
    %v527 = vadd.f32 %v390, %v526
    %v528 = vpop.f32.mrb[0].mxu0
    %529 = vmatprep.mubr.f32.mxu0 0.0
    %530 = vmatmul.mubr.f32.gmra.mrb[0].mxu0 %v406
    %v531 = vpop.f32.mrb[0].mxu0
    %v532 = vadd.f32 %v390, %v531
    %v533 = vpop.f32.mrb[0].mxu0
    %534 = vmatprep.mubr.f32.mxu0 0.0
    %535 = vmatmul.mubr.f32.gmra.mrb[0].mxu0 %v409
    %v536 = vpop.f32.mrb[0].mxu0
    %v537 = vadd.f32 %v390, %v536
    %v538 = vpop.f32.mrb[0].mxu0
    %539 = vmatprep.mubr.f32.mxu0 0.0
    %540 = vmatmul.mubr.f32.gmra.mrb[0].mxu0 %v412
    %v541 = vpop.f32.mrb[0].mxu0
    %v542 = vadd.f32 %v390, %v541
    %v543 = vpop.f32.mrb[0].mxu0
    %544 = vmatprep.mubr.f32.mxu0 0.0
    %545 = vmatmul.mubr.f32.gmra.mrb[0].mxu0 %v415
    %v546 = vpop.f32.mrb[0].mxu0
    %v547 = vadd.f32 %v390, %v546
    %v548 = vpop.f32.mrb[0].mxu0
    %549 = vmatprep.mubr.f32.mxu0 0.0
    %550 = vmatmul.mubr.f32.gmra.mrb[0].mxu0 %v418
    %v551 = vpop.f32.mrb[0].mxu0
    %v552 = vadd.f32 %v390, %v551
    %v553 = vpop.f32.mrb[0].mxu0
    %554 = vmatprep.mubr.f32.mxu0 0.0
    %555 = vmatmul.mubr.f32.gmra.mrb[0].mxu0 %v421
    %v556 = vpop.f32.mrb[0].mxu0
    %v557 = vadd.f32 %v390, %v556
    %v558 = vpop.f32.mrb[0].mxu0
    %559 = vmatprep.mubr.f32.mxu0 0.0
    %560 = vmatmul.mubr.f32.gmra.mrb[0].mxu0 %v424
    %v561 = vpop.f32.mrb[0].mxu0
    %v562 = vadd.f32 %v390, %v561
    %v563 = vpop.f32.mrb[0].mxu0
    %564 = vmatprep.mubr.f32.mxu0 0.0
    %565 = vmatmul.mubr.f32.gmra.mrb[0].mxu0 %v427
    %v566 = vpop.f32.mrb[0].mxu0
    %v567 = vadd.f32 %v390, %v566
    %v568 = vpop.f32.mrb[0].mxu0
    %569 = vmatprep.mubr.f32.mxu0 0.0
    %570 = vmatmul.mubr.f32.gmra.mrb[0].mxu0 %v430
    %v571 = vpop.f32.mrb[0].mxu0
    %v572 = vadd.f32 %v390, %v571
    %v573 = vpop.f32.mrb[0].mxu0
    %574 = vmatprep.mubr.f32.mxu0 0.0
    %575 = vmatmul.mubr.f32.gmra.mrb[0].mxu0 %v433
    %v576 = vpop.f32.mrb[0].mxu0
    %v577 = vadd.f32 %v390, %v576
    %v578 = vpop.f32.mrb[0].mxu0
    %579 = vmatprep.mubr.f32.mxu0 0.0
    %580 = vmatmul.mubr.f32.gmra.mrb[0].mxu0 %v436
    %v581 = vpop.f32.mrb[0].mxu0
    %v582 = vadd.f32 %v390, %v581
    %v583 = vpop.f32.mrb[0].mxu0
    %584 = vmatprep.mubr.f32.mxu0 0.0
    %585 = vmatmul.mubr.f32.gmra.mrb[0].mxu0 %v439
    %v586 = vpop.f32.mrb[0].mxu0
    %v587 = vadd.f32 %v390, %v586
    %v588 = vpop.f32.mrb[0].mxu0
    %589 = vdwg.mxu0
    %v590 = vand.u32 2147483647, %v512
    %vm591 = vcmp.le.f32.partialorder %v590, 0.7853982
    %vm592 = vcmp.lt.s32.totalorder %v512, 0
    %v593 = vand.u32 %v512, 2139095040
    %v594 = vshrl.u32 %v593, 23
    %v595 = vsub.s32 %v594, 127
    %v596 = vand.u32 2147483647, %v512
    %v597 = vand.u32 %v596, 8388607
    %v598 = vor.u32 %v597, 8388608
    %v599 = vsub.s32 0, %v598
    %v600 = vadd.s32 %v595, 1
    %vm601 = vcmp.gt.s32.totalorder %v600, 0
    %v602 = vsel %vm601, %v600, 0
    %v603 = vshrl.u32 %v602, 5
    %v604 = vand.u32 %v602, 31
    %v605 = vsub.s32 32, %v604
    %v606 = vshrl.u32 683565275, %v605
    %v607 = vshll.u32 683565275, %v604
    %v608 = vshrl.u32 2475754826, %v605
    %v609 = vor.u32 %v607, %v608
    %v610 = vshll.u32 2475754826, %v604
    %v611 = vshrl.u32 2131351028, %v605
    %v612 = vor.u32 %v610, %v611
    %v613 = vshll.u32 2131351028, %v604
    %v614 = vshrl.u32 2102212464, %v605
    %v615 = vor.u32 %v613, %v614
    %v616 = vshll.u32 2102212464, %v604
    %v617 = vshrl.u32 920167782, %v605
    %v618 = vor.u32 %v616, %v617
    %v619 = vshll.u32 920167782, %v604
    %v620 = vshrl.u32 1326507024, %v605
    %v621 = vor.u32 %v619, %v620
    %vm622 = vcmp.lt.s32.totalorder %v603, 1
    %vm623 = vcmp.lt.s32.totalorder %v603, 2
    %vm624 = vcmp.lt.s32.totalorder %v603, 3
    %vm625 = vcmp.lt.s32.totalorder %v603, 4
    %v626 = vsel %vm622, %v606, %v609
    %v627 = vsel %vm625, %v615, 2102212464
    %v628 = vsel %vm624, %v612, %v627
    %v629 = vsel %vm623, %v626, %v628
    %v630 = vsel %vm622, %v609, %v612
    %v631 = vsel %vm625, %v618, 920167782
    %v632 = vsel %vm624, %v615, %v631
    %v633 = vsel %vm623, %v630, %v632
    %v634 = vsel %vm622, %v612, %v615
    %v635 = vsel %vm625, %v621, 1326507024
    %v636 = vsel %vm624, %v618, %v635
    %v637 = vsel %vm623, %v634, %v636
    %v638 = vshll.u32 %v598, 8
    %v639 = vmul.u32.u64.compose %v638, %v637
    %v640 = vextract.low.u32 %v639
    %v641 = vextract.high.u32 %v639
    %v642 = vmul.u32.u64.compose %v638, %v633
    %v643 = vextract.low.u32 %v642
    %v644 = vextract.high.u32 %v642
    %v645 = vmul.u32 %v638, %v629
    %v646 = vadd.s32 %v641, %v643
    %vm647 = vc.u32 %v641, %v643
    %v648 = vadd.s32 %v644, 1
    %v649 = vsel %vm647, %v648, %v644
    %v650 = vadd.s32 %v645, %v649
    %v651 = vadd.s32 %v650, 536870912
    %v652 = vshrl.u32 %v651, 30
    %v653 = vshll.u32 %v652, 30
    %v654 = vsub.s32 %v650, %v653
    %vm655 = vcmp.lt.s32.totalorder %v654, 0
    %v656 = vsub.s32 0, %v654
    %v657 = vsel %vm655, %v656, %v654
    %v658 = vclz %v657
    %v659 = vsub.s32 %v658, 2
    %vm660 = vcmp.gt.s32.totalorder 0, %v659
    %v661 = vsel %vm660, 0, %v659
    %v662 = vsub.s32 32, %v661
    %v663 = vshll.u32 %v654, %v661
    %v664 = vshrl.u32 %v646, %v662
    %v665 = vor.u32 %v663, %v664
    %v666 = vsub.s32 4294967266, %v661
    %v667 = vadd.s32 %v666, 127
    %v668 = vshll.u32 %v667, 23
    %v669 = vor.u32 4788187, %v668
    %v670 = vand.u32 2147483647, %v669
    %v672 = vcvt.s32.f32 %v665
    %v673 = vmul.f32 %v672, %v670
    %v674 = vxor.u32 %v673, 2147483648
    %v675 = vsel %vm592, %v674, %v673
    %v676 = vsub.s32 4, %v652
    %v677 = vsel %vm592, %v676, %v652
    %v678 = vsel %vm591, %v512, %v675
    %v679 = vsel %vm591, 0, %v677
    %v680 = vcosq.f32.pop %v678
    %v681 = vsinq.f32.pop %v678
    %vm682 = vweird.f32 %v512
    %v683 = vadd.s32 %v679, 3
    %v684 = vand.u32 %v683, 3
    %vm685 = vcmp.lt.s32.totalorder %v684, 2
    %vm686 = vcmp.eq.s32.totalorder %v684, 0
    %v687 = vxor.u32 %v681, 2147483648
    %v688 = vsel %vm686, %v680, %v687
    %vm689 = vcmp.eq.s32.totalorder %v684, 2
    %v690 = vxor.u32 %v680, 2147483648
    %v691 = vsel %vm689, %v690, %v681
    %v692 = vsel %vm685, %v688, %v691
    %v693 = vsel %vm682, nan, %v692
    %v694 = vand.u32 2147483647, %v517
    %vm695 = vcmp.le.f32.partialorder %v694, 0.7853982
    %vm696 = vcmp.lt.s32.totalorder %v517, 0
    %v697 = vand.u32 %v517, 2139095040
    %v698 = vshrl.u32 %v697, 23
    %v699 = vsub.s32 %v698, 127
    %v700 = vand.u32 2147483647, %v517
    %v701 = vand.u32 %v700, 8388607
    %v702 = vor.u32 %v701, 8388608
    %v703 = vsub.s32 0, %v702
    %v704 = vadd.s32 %v699, 1
    %vm705 = vcmp.gt.s32.totalorder %v704, 0
    %v706 = vsel %vm705, %v704, 0
    %v707 = vshrl.u32 %v706, 5
    %v708 = vand.u32 %v706, 31
    %v709 = vsub.s32 32, %v708
    %v710 = vshrl.u32 683565275, %v709
    %v711 = vshll.u32 683565275, %v708
    %v712 = vshrl.u32 2475754826, %v709
    %v713 = vor.u32 %v711, %v712
    %v714 = vshll.u32 2475754826, %v708
    %v715 = vshrl.u32 2131351028, %v709
    %v716 = vor.u32 %v714, %v715
    %v717 = vshll.u32 2131351028, %v708
    %v718 = vshrl.u32 2102212464, %v709
    %v719 = vor.u32 %v717, %v718
    %v720 = vshll.u32 2102212464, %v708
    %v721 = vshrl.u32 920167782, %v709
    %v722 = vor.u32 %v720, %v721
    %v723 = vshll.u32 920167782, %v708
    %v724 = vshrl.u32 1326507024, %v709
    %v725 = vor.u32 %v723, %v724
    %vm726 = vcmp.lt.s32.totalorder %v707, 1
    %vm727 = vcmp.lt.s32.totalorder %v707, 2
    %vm728 = vcmp.lt.s32.totalorder %v707, 3
    %vm729 = vcmp.lt.s32.totalorder %v707, 4
    %v730 = vsel %vm726, %v710, %v713
    %v731 = vsel %vm729, %v719, 2102212464
    %v732 = vsel %vm728, %v716, %v731
    %v733 = vsel %vm727, %v730, %v732
    %v734 = vsel %vm726, %v713, %v716
    %v735 = vsel %vm729, %v722, 920167782
    %v736 = vsel %vm728, %v719, %v735
    %v737 = vsel %vm727, %v734, %v736
    %v738 = vsel %vm726, %v716, %v719
    %v739 = vsel %vm729, %v725, 1326507024
    %v740 = vsel %vm728, %v722, %v739
    %v741 = vsel %vm727, %v738, %v740
    %v742 = vshll.u32 %v702, 8
    %v743 = vmul.u32.u64.compose %v742, %v741
    %v744 = vextract.low.u32 %v743
    %v745 = vextract.high.u32 %v743
    %v746 = vmul.u32.u64.compose %v742, %v737
    %v747 = vextract.low.u32 %v746
    %v748 = vextract.high.u32 %v746
    %v749 = vmul.u32 %v742, %v733
    %v750 = vadd.s32 %v745, %v747
    %vm751 = vc.u32 %v745, %v747
    %v752 = vadd.s32 %v748, 1
    %v753 = vsel %vm751, %v752, %v748
    %v754 = vadd.s32 %v749, %v753
    %v755 = vadd.s32 %v754, 536870912
    %v756 = vshrl.u32 %v755, 30
    %v757 = vshll.u32 %v756, 30
    %v758 = vsub.s32 %v754, %v757
    %vm759 = vcmp.lt.s32.totalorder %v758, 0
    %v760 = vsub.s32 0, %v758
    %v761 = vsel %vm759, %v760, %v758
    %v762 = vclz %v761
    %v763 = vsub.s32 %v762, 2
    %vm764 = vcmp.gt.s32.totalorder 0, %v763
    %v765 = vsel %vm764, 0, %v763
    %v766 = vsub.s32 32, %v765
    %v767 = vshll.u32 %v758, %v765
    %v768 = vshrl.u32 %v750, %v766
    %v769 = vor.u32 %v767, %v768
    %v770 = vsub.s32 4294967266, %v765
    %v771 = vadd.s32 %v770, 127
    %v772 = vshll.u32 %v771, 23
    %v773 = vor.u32 4788187, %v772
    %v774 = vand.u32 2147483647, %v773
    %v776 = vcvt.s32.f32 %v769
    %v777 = vmul.f32 %v776, %v774
    %v778 = vxor.u32 %v777, 2147483648
    %v779 = vsel %vm696, %v778, %v777
    %v780 = vsub.s32 4, %v756
    %v781 = vsel %vm696, %v780, %v756
    %v782 = vsel %vm695, %v517, %v779
    %v783 = vsel %vm695, 0, %v781
    %v784 = vcosq.f32.pop %v782
    %v785 = vsinq.f32.pop %v782
    %vm786 = vweird.f32 %v517
    %v787 = vadd.s32 %v783, 3
    %v788 = vand.u32 %v787, 3
    %vm789 = vcmp.lt.s32.totalorder %v788, 2
    %vm790 = vcmp.eq.s32.totalorder %v788, 0
    %v791 = vxor.u32 %v785, 2147483648
    %v792 = vsel %vm790, %v784, %v791
    %vm793 = vcmp.eq.s32.totalorder %v788, 2
    %v794 = vxor.u32 %v784, 2147483648
    %v795 = vsel %vm793, %v794, %v785
    %v796 = vsel %vm789, %v792, %v795
    %v797 = vsel %vm786, nan, %v796
    %v798 = vand.u32 2147483647, %v522
    %vm799 = vcmp.le.f32.partialorder %v798, 0.7853982
    %vm800 = vcmp.lt.s32.totalorder %v522, 0
    %v801 = vand.u32 %v522, 2139095040
    %v802 = vshrl.u32 %v801, 23
    %v803 = vsub.s32 %v802, 127
    %v804 = vand.u32 2147483647, %v522
    %v805 = vand.u32 %v804, 8388607
    %v806 = vor.u32 %v805, 8388608
    %v807 = vsub.s32 0, %v806
    %v808 = vadd.s32 %v803, 1
    %vm809 = vcmp.gt.s32.totalorder %v808, 0
    %v810 = vsel %vm809, %v808, 0
    %v811 = vshrl.u32 %v810, 5
    %v812 = vand.u32 %v810, 31
    %v813 = vsub.s32 32, %v812
    %v814 = vshrl.u32 683565275, %v813
    %v815 = vshll.u32 683565275, %v812
    %v816 = vshrl.u32 2475754826, %v813
    %v817 = vor.u32 %v815, %v816
    %v818 = vshll.u32 2475754826, %v812
    %v819 = vshrl.u32 2131351028, %v813
    %v820 = vor.u32 %v818, %v819
    %v821 = vshll.u32 2131351028, %v812
    %v822 = vshrl.u32 2102212464, %v813
    %v823 = vor.u32 %v821, %v822
    %v824 = vshll.u32 2102212464, %v812
    %v825 = vshrl.u32 920167782, %v813
    %v826 = vor.u32 %v824, %v825
    %v827 = vshll.u32 920167782, %v812
    %v828 = vshrl.u32 1326507024, %v813
    %v829 = vor.u32 %v827, %v828
    %vm830 = vcmp.lt.s32.totalorder %v811, 1
    %vm831 = vcmp.lt.s32.totalorder %v811, 2
    %vm832 = vcmp.lt.s32.totalorder %v811, 3
    %vm833 = vcmp.lt.s32.totalorder %v811, 4
    %v834 = vsel %vm830, %v814, %v817
    %v835 = vsel %vm833, %v823, 2102212464
    %v836 = vsel %vm832, %v820, %v835
    %v837 = vsel %vm831, %v834, %v836
    %v838 = vsel %vm830, %v817, %v820
    %v839 = vsel %vm833, %v826, 920167782
    %v840 = vsel %vm832, %v823, %v839
    %v841 = vsel %vm831, %v838, %v840
    %v842 = vsel %vm830, %v820, %v823
    %v843 = vsel %vm833, %v829, 1326507024
    %v844 = vsel %vm832, %v826, %v843
    %v845 = vsel %vm831, %v842, %v844
    %v846 = vshll.u32 %v806, 8
    %v847 = vmul.u32.u64.compose %v846, %v845
    %v848 = vextract.low.u32 %v847
    %v849 = vextract.high.u32 %v847
    %v850 = vmul.u32.u64.compose %v846, %v841
    %v851 = vextract.low.u32 %v850
    %v852 = vextract.high.u32 %v850
    %v853 = vmul.u32 %v846, %v837
    %v854 = vadd.s32 %v849, %v851
    %vm855 = vc.u32 %v849, %v851
    %v856 = vadd.s32 %v852, 1
    %v857 = vsel %vm855, %v856, %v852
    %v858 = vadd.s32 %v853, %v857
    %v859 = vadd.s32 %v858, 536870912
    %v860 = vshrl.u32 %v859, 30
    %v861 = vshll.u32 %v860, 30
    %v862 = vsub.s32 %v858, %v861
    %vm863 = vcmp.lt.s32.totalorder %v862, 0
    %v864 = vsub.s32 0, %v862
    %v865 = vsel %vm863, %v864, %v862
    %v866 = vclz %v865
    %v867 = vsub.s32 %v866, 2
    %vm868 = vcmp.gt.s32.totalorder 0, %v867
    %v869 = vsel %vm868, 0, %v867
    %v870 = vsub.s32 32, %v869
    %v871 = vshll.u32 %v862, %v869
    %v872 = vshrl.u32 %v854, %v870
    %v873 = vor.u32 %v871, %v872
    %v874 = vsub.s32 4294967266, %v869
    %v875 = vadd.s32 %v874, 127
    %v876 = vshll.u32 %v875, 23
    %v877 = vor.u32 4788187, %v876
    %v878 = vand.u32 2147483647, %v877
    %v880 = vcvt.s32.f32 %v873
    %v881 = vmul.f32 %v880, %v878
    %v882 = vxor.u32 %v881, 2147483648
    %v883 = vsel %vm800, %v882, %v881
    %v884 = vsub.s32 4, %v860
    %v885 = vsel %vm800, %v884, %v860
    %v886 = vsel %vm799, %v522, %v883
    %v887 = vsel %vm799, 0, %v885
    %v888 = vcosq.f32.pop %v886
    %v889 = vsinq.f32.pop %v886
    %vm890 = vweird.f32 %v522
    %v891 = vadd.s32 %v887, 3
    %v892 = vand.u32 %v891, 3
    %vm893 = vcmp.lt.s32.totalorder %v892, 2
    %vm894 = vcmp.eq.s32.totalorder %v892, 0
    %v895 = vxor.u32 %v889, 2147483648
    %v896 = vsel %vm894, %v888, %v895
    %vm897 = vcmp.eq.s32.totalorder %v892, 2
    %v898 = vxor.u32 %v888, 2147483648
    %v899 = vsel %vm897, %v898, %v889
    %v900 = vsel %vm893, %v896, %v899
    %v901 = vsel %vm890, nan, %v900
    %v902 = vand.u32 2147483647, %v527
    %vm903 = vcmp.le.f32.partialorder %v902, 0.7853982
    %vm904 = vcmp.lt.s32.totalorder %v527, 0
    %v905 = vand.u32 %v527, 2139095040
    %v906 = vshrl.u32 %v905, 23
    %v907 = vsub.s32 %v906, 127
    %v908 = vand.u32 2147483647, %v527
    %v909 = vand.u32 %v908, 8388607
    %v910 = vor.u32 %v909, 8388608
    %v911 = vsub.s32 0, %v910
    %v912 = vadd.s32 %v907, 1
    %vm913 = vcmp.gt.s32.totalorder %v912, 0
    %v914 = vsel %vm913, %v912, 0
    %v915 = vshrl.u32 %v914, 5
    %v916 = vand.u32 %v914, 31
    %v917 = vsub.s32 32, %v916
    %v918 = vshrl.u32 683565275, %v917
    %v919 = vshll.u32 683565275, %v916
    %v920 = vshrl.u32 2475754826, %v917
    %v921 = vor.u32 %v919, %v920
    %v922 = vshll.u32 2475754826, %v916
    %v923 = vshrl.u32 2131351028, %v917
    %v924 = vor.u32 %v922, %v923
    %v925 = vshll.u32 2131351028, %v916
    %v926 = vshrl.u32 2102212464, %v917
    %v927 = vor.u32 %v925, %v926
    %v928 = vshll.u32 2102212464, %v916
    %v929 = vshrl.u32 920167782, %v917
    %v930 = vor.u32 %v928, %v929
    %v931 = vshll.u32 920167782, %v916
    %v932 = vshrl.u32 1326507024, %v917
    %v933 = vor.u32 %v931, %v932
    %vm934 = vcmp.lt.s32.totalorder %v915, 1
    %vm935 = vcmp.lt.s32.totalorder %v915, 2
    %vm936 = vcmp.lt.s32.totalorder %v915, 3
    %vm937 = vcmp.lt.s32.totalorder %v915, 4
    %v938 = vsel %vm934, %v918, %v921
    %v939 = vsel %vm937, %v927, 2102212464
    %v940 = vsel %vm936, %v924, %v939
    %v941 = vsel %vm935, %v938, %v940
    %v942 = vsel %vm934, %v921, %v924
    %v943 = vsel %vm937, %v930, 920167782
    %v944 = vsel %vm936, %v927, %v943
    %v945 = vsel %vm935, %v942, %v944
    %v946 = vsel %vm934, %v924, %v927
    %v947 = vsel %vm937, %v933, 1326507024
    %v948 = vsel %vm936, %v930, %v947
    %v949 = vsel %vm935, %v946, %v948
    %v950 = vshll.u32 %v910, 8
    %v951 = vmul.u32.u64.compose %v950, %v949
    %v952 = vextract.low.u32 %v951
    %v953 = vextract.high.u32 %v951
    %v954 = vmul.u32.u64.compose %v950, %v945
    %v955 = vextract.low.u32 %v954
    %v956 = vextract.high.u32 %v954
    %v957 = vmul.u32 %v950, %v941
    %v958 = vadd.s32 %v953, %v955
    %vm959 = vc.u32 %v953, %v955
    %v960 = vadd.s32 %v956, 1
    %v961 = vsel %vm959, %v960, %v956
    %v962 = vadd.s32 %v957, %v961
    %v963 = vadd.s32 %v962, 536870912
    %v964 = vshrl.u32 %v963, 30
    %v965 = vshll.u32 %v964, 30
    %v966 = vsub.s32 %v962, %v965
    %vm967 = vcmp.lt.s32.totalorder %v966, 0
    %v968 = vsub.s32 0, %v966
    %v969 = vsel %vm967, %v968, %v966
    %v970 = vclz %v969
    %v971 = vsub.s32 %v970, 2
    %vm972 = vcmp.gt.s32.totalorder 0, %v971
    %v973 = vsel %vm972, 0, %v971
    %v974 = vsub.s32 32, %v973
    %v975 = vshll.u32 %v966, %v973
    %v976 = vshrl.u32 %v958, %v974
    %v977 = vor.u32 %v975, %v976
    %v978 = vsub.s32 4294967266, %v973
    %v979 = vadd.s32 %v978, 127
    %v980 = vshll.u32 %v979, 23
    %v981 = vor.u32 4788187, %v980
    %v982 = vand.u32 2147483647, %v981
    %v984 = vcvt.s32.f32 %v977
    %v985 = vmul.f32 %v984, %v982
    %v986 = vxor.u32 %v985, 2147483648
    %v987 = vsel %vm904, %v986, %v985
    %v988 = vsub.s32 4, %v964
    %v989 = vsel %vm904, %v988, %v964
    %v990 = vsel %vm903, %v527, %v987
    %v991 = vsel %vm903, 0, %v989
    %v992 = vcosq.f32.pop %v990
    %v993 = vsinq.f32.pop %v990
    %vm994 = vweird.f32 %v527
    %v995 = vadd.s32 %v991, 3
    %v996 = vand.u32 %v995, 3
    %vm997 = vcmp.lt.s32.totalorder %v996, 2
    %vm998 = vcmp.eq.s32.totalorder %v996, 0
    %v999 = vxor.u32 %v993, 2147483648
    %v1000 = vsel %vm998, %v992, %v999
    %vm1001 = vcmp.eq.s32.totalorder %v996, 2
    %v1002 = vxor.u32 %v992, 2147483648
    %v1003 = vsel %vm1001, %v1002, %v993
    %v1004 = vsel %vm997, %v1000, %v1003
    %v1005 = vsel %vm994, nan, %v1004
    %v1006 = vand.u32 2147483647, %v532
    %vm1007 = vcmp.le.f32.partialorder %v1006, 0.7853982
    %vm1008 = vcmp.lt.s32.totalorder %v532, 0
    %v1009 = vand.u32 %v532, 2139095040
    %v1010 = vshrl.u32 %v1009, 23
    %v1011 = vsub.s32 %v1010, 127
    %v1012 = vand.u32 2147483647, %v532
    %v1013 = vand.u32 %v1012, 8388607
    %v1014 = vor.u32 %v1013, 8388608
    %v1015 = vsub.s32 0, %v1014
    %v1016 = vadd.s32 %v1011, 1
    %vm1017 = vcmp.gt.s32.totalorder %v1016, 0
    %v1018 = vsel %vm1017, %v1016, 0
    %v1019 = vshrl.u32 %v1018, 5
    %v1020 = vand.u32 %v1018, 31
    %v1021 = vsub.s32 32, %v1020
    %v1022 = vshrl.u32 683565275, %v1021
    %v1023 = vshll.u32 683565275, %v1020
    %v1024 = vshrl.u32 2475754826, %v1021
    %v1025 = vor.u32 %v1023, %v1024
    %v1026 = vshll.u32 2475754826, %v1020
    %v1027 = vshrl.u32 2131351028, %v1021
    %v1028 = vor.u32 %v1026, %v1027
    %v1029 = vshll.u32 2131351028, %v1020
    %v1030 = vshrl.u32 2102212464, %v1021
    %v1031 = vor.u32 %v1029, %v1030
    %v1032 = vshll.u32 2102212464, %v1020
    %v1033 = vshrl.u32 920167782, %v1021
    %v1034 = vor.u32 %v1032, %v1033
    %v1035 = vshll.u32 920167782, %v1020
    %v1036 = vshrl.u32 1326507024, %v1021
    %v1037 = vor.u32 %v1035, %v1036
    %vm1038 = vcmp.lt.s32.totalorder %v1019, 1
    %vm1039 = vcmp.lt.s32.totalorder %v1019, 2
    %vm1040 = vcmp.lt.s32.totalorder %v1019, 3
    %vm1041 = vcmp.lt.s32.totalorder %v1019, 4
    %v1042 = vsel %vm1038, %v1022, %v1025
    %v1043 = vsel %vm1041, %v1031, 2102212464
    %v1044 = vsel %vm1040, %v1028, %v1043
    %v1045 = vsel %vm1039, %v1042, %v1044
    %v1046 = vsel %vm1038, %v1025, %v1028
    %v1047 = vsel %vm1041, %v1034, 920167782
    %v1048 = vsel %vm1040, %v1031, %v1047
    %v1049 = vsel %vm1039, %v1046, %v1048
    %v1050 = vsel %vm1038, %v1028, %v1031
    %v1051 = vsel %vm1041, %v1037, 1326507024
    %v1052 = vsel %vm1040, %v1034, %v1051
    %v1053 = vsel %vm1039, %v1050, %v1052
    %v1054 = vshll.u32 %v1014, 8
    %v1055 = vmul.u32.u64.compose %v1054, %v1053
    %v1056 = vextract.low.u32 %v1055
    %v1057 = vextract.high.u32 %v1055
    %v1058 = vmul.u32.u64.compose %v1054, %v1049
    %v1059 = vextract.low.u32 %v1058
    %v1060 = vextract.high.u32 %v1058
    %v1061 = vmul.u32 %v1054, %v1045
    %v1062 = vadd.s32 %v1057, %v1059
    %vm1063 = vc.u32 %v1057, %v1059
    %v1064 = vadd.s32 %v1060, 1
    %v1065 = vsel %vm1063, %v1064, %v1060
    %v1066 = vadd.s32 %v1061, %v1065
    %v1067 = vadd.s32 %v1066, 536870912
    %v1068 = vshrl.u32 %v1067, 30
    %v1069 = vshll.u32 %v1068, 30
    %v1070 = vsub.s32 %v1066, %v1069
    %vm1071 = vcmp.lt.s32.totalorder %v1070, 0
    %v1072 = vsub.s32 0, %v1070
    %v1073 = vsel %vm1071, %v1072, %v1070
    %v1074 = vclz %v1073
    %v1075 = vsub.s32 %v1074, 2
    %vm1076 = vcmp.gt.s32.totalorder 0, %v1075
    %v1077 = vsel %vm1076, 0, %v1075
    %v1078 = vsub.s32 32, %v1077
    %v1079 = vshll.u32 %v1070, %v1077
    %v1080 = vshrl.u32 %v1062, %v1078
    %v1081 = vor.u32 %v1079, %v1080
    %v1082 = vsub.s32 4294967266, %v1077
    %v1083 = vadd.s32 %v1082, 127
    %v1084 = vshll.u32 %v1083, 23
    %v1085 = vor.u32 4788187, %v1084
    %v1086 = vand.u32 2147483647, %v1085
    %v1088 = vcvt.s32.f32 %v1081
    %v1089 = vmul.f32 %v1088, %v1086
    %v1090 = vxor.u32 %v1089, 2147483648
    %v1091 = vsel %vm1008, %v1090, %v1089
    %v1092 = vsub.s32 4, %v1068
    %v1093 = vsel %vm1008, %v1092, %v1068
    %v1094 = vsel %vm1007, %v532, %v1091
    %v1095 = vsel %vm1007, 0, %v1093
    %v1096 = vcosq.f32.pop %v1094
    %v1097 = vsinq.f32.pop %v1094
    %vm1098 = vweird.f32 %v532
    %v1099 = vadd.s32 %v1095, 3
    %v1100 = vand.u32 %v1099, 3
    %vm1101 = vcmp.lt.s32.totalorder %v1100, 2
    %vm1102 = vcmp.eq.s32.totalorder %v1100, 0
    %v1103 = vxor.u32 %v1097, 2147483648
    %v1104 = vsel %vm1102, %v1096, %v1103
    %vm1105 = vcmp.eq.s32.totalorder %v1100, 2
    %v1106 = vxor.u32 %v1096, 2147483648
    %v1107 = vsel %vm1105, %v1106, %v1097
    %v1108 = vsel %vm1101, %v1104, %v1107
    %v1109 = vsel %vm1098, nan, %v1108
    %v1110 = vand.u32 2147483647, %v537
    %vm1111 = vcmp.le.f32.partialorder %v1110, 0.7853982
    %vm1112 = vcmp.lt.s32.totalorder %v537, 0
    %v1113 = vand.u32 %v537, 2139095040
    %v1114 = vshrl.u32 %v1113, 23
    %v1115 = vsub.s32 %v1114, 127
    %v1116 = vand.u32 2147483647, %v537
    %v1117 = vand.u32 %v1116, 8388607
    %v1118 = vor.u32 %v1117, 8388608
    %v1119 = vsub.s32 0, %v1118
    %v1120 = vadd.s32 %v1115, 1
    %vm1121 = vcmp.gt.s32.totalorder %v1120, 0
    %v1122 = vsel %vm1121, %v1120, 0
    %v1123 = vshrl.u32 %v1122, 5
    %v1124 = vand.u32 %v1122, 31
    %v1125 = vsub.s32 32, %v1124
    %v1126 = vshrl.u32 683565275, %v1125
    %v1127 = vshll.u32 683565275, %v1124
    %v1128 = vshrl.u32 2475754826, %v1125
    %v1129 = vor.u32 %v1127, %v1128
    %v1130 = vshll.u32 2475754826, %v1124
    %v1131 = vshrl.u32 2131351028, %v1125
    %v1132 = vor.u32 %v1130, %v1131
    %v1133 = vshll.u32 2131351028, %v1124
    %v1134 = vshrl.u32 2102212464, %v1125
    %v1135 = vor.u32 %v1133, %v1134
    %v1136 = vshll.u32 2102212464, %v1124
    %v1137 = vshrl.u32 920167782, %v1125
    %v1138 = vor.u32 %v1136, %v1137
    %v1139 = vshll.u32 920167782, %v1124
    %v1140 = vshrl.u32 1326507024, %v1125
    %v1141 = vor.u32 %v1139, %v1140
    %vm1142 = vcmp.lt.s32.totalorder %v1123, 1
    %vm1143 = vcmp.lt.s32.totalorder %v1123, 2
    %vm1144 = vcmp.lt.s32.totalorder %v1123, 3
    %vm1145 = vcmp.lt.s32.totalorder %v1123, 4
    %v1146 = vsel %vm1142, %v1126, %v1129
    %v1147 = vsel %vm1145, %v1135, 2102212464
    %v1148 = vsel %vm1144, %v1132, %v1147
    %v1149 = vsel %vm1143, %v1146, %v1148
    %v1150 = vsel %vm1142, %v1129, %v1132
    %v1151 = vsel %vm1145, %v1138, 920167782
    %v1152 = vsel %vm1144, %v1135, %v1151
    %v1153 = vsel %vm1143, %v1150, %v1152
    %v1154 = vsel %vm1142, %v1132, %v1135
    %v1155 = vsel %vm1145, %v1141, 1326507024
    %v1156 = vsel %vm1144, %v1138, %v1155
    %v1157 = vsel %vm1143, %v1154, %v1156
    %v1158 = vshll.u32 %v1118, 8
    %v1159 = vmul.u32.u64.compose %v1158, %v1157
    %v1160 = vextract.low.u32 %v1159
    %v1161 = vextract.high.u32 %v1159
    %v1162 = vmul.u32.u64.compose %v1158, %v1153
    %v1163 = vextract.low.u32 %v1162
    %v1164 = vextract.high.u32 %v1162
    %v1165 = vmul.u32 %v1158, %v1149
    %v1166 = vadd.s32 %v1161, %v1163
    %vm1167 = vc.u32 %v1161, %v1163
    %v1168 = vadd.s32 %v1164, 1
    %v1169 = vsel %vm1167, %v1168, %v1164
    %v1170 = vadd.s32 %v1165, %v1169
    %v1171 = vadd.s32 %v1170, 536870912
    %v1172 = vshrl.u32 %v1171, 30
    %v1173 = vshll.u32 %v1172, 30
    %v1174 = vsub.s32 %v1170, %v1173
    %vm1175 = vcmp.lt.s32.totalorder %v1174, 0
    %v1176 = vsub.s32 0, %v1174
    %v1177 = vsel %vm1175, %v1176, %v1174
    %v1178 = vclz %v1177
    %v1179 = vsub.s32 %v1178, 2
    %vm1180 = vcmp.gt.s32.totalorder 0, %v1179
    %v1181 = vsel %vm1180, 0, %v1179
    %v1182 = vsub.s32 32, %v1181
    %v1183 = vshll.u32 %v1174, %v1181
    %v1184 = vshrl.u32 %v1166, %v1182
    %v1185 = vor.u32 %v1183, %v1184
    %v1186 = vsub.s32 4294967266, %v1181
    %v1187 = vadd.s32 %v1186, 127
    %v1188 = vshll.u32 %v1187, 23
    %v1189 = vor.u32 4788187, %v1188
    %v1190 = vand.u32 2147483647, %v1189
    %v1192 = vcvt.s32.f32 %v1185
    %v1193 = vmul.f32 %v1192, %v1190
    %v1194 = vxor.u32 %v1193, 2147483648
    %v1195 = vsel %vm1112, %v1194, %v1193
    %v1196 = vsub.s32 4, %v1172
    %v1197 = vsel %vm1112, %v1196, %v1172
    %v1198 = vsel %vm1111, %v537, %v1195
    %v1199 = vsel %vm1111, 0, %v1197
    %v1200 = vcosq.f32.pop %v1198
    %v1201 = vsinq.f32.pop %v1198
    %vm1202 = vweird.f32 %v537
    %v1203 = vadd.s32 %v1199, 3
    %v1204 = vand.u32 %v1203, 3
    %vm1205 = vcmp.lt.s32.totalorder %v1204, 2
    %vm1206 = vcmp.eq.s32.totalorder %v1204, 0
    %v1207 = vxor.u32 %v1201, 2147483648
    %v1208 = vsel %vm1206, %v1200, %v1207
    %vm1209 = vcmp.eq.s32.totalorder %v1204, 2
    %v1210 = vxor.u32 %v1200, 2147483648
    %v1211 = vsel %vm1209, %v1210, %v1201
    %v1212 = vsel %vm1205, %v1208, %v1211
    %v1213 = vsel %vm1202, nan, %v1212
    %v1214 = vand.u32 2147483647, %v542
    %vm1215 = vcmp.le.f32.partialorder %v1214, 0.7853982
    %vm1216 = vcmp.lt.s32.totalorder %v542, 0
    %v1217 = vand.u32 %v542, 2139095040
    %v1218 = vshrl.u32 %v1217, 23
    %v1219 = vsub.s32 %v1218, 127
    %v1220 = vand.u32 2147483647, %v542
    %v1221 = vand.u32 %v1220, 8388607
    %v1222 = vor.u32 %v1221, 8388608
    %v1223 = vsub.s32 0, %v1222
    %v1224 = vadd.s32 %v1219, 1
    %vm1225 = vcmp.gt.s32.totalorder %v1224, 0
    %v1226 = vsel %vm1225, %v1224, 0
    %v1227 = vshrl.u32 %v1226, 5
    %v1228 = vand.u32 %v1226, 31
    %v1229 = vsub.s32 32, %v1228
    %v1230 = vshrl.u32 683565275, %v1229
    %v1231 = vshll.u32 683565275, %v1228
    %v1232 = vshrl.u32 2475754826, %v1229
    %v1233 = vor.u32 %v1231, %v1232
    %v1234 = vshll.u32 2475754826, %v1228
    %v1235 = vshrl.u32 2131351028, %v1229
    %v1236 = vor.u32 %v1234, %v1235
    %v1237 = vshll.u32 2131351028, %v1228
    %v1238 = vshrl.u32 2102212464, %v1229
    %v1239 = vor.u32 %v1237, %v1238
    %v1240 = vshll.u32 2102212464, %v1228
    %v1241 = vshrl.u32 920167782, %v1229
    %v1242 = vor.u32 %v1240, %v1241
    %v1243 = vshll.u32 920167782, %v1228
    %v1244 = vshrl.u32 1326507024, %v1229
    %v1245 = vor.u32 %v1243, %v1244
    %vm1246 = vcmp.lt.s32.totalorder %v1227, 1
    %vm1247 = vcmp.lt.s32.totalorder %v1227, 2
    %vm1248 = vcmp.lt.s32.totalorder %v1227, 3
    %vm1249 = vcmp.lt.s32.totalorder %v1227, 4
    %v1250 = vsel %vm1246, %v1230, %v1233
    %v1251 = vsel %vm1249, %v1239, 2102212464
    %v1252 = vsel %vm1248, %v1236, %v1251
    %v1253 = vsel %vm1247, %v1250, %v1252
    %v1254 = vsel %vm1246, %v1233, %v1236
    %v1255 = vsel %vm1249, %v1242, 920167782
    %v1256 = vsel %vm1248, %v1239, %v1255
    %v1257 = vsel %vm1247, %v1254, %v1256
    %v1258 = vsel %vm1246, %v1236, %v1239
    %v1259 = vsel %vm1249, %v1245, 1326507024
    %v1260 = vsel %vm1248, %v1242, %v1259
    %v1261 = vsel %vm1247, %v1258, %v1260
    %v1262 = vshll.u32 %v1222, 8
    %v1263 = vmul.u32.u64.compose %v1262, %v1261
    %v1264 = vextract.low.u32 %v1263
    %v1265 = vextract.high.u32 %v1263
    %v1266 = vmul.u32.u64.compose %v1262, %v1257
    %v1267 = vextract.low.u32 %v1266
    %v1268 = vextract.high.u32 %v1266
    %v1269 = vmul.u32 %v1262, %v1253
    %v1270 = vadd.s32 %v1265, %v1267
    %vm1271 = vc.u32 %v1265, %v1267
    %v1272 = vadd.s32 %v1268, 1
    %v1273 = vsel %vm1271, %v1272, %v1268
    %v1274 = vadd.s32 %v1269, %v1273
    %v1275 = vadd.s32 %v1274, 536870912
    %v1276 = vshrl.u32 %v1275, 30
    %v1277 = vshll.u32 %v1276, 30
    %v1278 = vsub.s32 %v1274, %v1277
    %vm1279 = vcmp.lt.s32.totalorder %v1278, 0
    %v1280 = vsub.s32 0, %v1278
    %v1281 = vsel %vm1279, %v1280, %v1278
    %v1282 = vclz %v1281
    %v1283 = vsub.s32 %v1282, 2
    %vm1284 = vcmp.gt.s32.totalorder 0, %v1283
    %v1285 = vsel %vm1284, 0, %v1283
    %v1286 = vsub.s32 32, %v1285
    %v1287 = vshll.u32 %v1278, %v1285
    %v1288 = vshrl.u32 %v1270, %v1286
    %v1289 = vor.u32 %v1287, %v1288
    %v1290 = vsub.s32 4294967266, %v1285
    %v1291 = vadd.s32 %v1290, 127
    %v1292 = vshll.u32 %v1291, 23
    %v1293 = vor.u32 4788187, %v1292
    %v1294 = vand.u32 2147483647, %v1293
    %v1296 = vcvt.s32.f32 %v1289
    %v1297 = vmul.f32 %v1296, %v1294
    %v1298 = vxor.u32 %v1297, 2147483648
    %v1299 = vsel %vm1216, %v1298, %v1297
    %v1300 = vsub.s32 4, %v1276
    %v1301 = vsel %vm1216, %v1300, %v1276
    %v1302 = vsel %vm1215, %v542, %v1299
    %v1303 = vsel %vm1215, 0, %v1301
    %v1304 = vcosq.f32.pop %v1302
    %v1305 = vsinq.f32.pop %v1302
    %vm1306 = vweird.f32 %v542
    %v1307 = vadd.s32 %v1303, 3
    %v1308 = vand.u32 %v1307, 3
    %vm1309 = vcmp.lt.s32.totalorder %v1308, 2
    %vm1310 = vcmp.eq.s32.totalorder %v1308, 0
    %v1311 = vxor.u32 %v1305, 2147483648
    %v1312 = vsel %vm1310, %v1304, %v1311
    %vm1313 = vcmp.eq.s32.totalorder %v1308, 2
    %v1314 = vxor.u32 %v1304, 2147483648
    %v1315 = vsel %vm1313, %v1314, %v1305
    %v1316 = vsel %vm1309, %v1312, %v1315
    %v1317 = vsel %vm1306, nan, %v1316
    %v1318 = vand.u32 2147483647, %v547
    %vm1319 = vcmp.le.f32.partialorder %v1318, 0.7853982
    %vm1320 = vcmp.lt.s32.totalorder %v547, 0
    %v1321 = vand.u32 %v547, 2139095040
    %v1322 = vshrl.u32 %v1321, 23
    %v1323 = vsub.s32 %v1322, 127
    %v1324 = vand.u32 2147483647, %v547
    %v1325 = vand.u32 %v1324, 8388607
    %v1326 = vor.u32 %v1325, 8388608
    %v1327 = vsub.s32 0, %v1326
    %v1328 = vadd.s32 %v1323, 1
    %vm1329 = vcmp.gt.s32.totalorder %v1328, 0
    %v1330 = vsel %vm1329, %v1328, 0
    %v1331 = vshrl.u32 %v1330, 5
    %v1332 = vand.u32 %v1330, 31
    %v1333 = vsub.s32 32, %v1332
    %v1334 = vshrl.u32 683565275, %v1333
    %v1335 = vshll.u32 683565275, %v1332
    %v1336 = vshrl.u32 2475754826, %v1333
    %v1337 = vor.u32 %v1335, %v1336
    %v1338 = vshll.u32 2475754826, %v1332
    %v1339 = vshrl.u32 2131351028, %v1333
    %v1340 = vor.u32 %v1338, %v1339
    %v1341 = vshll.u32 2131351028, %v1332
    %v1342 = vshrl.u32 2102212464, %v1333
    %v1343 = vor.u32 %v1341, %v1342
    %v1344 = vshll.u32 2102212464, %v1332
    %v1345 = vshrl.u32 920167782, %v1333
    %v1346 = vor.u32 %v1344, %v1345
    %v1347 = vshll.u32 920167782, %v1332
    %v1348 = vshrl.u32 1326507024, %v1333
    %v1349 = vor.u32 %v1347, %v1348
    %vm1350 = vcmp.lt.s32.totalorder %v1331, 1
    %vm1351 = vcmp.lt.s32.totalorder %v1331, 2
    %vm1352 = vcmp.lt.s32.totalorder %v1331, 3
    %vm1353 = vcmp.lt.s32.totalorder %v1331, 4
    %v1354 = vsel %vm1350, %v1334, %v1337
    %v1355 = vsel %vm1353, %v1343, 2102212464
    %v1356 = vsel %vm1352, %v1340, %v1355
    %v1357 = vsel %vm1351, %v1354, %v1356
    %v1358 = vsel %vm1350, %v1337, %v1340
    %v1359 = vsel %vm1353, %v1346, 920167782
    %v1360 = vsel %vm1352, %v1343, %v1359
    %v1361 = vsel %vm1351, %v1358, %v1360
    %v1362 = vsel %vm1350, %v1340, %v1343
    %v1363 = vsel %vm1353, %v1349, 1326507024
    %v1364 = vsel %vm1352, %v1346, %v1363
    %v1365 = vsel %vm1351, %v1362, %v1364
    %v1366 = vshll.u32 %v1326, 8
    %v1367 = vmul.u32.u64.compose %v1366, %v1365
    %v1368 = vextract.low.u32 %v1367
    %v1369 = vextract.high.u32 %v1367
    %v1370 = vmul.u32.u64.compose %v1366, %v1361
    %v1371 = vextract.low.u32 %v1370
    %v1372 = vextract.high.u32 %v1370
    %v1373 = vmul.u32 %v1366, %v1357
    %v1374 = vadd.s32 %v1369, %v1371
    %vm1375 = vc.u32 %v1369, %v1371
    %v1376 = vadd.s32 %v1372, 1
    %v1377 = vsel %vm1375, %v1376, %v1372
    %v1378 = vadd.s32 %v1373, %v1377
    %v1379 = vadd.s32 %v1378, 536870912
    %v1380 = vshrl.u32 %v1379, 30
    %v1381 = vshll.u32 %v1380, 30
    %v1382 = vsub.s32 %v1378, %v1381
    %vm1383 = vcmp.lt.s32.totalorder %v1382, 0
    %v1384 = vsub.s32 0, %v1382
    %v1385 = vsel %vm1383, %v1384, %v1382
    %v1386 = vclz %v1385
    %v1387 = vsub.s32 %v1386, 2
    %vm1388 = vcmp.gt.s32.totalorder 0, %v1387
    %v1389 = vsel %vm1388, 0, %v1387
    %v1390 = vsub.s32 32, %v1389
    %v1391 = vshll.u32 %v1382, %v1389
    %v1392 = vshrl.u32 %v1374, %v1390
    %v1393 = vor.u32 %v1391, %v1392
    %v1394 = vsub.s32 4294967266, %v1389
    %v1395 = vadd.s32 %v1394, 127
    %v1396 = vshll.u32 %v1395, 23
    %v1397 = vor.u32 4788187, %v1396
    %v1398 = vand.u32 2147483647, %v1397
    %v1400 = vcvt.s32.f32 %v1393
    %v1401 = vmul.f32 %v1400, %v1398
    %v1402 = vxor.u32 %v1401, 2147483648
    %v1403 = vsel %vm1320, %v1402, %v1401
    %v1404 = vsub.s32 4, %v1380
    %v1405 = vsel %vm1320, %v1404, %v1380
    %v1406 = vsel %vm1319, %v547, %v1403
    %v1407 = vsel %vm1319, 0, %v1405
    %v1408 = vcosq.f32.pop %v1406
    %v1409 = vsinq.f32.pop %v1406
    %vm1410 = vweird.f32 %v547
    %v1411 = vadd.s32 %v1407, 3
    %v1412 = vand.u32 %v1411, 3
    %vm1413 = vcmp.lt.s32.totalorder %v1412, 2
    %vm1414 = vcmp.eq.s32.totalorder %v1412, 0
    %v1415 = vxor.u32 %v1409, 2147483648
    %v1416 = vsel %vm1414, %v1408, %v1415
    %vm1417 = vcmp.eq.s32.totalorder %v1412, 2
    %v1418 = vxor.u32 %v1408, 2147483648
    %v1419 = vsel %vm1417, %v1418, %v1409
    %v1420 = vsel %vm1413, %v1416, %v1419
    %v1421 = vsel %vm1410, nan, %v1420
    %v1422 = vand.u32 2147483647, %v552
    %vm1423 = vcmp.le.f32.partialorder %v1422, 0.7853982
    %vm1424 = vcmp.lt.s32.totalorder %v552, 0
    %v1425 = vand.u32 %v552, 2139095040
    %v1426 = vshrl.u32 %v1425, 23
    %v1427 = vsub.s32 %v1426, 127
    %v1428 = vand.u32 2147483647, %v552
    %v1429 = vand.u32 %v1428, 8388607
    %v1430 = vor.u32 %v1429, 8388608
    %v1431 = vsub.s32 0, %v1430
    %v1432 = vadd.s32 %v1427, 1
    %vm1433 = vcmp.gt.s32.totalorder %v1432, 0
    %v1434 = vsel %vm1433, %v1432, 0
    %v1435 = vshrl.u32 %v1434, 5
    %v1436 = vand.u32 %v1434, 31
    %v1437 = vsub.s32 32, %v1436
    %v1438 = vshrl.u32 683565275, %v1437
    %v1439 = vshll.u32 683565275, %v1436
    %v1440 = vshrl.u32 2475754826, %v1437
    %v1441 = vor.u32 %v1439, %v1440
    %v1442 = vshll.u32 2475754826, %v1436
    %v1443 = vshrl.u32 2131351028, %v1437
    %v1444 = vor.u32 %v1442, %v1443
    %v1445 = vshll.u32 2131351028, %v1436
    %v1446 = vshrl.u32 2102212464, %v1437
    %v1447 = vor.u32 %v1445, %v1446
    %v1448 = vshll.u32 2102212464, %v1436
    %v1449 = vshrl.u32 920167782, %v1437
    %v1450 = vor.u32 %v1448, %v1449
    %v1451 = vshll.u32 920167782, %v1436
    %v1452 = vshrl.u32 1326507024, %v1437
    %v1453 = vor.u32 %v1451, %v1452
    %vm1454 = vcmp.lt.s32.totalorder %v1435, 1
    %vm1455 = vcmp.lt.s32.totalorder %v1435, 2
    %vm1456 = vcmp.lt.s32.totalorder %v1435, 3
    %vm1457 = vcmp.lt.s32.totalorder %v1435, 4
    %v1458 = vsel %vm1454, %v1438, %v1441
    %v1459 = vsel %vm1457, %v1447, 2102212464
    %v1460 = vsel %vm1456, %v1444, %v1459
    %v1461 = vsel %vm1455, %v1458, %v1460
    %v1462 = vsel %vm1454, %v1441, %v1444
    %v1463 = vsel %vm1457, %v1450, 920167782
    %v1464 = vsel %vm1456, %v1447, %v1463
    %v1465 = vsel %vm1455, %v1462, %v1464
    %v1466 = vsel %vm1454, %v1444, %v1447
    %v1467 = vsel %vm1457, %v1453, 1326507024
    %v1468 = vsel %vm1456, %v1450, %v1467
    %v1469 = vsel %vm1455, %v1466, %v1468
    %v1470 = vshll.u32 %v1430, 8
    %v1471 = vmul.u32.u64.compose %v1470, %v1469
    %v1472 = vextract.low.u32 %v1471
    %v1473 = vextract.high.u32 %v1471
    %v1474 = vmul.u32.u64.compose %v1470, %v1465
    %v1475 = vextract.low.u32 %v1474
    %v1476 = vextract.high.u32 %v1474
    %v1477 = vmul.u32 %v1470, %v1461
    %v1478 = vadd.s32 %v1473, %v1475
    %vm1479 = vc.u32 %v1473, %v1475
    %v1480 = vadd.s32 %v1476, 1
    %v1481 = vsel %vm1479, %v1480, %v1476
    %v1482 = vadd.s32 %v1477, %v1481
    %v1483 = vadd.s32 %v1482, 536870912
    %v1484 = vshrl.u32 %v1483, 30
    %v1485 = vshll.u32 %v1484, 30
    %v1486 = vsub.s32 %v1482, %v1485
    %vm1487 = vcmp.lt.s32.totalorder %v1486, 0
    %v1488 = vsub.s32 0, %v1486
    %v1489 = vsel %vm1487, %v1488, %v1486
    %v1490 = vclz %v1489
    %v1491 = vsub.s32 %v1490, 2
    %vm1492 = vcmp.gt.s32.totalorder 0, %v1491
    %v1493 = vsel %vm1492, 0, %v1491
    %v1494 = vsub.s32 32, %v1493
    %v1495 = vshll.u32 %v1486, %v1493
    %v1496 = vshrl.u32 %v1478, %v1494
    %v1497 = vor.u32 %v1495, %v1496
    %v1498 = vsub.s32 4294967266, %v1493
    %v1499 = vadd.s32 %v1498, 127
    %v1500 = vshll.u32 %v1499, 23
    %v1501 = vor.u32 4788187, %v1500
    %v1502 = vand.u32 2147483647, %v1501
    %v1504 = vcvt.s32.f32 %v1497
    %v1505 = vmul.f32 %v1504, %v1502
    %v1506 = vxor.u32 %v1505, 2147483648
    %v1507 = vsel %vm1424, %v1506, %v1505
    %v1508 = vsub.s32 4, %v1484
    %v1509 = vsel %vm1424, %v1508, %v1484
    %v1510 = vsel %vm1423, %v552, %v1507
    %v1511 = vsel %vm1423, 0, %v1509
    %v1512 = vcosq.f32.pop %v1510
    %v1513 = vsinq.f32.pop %v1510
    %vm1514 = vweird.f32 %v552
    %v1515 = vadd.s32 %v1511, 3
    %v1516 = vand.u32 %v1515, 3
    %vm1517 = vcmp.lt.s32.totalorder %v1516, 2
    %vm1518 = vcmp.eq.s32.totalorder %v1516, 0
    %v1519 = vxor.u32 %v1513, 2147483648
    %v1520 = vsel %vm1518, %v1512, %v1519
    %vm1521 = vcmp.eq.s32.totalorder %v1516, 2
    %v1522 = vxor.u32 %v1512, 2147483648
    %v1523 = vsel %vm1521, %v1522, %v1513
    %v1524 = vsel %vm1517, %v1520, %v1523
    %v1525 = vsel %vm1514, nan, %v1524
    %v1526 = vand.u32 2147483647, %v557
    %vm1527 = vcmp.le.f32.partialorder %v1526, 0.7853982
    %vm1528 = vcmp.lt.s32.totalorder %v557, 0
    %v1529 = vand.u32 %v557, 2139095040
    %v1530 = vshrl.u32 %v1529, 23
    %v1531 = vsub.s32 %v1530, 127
    %v1532 = vand.u32 2147483647, %v557
    %v1533 = vand.u32 %v1532, 8388607
    %v1534 = vor.u32 %v1533, 8388608
    %v1535 = vsub.s32 0, %v1534
    %v1536 = vadd.s32 %v1531, 1
    %vm1537 = vcmp.gt.s32.totalorder %v1536, 0
    %v1538 = vsel %vm1537, %v1536, 0
    %v1539 = vshrl.u32 %v1538, 5
    %v1540 = vand.u32 %v1538, 31
    %v1541 = vsub.s32 32, %v1540
    %v1542 = vshrl.u32 683565275, %v1541
    %v1543 = vshll.u32 683565275, %v1540
    %v1544 = vshrl.u32 2475754826, %v1541
    %v1545 = vor.u32 %v1543, %v1544
    %v1546 = vshll.u32 2475754826, %v1540
    %v1547 = vshrl.u32 2131351028, %v1541
    %v1548 = vor.u32 %v1546, %v1547
    %v1549 = vshll.u32 2131351028, %v1540
    %v1550 = vshrl.u32 2102212464, %v1541
    %v1551 = vor.u32 %v1549, %v1550
    %v1552 = vshll.u32 2102212464, %v1540
    %v1553 = vshrl.u32 920167782, %v1541
    %v1554 = vor.u32 %v1552, %v1553
    %v1555 = vshll.u32 920167782, %v1540
    %v1556 = vshrl.u32 1326507024, %v1541
    %v1557 = vor.u32 %v1555, %v1556
    %vm1558 = vcmp.lt.s32.totalorder %v1539, 1
    %vm1559 = vcmp.lt.s32.totalorder %v1539, 2
    %vm1560 = vcmp.lt.s32.totalorder %v1539, 3
    %vm1561 = vcmp.lt.s32.totalorder %v1539, 4
    %v1562 = vsel %vm1558, %v1542, %v1545
    %v1563 = vsel %vm1561, %v1551, 2102212464
    %v1564 = vsel %vm1560, %v1548, %v1563
    %v1565 = vsel %vm1559, %v1562, %v1564
    %v1566 = vsel %vm1558, %v1545, %v1548
    %v1567 = vsel %vm1561, %v1554, 920167782
    %v1568 = vsel %vm1560, %v1551, %v1567
    %v1569 = vsel %vm1559, %v1566, %v1568
    %v1570 = vsel %vm1558, %v1548, %v1551
    %v1571 = vsel %vm1561, %v1557, 1326507024
    %v1572 = vsel %vm1560, %v1554, %v1571
    %v1573 = vsel %vm1559, %v1570, %v1572
    %v1574 = vshll.u32 %v1534, 8
    %v1575 = vmul.u32.u64.compose %v1574, %v1573
    %v1576 = vextract.low.u32 %v1575
    %v1577 = vextract.high.u32 %v1575
    %v1578 = vmul.u32.u64.compose %v1574, %v1569
    %v1579 = vextract.low.u32 %v1578
    %v1580 = vextract.high.u32 %v1578
    %v1581 = vmul.u32 %v1574, %v1565
    %v1582 = vadd.s32 %v1577, %v1579
    %vm1583 = vc.u32 %v1577, %v1579
    %v1584 = vadd.s32 %v1580, 1
    %v1585 = vsel %vm1583, %v1584, %v1580
    %v1586 = vadd.s32 %v1581, %v1585
    %v1587 = vadd.s32 %v1586, 536870912
    %v1588 = vshrl.u32 %v1587, 30
    %v1589 = vshll.u32 %v1588, 30
    %v1590 = vsub.s32 %v1586, %v1589
    %vm1591 = vcmp.lt.s32.totalorder %v1590, 0
    %v1592 = vsub.s32 0, %v1590
    %v1593 = vsel %vm1591, %v1592, %v1590
    %v1594 = vclz %v1593
    %v1595 = vsub.s32 %v1594, 2
    %vm1596 = vcmp.gt.s32.totalorder 0, %v1595
    %v1597 = vsel %vm1596, 0, %v1595
    %v1598 = vsub.s32 32, %v1597
    %v1599 = vshll.u32 %v1590, %v1597
    %v1600 = vshrl.u32 %v1582, %v1598
    %v1601 = vor.u32 %v1599, %v1600
    %v1602 = vsub.s32 4294967266, %v1597
    %v1603 = vadd.s32 %v1602, 127
    %v1604 = vshll.u32 %v1603, 23
    %v1605 = vor.u32 4788187, %v1604
    %v1606 = vand.u32 2147483647, %v1605
    %v1608 = vcvt.s32.f32 %v1601
    %v1609 = vmul.f32 %v1608, %v1606
    %v1610 = vxor.u32 %v1609, 2147483648
    %v1611 = vsel %vm1528, %v1610, %v1609
    %v1612 = vsub.s32 4, %v1588
    %v1613 = vsel %vm1528, %v1612, %v1588
    %v1614 = vsel %vm1527, %v557, %v1611
    %v1615 = vsel %vm1527, 0, %v1613
    %v1616 = vcosq.f32.pop %v1614
    %v1617 = vsinq.f32.pop %v1614
    %vm1618 = vweird.f32 %v557
    %v1619 = vadd.s32 %v1615, 3
    %v1620 = vand.u32 %v1619, 3
    %vm1621 = vcmp.lt.s32.totalorder %v1620, 2
    %vm1622 = vcmp.eq.s32.totalorder %v1620, 0
    %v1623 = vxor.u32 %v1617, 2147483648
    %v1624 = vsel %vm1622, %v1616, %v1623
    %vm1625 = vcmp.eq.s32.totalorder %v1620, 2
    %v1626 = vxor.u32 %v1616, 2147483648
    %v1627 = vsel %vm1625, %v1626, %v1617
    %v1628 = vsel %vm1621, %v1624, %v1627
    %v1629 = vsel %vm1618, nan, %v1628
    %v1630 = vand.u32 2147483647, %v562
    %vm1631 = vcmp.le.f32.partialorder %v1630, 0.7853982
    %vm1632 = vcmp.lt.s32.totalorder %v562, 0
    %v1633 = vand.u32 %v562, 2139095040
    %v1634 = vshrl.u32 %v1633, 23
    %v1635 = vsub.s32 %v1634, 127
    %v1636 = vand.u32 2147483647, %v562
    %v1637 = vand.u32 %v1636, 8388607
    %v1638 = vor.u32 %v1637, 8388608
    %v1639 = vsub.s32 0, %v1638
    %v1640 = vadd.s32 %v1635, 1
    %vm1641 = vcmp.gt.s32.totalorder %v1640, 0
    %v1642 = vsel %vm1641, %v1640, 0
    %v1643 = vshrl.u32 %v1642, 5
    %v1644 = vand.u32 %v1642, 31
    %v1645 = vsub.s32 32, %v1644
    %v1646 = vshrl.u32 683565275, %v1645
    %v1647 = vshll.u32 683565275, %v1644
    %v1648 = vshrl.u32 2475754826, %v1645
    %v1649 = vor.u32 %v1647, %v1648
    %v1650 = vshll.u32 2475754826, %v1644
    %v1651 = vshrl.u32 2131351028, %v1645
    %v1652 = vor.u32 %v1650, %v1651
    %v1653 = vshll.u32 2131351028, %v1644
    %v1654 = vshrl.u32 2102212464, %v1645
    %v1655 = vor.u32 %v1653, %v1654
    %v1656 = vshll.u32 2102212464, %v1644
    %v1657 = vshrl.u32 920167782, %v1645
    %v1658 = vor.u32 %v1656, %v1657
    %v1659 = vshll.u32 920167782, %v1644
    %v1660 = vshrl.u32 1326507024, %v1645
    %v1661 = vor.u32 %v1659, %v1660
    %vm1662 = vcmp.lt.s32.totalorder %v1643, 1
    %vm1663 = vcmp.lt.s32.totalorder %v1643, 2
    %vm1664 = vcmp.lt.s32.totalorder %v1643, 3
    %vm1665 = vcmp.lt.s32.totalorder %v1643, 4
    %v1666 = vsel %vm1662, %v1646, %v1649
    %v1667 = vsel %vm1665, %v1655, 2102212464
    %v1668 = vsel %vm1664, %v1652, %v1667
    %v1669 = vsel %vm1663, %v1666, %v1668
    %v1670 = vsel %vm1662, %v1649, %v1652
    %v1671 = vsel %vm1665, %v1658, 920167782
    %v1672 = vsel %vm1664, %v1655, %v1671
    %v1673 = vsel %vm1663, %v1670, %v1672
    %v1674 = vsel %vm1662, %v1652, %v1655
    %v1675 = vsel %vm1665, %v1661, 1326507024
    %v1676 = vsel %vm1664, %v1658, %v1675
    %v1677 = vsel %vm1663, %v1674, %v1676
    %v1678 = vshll.u32 %v1638, 8
    %v1679 = vmul.u32.u64.compose %v1678, %v1677
    %v1680 = vextract.low.u32 %v1679
    %v1681 = vextract.high.u32 %v1679
    %v1682 = vmul.u32.u64.compose %v1678, %v1673
    %v1683 = vextract.low.u32 %v1682
    %v1684 = vextract.high.u32 %v1682
    %v1685 = vmul.u32 %v1678, %v1669
    %v1686 = vadd.s32 %v1681, %v1683
    %vm1687 = vc.u32 %v1681, %v1683
    %v1688 = vadd.s32 %v1684, 1
    %v1689 = vsel %vm1687, %v1688, %v1684
    %v1690 = vadd.s32 %v1685, %v1689
    %v1691 = vadd.s32 %v1690, 536870912
    %v1692 = vshrl.u32 %v1691, 30
    %v1693 = vshll.u32 %v1692, 30
    %v1694 = vsub.s32 %v1690, %v1693
    %vm1695 = vcmp.lt.s32.totalorder %v1694, 0
    %v1696 = vsub.s32 0, %v1694
    %v1697 = vsel %vm1695, %v1696, %v1694
    %v1698 = vclz %v1697
    %v1699 = vsub.s32 %v1698, 2
    %vm1700 = vcmp.gt.s32.totalorder 0, %v1699
    %v1701 = vsel %vm1700, 0, %v1699
    %v1702 = vsub.s32 32, %v1701
    %v1703 = vshll.u32 %v1694, %v1701
    %v1704 = vshrl.u32 %v1686, %v1702
    %v1705 = vor.u32 %v1703, %v1704
    %v1706 = vsub.s32 4294967266, %v1701
    %v1707 = vadd.s32 %v1706, 127
    %v1708 = vshll.u32 %v1707, 23
    %v1709 = vor.u32 4788187, %v1708
    %v1710 = vand.u32 2147483647, %v1709
    %v1712 = vcvt.s32.f32 %v1705
    %v1713 = vmul.f32 %v1712, %v1710
    %v1714 = vxor.u32 %v1713, 2147483648
    %v1715 = vsel %vm1632, %v1714, %v1713
    %v1716 = vsub.s32 4, %v1692
    %v1717 = vsel %vm1632, %v1716, %v1692
    %v1718 = vsel %vm1631, %v562, %v1715
    %v1719 = vsel %vm1631, 0, %v1717
    %v1720 = vcosq.f32.pop %v1718
    %v1721 = vsinq.f32.pop %v1718
    %vm1722 = vweird.f32 %v562
    %v1723 = vadd.s32 %v1719, 3
    %v1724 = vand.u32 %v1723, 3
    %vm1725 = vcmp.lt.s32.totalorder %v1724, 2
    %vm1726 = vcmp.eq.s32.totalorder %v1724, 0
    %v1727 = vxor.u32 %v1721, 2147483648
    %v1728 = vsel %vm1726, %v1720, %v1727
    %vm1729 = vcmp.eq.s32.totalorder %v1724, 2
    %v1730 = vxor.u32 %v1720, 2147483648
    %v1731 = vsel %vm1729, %v1730, %v1721
    %v1732 = vsel %vm1725, %v1728, %v1731
    %v1733 = vsel %vm1722, nan, %v1732
    %v1734 = vand.u32 2147483647, %v567
    %vm1735 = vcmp.le.f32.partialorder %v1734, 0.7853982
    %vm1736 = vcmp.lt.s32.totalorder %v567, 0
    %v1737 = vand.u32 %v567, 2139095040
    %v1738 = vshrl.u32 %v1737, 23
    %v1739 = vsub.s32 %v1738, 127
    %v1740 = vand.u32 2147483647, %v567
    %v1741 = vand.u32 %v1740, 8388607
    %v1742 = vor.u32 %v1741, 8388608
    %v1743 = vsub.s32 0, %v1742
    %v1744 = vadd.s32 %v1739, 1
    %vm1745 = vcmp.gt.s32.totalorder %v1744, 0
    %v1746 = vsel %vm1745, %v1744, 0
    %v1747 = vshrl.u32 %v1746, 5
    %v1748 = vand.u32 %v1746, 31
    %v1749 = vsub.s32 32, %v1748
    %v1750 = vshrl.u32 683565275, %v1749
    %v1751 = vshll.u32 683565275, %v1748
    %v1752 = vshrl.u32 2475754826, %v1749
    %v1753 = vor.u32 %v1751, %v1752
    %v1754 = vshll.u32 2475754826, %v1748
    %v1755 = vshrl.u32 2131351028, %v1749
    %v1756 = vor.u32 %v1754, %v1755
    %v1757 = vshll.u32 2131351028, %v1748
    %v1758 = vshrl.u32 2102212464, %v1749
    %v1759 = vor.u32 %v1757, %v1758
    %v1760 = vshll.u32 2102212464, %v1748
    %v1761 = vshrl.u32 920167782, %v1749
    %v1762 = vor.u32 %v1760, %v1761
    %v1763 = vshll.u32 920167782, %v1748
    %v1764 = vshrl.u32 1326507024, %v1749
    %v1765 = vor.u32 %v1763, %v1764
    %vm1766 = vcmp.lt.s32.totalorder %v1747, 1
    %vm1767 = vcmp.lt.s32.totalorder %v1747, 2
    %vm1768 = vcmp.lt.s32.totalorder %v1747, 3
    %vm1769 = vcmp.lt.s32.totalorder %v1747, 4
    %v1770 = vsel %vm1766, %v1750, %v1753
    %v1771 = vsel %vm1769, %v1759, 2102212464
    %v1772 = vsel %vm1768, %v1756, %v1771
    %v1773 = vsel %vm1767, %v1770, %v1772
    %v1774 = vsel %vm1766, %v1753, %v1756
    %v1775 = vsel %vm1769, %v1762, 920167782
    %v1776 = vsel %vm1768, %v1759, %v1775
    %v1777 = vsel %vm1767, %v1774, %v1776
    %v1778 = vsel %vm1766, %v1756, %v1759
    %v1779 = vsel %vm1769, %v1765, 1326507024
    %v1780 = vsel %vm1768, %v1762, %v1779
    %v1781 = vsel %vm1767, %v1778, %v1780
    %v1782 = vshll.u32 %v1742, 8
    %v1783 = vmul.u32.u64.compose %v1782, %v1781
    %v1784 = vextract.low.u32 %v1783
    %v1785 = vextract.high.u32 %v1783
    %v1786 = vmul.u32.u64.compose %v1782, %v1777
    %v1787 = vextract.low.u32 %v1786
    %v1788 = vextract.high.u32 %v1786
    %v1789 = vmul.u32 %v1782, %v1773
    %v1790 = vadd.s32 %v1785, %v1787
    %vm1791 = vc.u32 %v1785, %v1787
    %v1792 = vadd.s32 %v1788, 1
    %v1793 = vsel %vm1791, %v1792, %v1788
    %v1794 = vadd.s32 %v1789, %v1793
    %v1795 = vadd.s32 %v1794, 536870912
    %v1796 = vshrl.u32 %v1795, 30
    %v1797 = vshll.u32 %v1796, 30
    %v1798 = vsub.s32 %v1794, %v1797
    %vm1799 = vcmp.lt.s32.totalorder %v1798, 0
    %v1800 = vsub.s32 0, %v1798
    %v1801 = vsel %vm1799, %v1800, %v1798
    %v1802 = vclz %v1801
    %v1803 = vsub.s32 %v1802, 2
    %vm1804 = vcmp.gt.s32.totalorder 0, %v1803
    %v1805 = vsel %vm1804, 0, %v1803
    %v1806 = vsub.s32 32, %v1805
    %v1807 = vshll.u32 %v1798, %v1805
    %v1808 = vshrl.u32 %v1790, %v1806
    %v1809 = vor.u32 %v1807, %v1808
    %v1810 = vsub.s32 4294967266, %v1805
    %v1811 = vadd.s32 %v1810, 127
    %v1812 = vshll.u32 %v1811, 23
    %v1813 = vor.u32 4788187, %v1812
    %v1814 = vand.u32 2147483647, %v1813
    %v1816 = vcvt.s32.f32 %v1809
    %v1817 = vmul.f32 %v1816, %v1814
    %v1818 = vxor.u32 %v1817, 2147483648
    %v1819 = vsel %vm1736, %v1818, %v1817
    %v1820 = vsub.s32 4, %v1796
    %v1821 = vsel %vm1736, %v1820, %v1796
    %v1822 = vsel %vm1735, %v567, %v1819
    %v1823 = vsel %vm1735, 0, %v1821
    %v1824 = vcosq.f32.pop %v1822
    %v1825 = vsinq.f32.pop %v1822
    %vm1826 = vweird.f32 %v567
    %v1827 = vadd.s32 %v1823, 3
    %v1828 = vand.u32 %v1827, 3
    %vm1829 = vcmp.lt.s32.totalorder %v1828, 2
    %vm1830 = vcmp.eq.s32.totalorder %v1828, 0
    %v1831 = vxor.u32 %v1825, 2147483648
    %v1832 = vsel %vm1830, %v1824, %v1831
    %vm1833 = vcmp.eq.s32.totalorder %v1828, 2
    %v1834 = vxor.u32 %v1824, 2147483648
    %v1835 = vsel %vm1833, %v1834, %v1825
    %v1836 = vsel %vm1829, %v1832, %v1835
    %v1837 = vsel %vm1826, nan, %v1836
    %v1838 = vand.u32 2147483647, %v572
    %vm1839 = vcmp.le.f32.partialorder %v1838, 0.7853982
    %vm1840 = vcmp.lt.s32.totalorder %v572, 0
    %v1841 = vand.u32 %v572, 2139095040
    %v1842 = vshrl.u32 %v1841, 23
    %v1843 = vsub.s32 %v1842, 127
    %v1844 = vand.u32 2147483647, %v572
    %v1845 = vand.u32 %v1844, 8388607
    %v1846 = vor.u32 %v1845, 8388608
    %v1847 = vsub.s32 0, %v1846
    %v1848 = vadd.s32 %v1843, 1
    %vm1849 = vcmp.gt.s32.totalorder %v1848, 0
    %v1850 = vsel %vm1849, %v1848, 0
    %v1851 = vshrl.u32 %v1850, 5
    %v1852 = vand.u32 %v1850, 31
    %v1853 = vsub.s32 32, %v1852
    %v1854 = vshrl.u32 683565275, %v1853
    %v1855 = vshll.u32 683565275, %v1852
    %v1856 = vshrl.u32 2475754826, %v1853
    %v1857 = vor.u32 %v1855, %v1856
    %v1858 = vshll.u32 2475754826, %v1852
    %v1859 = vshrl.u32 2131351028, %v1853
    %v1860 = vor.u32 %v1858, %v1859
    %v1861 = vshll.u32 2131351028, %v1852
    %v1862 = vshrl.u32 2102212464, %v1853
    %v1863 = vor.u32 %v1861, %v1862
    %v1864 = vshll.u32 2102212464, %v1852
    %v1865 = vshrl.u32 920167782, %v1853
    %v1866 = vor.u32 %v1864, %v1865
    %v1867 = vshll.u32 920167782, %v1852
    %v1868 = vshrl.u32 1326507024, %v1853
    %v1869 = vor.u32 %v1867, %v1868
    %vm1870 = vcmp.lt.s32.totalorder %v1851, 1
    %vm1871 = vcmp.lt.s32.totalorder %v1851, 2
    %vm1872 = vcmp.lt.s32.totalorder %v1851, 3
    %vm1873 = vcmp.lt.s32.totalorder %v1851, 4
    %v1874 = vsel %vm1870, %v1854, %v1857
    %v1875 = vsel %vm1873, %v1863, 2102212464
    %v1876 = vsel %vm1872, %v1860, %v1875
    %v1877 = vsel %vm1871, %v1874, %v1876
    %v1878 = vsel %vm1870, %v1857, %v1860
    %v1879 = vsel %vm1873, %v1866, 920167782
    %v1880 = vsel %vm1872, %v1863, %v1879
    %v1881 = vsel %vm1871, %v1878, %v1880
    %v1882 = vsel %vm1870, %v1860, %v1863
    %v1883 = vsel %vm1873, %v1869, 1326507024
    %v1884 = vsel %vm1872, %v1866, %v1883
    %v1885 = vsel %vm1871, %v1882, %v1884
    %v1886 = vshll.u32 %v1846, 8
    %v1887 = vmul.u32.u64.compose %v1886, %v1885
    %v1888 = vextract.low.u32 %v1887
    %v1889 = vextract.high.u32 %v1887
    %v1890 = vmul.u32.u64.compose %v1886, %v1881
    %v1891 = vextract.low.u32 %v1890
    %v1892 = vextract.high.u32 %v1890
    %v1893 = vmul.u32 %v1886, %v1877
    %v1894 = vadd.s32 %v1889, %v1891
    %vm1895 = vc.u32 %v1889, %v1891
    %v1896 = vadd.s32 %v1892, 1
    %v1897 = vsel %vm1895, %v1896, %v1892
    %v1898 = vadd.s32 %v1893, %v1897
    %v1899 = vadd.s32 %v1898, 536870912
    %v1900 = vshrl.u32 %v1899, 30
    %v1901 = vshll.u32 %v1900, 30
    %v1902 = vsub.s32 %v1898, %v1901
    %vm1903 = vcmp.lt.s32.totalorder %v1902, 0
    %v1904 = vsub.s32 0, %v1902
    %v1905 = vsel %vm1903, %v1904, %v1902
    %v1906 = vclz %v1905
    %v1907 = vsub.s32 %v1906, 2
    %vm1908 = vcmp.gt.s32.totalorder 0, %v1907
    %v1909 = vsel %vm1908, 0, %v1907
    %v1910 = vsub.s32 32, %v1909
    %v1911 = vshll.u32 %v1902, %v1909
    %v1912 = vshrl.u32 %v1894, %v1910
    %v1913 = vor.u32 %v1911, %v1912
    %v1914 = vsub.s32 4294967266, %v1909
    %v1915 = vadd.s32 %v1914, 127
    %v1916 = vshll.u32 %v1915, 23
    %v1917 = vor.u32 4788187, %v1916
    %v1918 = vand.u32 2147483647, %v1917
    %v1920 = vcvt.s32.f32 %v1913
    %v1921 = vmul.f32 %v1920, %v1918
    %v1922 = vxor.u32 %v1921, 2147483648
    %v1923 = vsel %vm1840, %v1922, %v1921
    %v1924 = vsub.s32 4, %v1900
    %v1925 = vsel %vm1840, %v1924, %v1900
    %v1926 = vsel %vm1839, %v572, %v1923
    %v1927 = vsel %vm1839, 0, %v1925
    %v1928 = vcosq.f32.pop %v1926
    %v1929 = vsinq.f32.pop %v1926
    %vm1930 = vweird.f32 %v572
    %v1931 = vadd.s32 %v1927, 3
    %v1932 = vand.u32 %v1931, 3
    %vm1933 = vcmp.lt.s32.totalorder %v1932, 2
    %vm1934 = vcmp.eq.s32.totalorder %v1932, 0
    %v1935 = vxor.u32 %v1929, 2147483648
    %v1936 = vsel %vm1934, %v1928, %v1935
    %vm1937 = vcmp.eq.s32.totalorder %v1932, 2
    %v1938 = vxor.u32 %v1928, 2147483648
    %v1939 = vsel %vm1937, %v1938, %v1929
    %v1940 = vsel %vm1933, %v1936, %v1939
    %v1941 = vsel %vm1930, nan, %v1940
    %v1942 = vand.u32 2147483647, %v577
    %vm1943 = vcmp.le.f32.partialorder %v1942, 0.7853982
    %vm1944 = vcmp.lt.s32.totalorder %v577, 0
    %v1945 = vand.u32 %v577, 2139095040
    %v1946 = vshrl.u32 %v1945, 23
    %v1947 = vsub.s32 %v1946, 127
    %v1948 = vand.u32 2147483647, %v577
    %v1949 = vand.u32 %v1948, 8388607
    %v1950 = vor.u32 %v1949, 8388608
    %v1951 = vsub.s32 0, %v1950
    %v1952 = vadd.s32 %v1947, 1
    %vm1953 = vcmp.gt.s32.totalorder %v1952, 0
    %v1954 = vsel %vm1953, %v1952, 0
    %v1955 = vshrl.u32 %v1954, 5
    %v1956 = vand.u32 %v1954, 31
    %v1957 = vsub.s32 32, %v1956
    %v1958 = vshrl.u32 683565275, %v1957
    %v1959 = vshll.u32 683565275, %v1956
    %v1960 = vshrl.u32 2475754826, %v1957
    %v1961 = vor.u32 %v1959, %v1960
    %v1962 = vshll.u32 2475754826, %v1956
    %v1963 = vshrl.u32 2131351028, %v1957
    %v1964 = vor.u32 %v1962, %v1963
    %v1965 = vshll.u32 2131351028, %v1956
    %v1966 = vshrl.u32 2102212464, %v1957
    %v1967 = vor.u32 %v1965, %v1966
    %v1968 = vshll.u32 2102212464, %v1956
    %v1969 = vshrl.u32 920167782, %v1957
    %v1970 = vor.u32 %v1968, %v1969
    %v1971 = vshll.u32 920167782, %v1956
    %v1972 = vshrl.u32 1326507024, %v1957
    %v1973 = vor.u32 %v1971, %v1972
    %vm1974 = vcmp.lt.s32.totalorder %v1955, 1
    %vm1975 = vcmp.lt.s32.totalorder %v1955, 2
    %vm1976 = vcmp.lt.s32.totalorder %v1955, 3
    %vm1977 = vcmp.lt.s32.totalorder %v1955, 4
    %v1978 = vsel %vm1974, %v1958, %v1961
    %v1979 = vsel %vm1977, %v1967, 2102212464
    %v1980 = vsel %vm1976, %v1964, %v1979
    %v1981 = vsel %vm1975, %v1978, %v1980
    %v1982 = vsel %vm1974, %v1961, %v1964
    %v1983 = vsel %vm1977, %v1970, 920167782
    %v1984 = vsel %vm1976, %v1967, %v1983
    %v1985 = vsel %vm1975, %v1982, %v1984
    %v1986 = vsel %vm1974, %v1964, %v1967
    %v1987 = vsel %vm1977, %v1973, 1326507024
    %v1988 = vsel %vm1976, %v1970, %v1987
    %v1989 = vsel %vm1975, %v1986, %v1988
    %v1990 = vshll.u32 %v1950, 8
    %v1991 = vmul.u32.u64.compose %v1990, %v1989
    %v1992 = vextract.low.u32 %v1991
    %v1993 = vextract.high.u32 %v1991
    %v1994 = vmul.u32.u64.compose %v1990, %v1985
    %v1995 = vextract.low.u32 %v1994
    %v1996 = vextract.high.u32 %v1994
    %v1997 = vmul.u32 %v1990, %v1981
    %v1998 = vadd.s32 %v1993, %v1995
    %vm1999 = vc.u32 %v1993, %v1995
    %v2000 = vadd.s32 %v1996, 1
    %v2001 = vsel %vm1999, %v2000, %v1996
    %v2002 = vadd.s32 %v1997, %v2001
    %v2003 = vadd.s32 %v2002, 536870912
    %v2004 = vshrl.u32 %v2003, 30
    %v2005 = vshll.u32 %v2004, 30
    %v2006 = vsub.s32 %v2002, %v2005
    %vm2007 = vcmp.lt.s32.totalorder %v2006, 0
    %v2008 = vsub.s32 0, %v2006
    %v2009 = vsel %vm2007, %v2008, %v2006
    %v2010 = vclz %v2009
    %v2011 = vsub.s32 %v2010, 2
    %vm2012 = vcmp.gt.s32.totalorder 0, %v2011
    %v2013 = vsel %vm2012, 0, %v2011
    %v2014 = vsub.s32 32, %v2013
    %v2015 = vshll.u32 %v2006, %v2013
    %v2016 = vshrl.u32 %v1998, %v2014
    %v2017 = vor.u32 %v2015, %v2016
    %v2018 = vsub.s32 4294967266, %v2013
    %v2019 = vadd.s32 %v2018, 127
    %v2020 = vshll.u32 %v2019, 23
    %v2021 = vor.u32 4788187, %v2020
    %v2022 = vand.u32 2147483647, %v2021
    %v2024 = vcvt.s32.f32 %v2017
    %v2025 = vmul.f32 %v2024, %v2022
    %v2026 = vxor.u32 %v2025, 2147483648
    %v2027 = vsel %vm1944, %v2026, %v2025
    %v2028 = vsub.s32 4, %v2004
    %v2029 = vsel %vm1944, %v2028, %v2004
    %v2030 = vsel %vm1943, %v577, %v2027
    %v2031 = vsel %vm1943, 0, %v2029
    %v2032 = vcosq.f32.pop %v2030
    %v2033 = vsinq.f32.pop %v2030
    %vm2034 = vweird.f32 %v577
    %v2035 = vadd.s32 %v2031, 3
    %v2036 = vand.u32 %v2035, 3
    %vm2037 = vcmp.lt.s32.totalorder %v2036, 2
    %vm2038 = vcmp.eq.s32.totalorder %v2036, 0
    %v2039 = vxor.u32 %v2033, 2147483648
    %v2040 = vsel %vm2038, %v2032, %v2039
    %vm2041 = vcmp.eq.s32.totalorder %v2036, 2
    %v2042 = vxor.u32 %v2032, 2147483648
    %v2043 = vsel %vm2041, %v2042, %v2033
    %v2044 = vsel %vm2037, %v2040, %v2043
    %v2045 = vsel %vm2034, nan, %v2044
    %v2046 = vand.u32 2147483647, %v582
    %vm2047 = vcmp.le.f32.partialorder %v2046, 0.7853982
    %vm2048 = vcmp.lt.s32.totalorder %v582, 0
    %v2049 = vand.u32 %v582, 2139095040
    %v2050 = vshrl.u32 %v2049, 23
    %v2051 = vsub.s32 %v2050, 127
    %v2052 = vand.u32 2147483647, %v582
    %v2053 = vand.u32 %v2052, 8388607
    %v2054 = vor.u32 %v2053, 8388608
    %v2055 = vsub.s32 0, %v2054
    %v2056 = vadd.s32 %v2051, 1
    %vm2057 = vcmp.gt.s32.totalorder %v2056, 0
    %v2058 = vsel %vm2057, %v2056, 0
    %v2059 = vshrl.u32 %v2058, 5
    %v2060 = vand.u32 %v2058, 31
    %v2061 = vsub.s32 32, %v2060
    %v2062 = vshrl.u32 683565275, %v2061
    %v2063 = vshll.u32 683565275, %v2060
    %v2064 = vshrl.u32 2475754826, %v2061
    %v2065 = vor.u32 %v2063, %v2064
    %v2066 = vshll.u32 2475754826, %v2060
    %v2067 = vshrl.u32 2131351028, %v2061
    %v2068 = vor.u32 %v2066, %v2067
    %v2069 = vshll.u32 2131351028, %v2060
    %v2070 = vshrl.u32 2102212464, %v2061
    %v2071 = vor.u32 %v2069, %v2070
    %v2072 = vshll.u32 2102212464, %v2060
    %v2073 = vshrl.u32 920167782, %v2061
    %v2074 = vor.u32 %v2072, %v2073
    %v2075 = vshll.u32 920167782, %v2060
    %v2076 = vshrl.u32 1326507024, %v2061
    %v2077 = vor.u32 %v2075, %v2076
    %vm2078 = vcmp.lt.s32.totalorder %v2059, 1
    %vm2079 = vcmp.lt.s32.totalorder %v2059, 2
    %vm2080 = vcmp.lt.s32.totalorder %v2059, 3
    %vm2081 = vcmp.lt.s32.totalorder %v2059, 4
    %v2082 = vsel %vm2078, %v2062, %v2065
    %v2083 = vsel %vm2081, %v2071, 2102212464
    %v2084 = vsel %vm2080, %v2068, %v2083
    %v2085 = vsel %vm2079, %v2082, %v2084
    %v2086 = vsel %vm2078, %v2065, %v2068
    %v2087 = vsel %vm2081, %v2074, 920167782
    %v2088 = vsel %vm2080, %v2071, %v2087
    %v2089 = vsel %vm2079, %v2086, %v2088
    %v2090 = vsel %vm2078, %v2068, %v2071
    %v2091 = vsel %vm2081, %v2077, 1326507024
    %v2092 = vsel %vm2080, %v2074, %v2091
    %v2093 = vsel %vm2079, %v2090, %v2092
    %v2094 = vshll.u32 %v2054, 8
    %v2095 = vmul.u32.u64.compose %v2094, %v2093
    %v2096 = vextract.low.u32 %v2095
    %v2097 = vextract.high.u32 %v2095
    %v2098 = vmul.u32.u64.compose %v2094, %v2089
    %v2099 = vextract.low.u32 %v2098
    %v2100 = vextract.high.u32 %v2098
    %v2101 = vmul.u32 %v2094, %v2085
    %v2102 = vadd.s32 %v2097, %v2099
    %vm2103 = vc.u32 %v2097, %v2099
    %v2104 = vadd.s32 %v2100, 1
    %v2105 = vsel %vm2103, %v2104, %v2100
    %v2106 = vadd.s32 %v2101, %v2105
    %v2107 = vadd.s32 %v2106, 536870912
    %v2108 = vshrl.u32 %v2107, 30
    %v2109 = vshll.u32 %v2108, 30
    %v2110 = vsub.s32 %v2106, %v2109
    %vm2111 = vcmp.lt.s32.totalorder %v2110, 0
    %v2112 = vsub.s32 0, %v2110
    %v2113 = vsel %vm2111, %v2112, %v2110
    %v2114 = vclz %v2113
    %v2115 = vsub.s32 %v2114, 2
    %vm2116 = vcmp.gt.s32.totalorder 0, %v2115
    %v2117 = vsel %vm2116, 0, %v2115
    %v2118 = vsub.s32 32, %v2117
    %v2119 = vshll.u32 %v2110, %v2117
    %v2120 = vshrl.u32 %v2102, %v2118
    %v2121 = vor.u32 %v2119, %v2120
    %v2122 = vsub.s32 4294967266, %v2117
    %v2123 = vadd.s32 %v2122, 127
    %v2124 = vshll.u32 %v2123, 23
    %v2125 = vor.u32 4788187, %v2124
    %v2126 = vand.u32 2147483647, %v2125
    %v2128 = vcvt.s32.f32 %v2121
    %v2129 = vmul.f32 %v2128, %v2126
    %v2130 = vxor.u32 %v2129, 2147483648
    %v2131 = vsel %vm2048, %v2130, %v2129
    %v2132 = vsub.s32 4, %v2108
    %v2133 = vsel %vm2048, %v2132, %v2108
    %v2134 = vsel %vm2047, %v582, %v2131
    %v2135 = vsel %vm2047, 0, %v2133
    %v2136 = vcosq.f32.pop %v2134
    %v2137 = vsinq.f32.pop %v2134
    %vm2138 = vweird.f32 %v582
    %v2139 = vadd.s32 %v2135, 3
    %v2140 = vand.u32 %v2139, 3
    %vm2141 = vcmp.lt.s32.totalorder %v2140, 2
    %vm2142 = vcmp.eq.s32.totalorder %v2140, 0
    %v2143 = vxor.u32 %v2137, 2147483648
    %v2144 = vsel %vm2142, %v2136, %v2143
    %vm2145 = vcmp.eq.s32.totalorder %v2140, 2
    %v2146 = vxor.u32 %v2136, 2147483648
    %v2147 = vsel %vm2145, %v2146, %v2137
    %v2148 = vsel %vm2141, %v2144, %v2147
    %v2149 = vsel %vm2138, nan, %v2148
    %v2150 = vand.u32 2147483647, %v587
    %vm2151 = vcmp.le.f32.partialorder %v2150, 0.7853982
    %vm2152 = vcmp.lt.s32.totalorder %v587, 0
    %v2153 = vand.u32 %v587, 2139095040
    %v2154 = vshrl.u32 %v2153, 23
    %v2155 = vsub.s32 %v2154, 127
    %v2156 = vand.u32 2147483647, %v587
    %v2157 = vand.u32 %v2156, 8388607
    %v2158 = vor.u32 %v2157, 8388608
    %v2159 = vsub.s32 0, %v2158
    %v2160 = vadd.s32 %v2155, 1
    %vm2161 = vcmp.gt.s32.totalorder %v2160, 0
    %v2162 = vsel %vm2161, %v2160, 0
    %v2163 = vshrl.u32 %v2162, 5
    %v2164 = vand.u32 %v2162, 31
    %v2165 = vsub.s32 32, %v2164
    %v2166 = vshrl.u32 683565275, %v2165
    %v2167 = vshll.u32 683565275, %v2164
    %v2168 = vshrl.u32 2475754826, %v2165
    %v2169 = vor.u32 %v2167, %v2168
    %v2170 = vshll.u32 2475754826, %v2164
    %v2171 = vshrl.u32 2131351028, %v2165
    %v2172 = vor.u32 %v2170, %v2171
    %v2173 = vshll.u32 2131351028, %v2164
    %v2174 = vshrl.u32 2102212464, %v2165
    %v2175 = vor.u32 %v2173, %v2174
    %v2176 = vshll.u32 2102212464, %v2164
    %v2177 = vshrl.u32 920167782, %v2165
    %v2178 = vor.u32 %v2176, %v2177
    %v2179 = vshll.u32 920167782, %v2164
    %v2180 = vshrl.u32 1326507024, %v2165
    %v2181 = vor.u32 %v2179, %v2180
    %vm2182 = vcmp.lt.s32.totalorder %v2163, 1
    %vm2183 = vcmp.lt.s32.totalorder %v2163, 2
    %vm2184 = vcmp.lt.s32.totalorder %v2163, 3
    %vm2185 = vcmp.lt.s32.totalorder %v2163, 4
    %v2186 = vsel %vm2182, %v2166, %v2169
    %v2187 = vsel %vm2185, %v2175, 2102212464
    %v2188 = vsel %vm2184, %v2172, %v2187
    %v2189 = vsel %vm2183, %v2186, %v2188
    %v2190 = vsel %vm2182, %v2169, %v2172
    %v2191 = vsel %vm2185, %v2178, 920167782
    %v2192 = vsel %vm2184, %v2175, %v2191
    %v2193 = vsel %vm2183, %v2190, %v2192
    %v2194 = vsel %vm2182, %v2172, %v2175
    %v2195 = vsel %vm2185, %v2181, 1326507024
    %v2196 = vsel %vm2184, %v2178, %v2195
    %v2197 = vsel %vm2183, %v2194, %v2196
    %v2198 = vshll.u32 %v2158, 8
    %v2199 = vmul.u32.u64.compose %v2198, %v2197
    %v2200 = vextract.low.u32 %v2199
    %v2201 = vextract.high.u32 %v2199
    %v2202 = vmul.u32.u64.compose %v2198, %v2193
    %v2203 = vextract.low.u32 %v2202
    %v2204 = vextract.high.u32 %v2202
    %v2205 = vmul.u32 %v2198, %v2189
    %v2206 = vadd.s32 %v2201, %v2203
    %vm2207 = vc.u32 %v2201, %v2203
    %v2208 = vadd.s32 %v2204, 1
    %v2209 = vsel %vm2207, %v2208, %v2204
    %v2210 = vadd.s32 %v2205, %v2209
    %v2211 = vadd.s32 %v2210, 536870912
    %v2212 = vshrl.u32 %v2211, 30
    %v2213 = vshll.u32 %v2212, 30
    %v2214 = vsub.s32 %v2210, %v2213
    %vm2215 = vcmp.lt.s32.totalorder %v2214, 0
    %v2216 = vsub.s32 0, %v2214
    %v2217 = vsel %vm2215, %v2216, %v2214
    %v2218 = vclz %v2217
    %v2219 = vsub.s32 %v2218, 2
    %vm2220 = vcmp.gt.s32.totalorder 0, %v2219
    %v2221 = vsel %vm2220, 0, %v2219
    %v2222 = vsub.s32 32, %v2221
    %v2223 = vshll.u32 %v2214, %v2221
    %v2224 = vshrl.u32 %v2206, %v2222
    %v2225 = vor.u32 %v2223, %v2224
    %v2226 = vsub.s32 4294967266, %v2221
    %v2227 = vadd.s32 %v2226, 127
    %v2228 = vshll.u32 %v2227, 23
    %v2229 = vor.u32 4788187, %v2228
    %v2230 = vand.u32 2147483647, %v2229
    %v2232 = vcvt.s32.f32 %v2225
    %v2233 = vmul.f32 %v2232, %v2230
    %v2234 = vxor.u32 %v2233, 2147483648
    %v2235 = vsel %vm2152, %v2234, %v2233
    %v2236 = vsub.s32 4, %v2212
    %v2237 = vsel %vm2152, %v2236, %v2212
    %v2238 = vsel %vm2151, %v587, %v2235
    %v2239 = vsel %vm2151, 0, %v2237
    %v2240 = vcosq.f32.pop %v2238
    %v2241 = vsinq.f32.pop %v2238
    %vm2242 = vweird.f32 %v587
    %v2243 = vadd.s32 %v2239, 3
    %v2244 = vand.u32 %v2243, 3
    %vm2245 = vcmp.lt.s32.totalorder %v2244, 2
    %vm2246 = vcmp.eq.s32.totalorder %v2244, 0
    %v2247 = vxor.u32 %v2241, 2147483648
    %v2248 = vsel %vm2246, %v2240, %v2247
    %vm2249 = vcmp.eq.s32.totalorder %v2244, 2
    %v2250 = vxor.u32 %v2240, 2147483648
    %v2251 = vsel %vm2249, %v2250, %v2241
    %v2252 = vsel %vm2245, %v2248, %v2251
    %v2253 = vsel %vm2242, nan, %v2252
    %2270 = vrot.lane.b32.xlu0 %v109, 64
    %v2271 = vpop.permute.xlu0 %2270
    %2272 = vrot.lane.b32.xlu0 %v110, 64
    %v2273 = vpop.permute.xlu0 %2272
    %2274 = vrot.lane.b32.xlu0 %v111, 64
    %v2275 = vpop.permute.xlu0 %2274
    %2276 = vrot.lane.b32.xlu0 %v112, 64
    %v2277 = vpop.permute.xlu0 %2276
    %2278 = vrot.lane.b32.xlu0 %v113, 64
    %v2279 = vpop.permute.xlu0 %2278
    %2280 = vrot.lane.b32.xlu0 %v114, 64
    %v2281 = vpop.permute.xlu0 %2280
    %2282 = vrot.lane.b32.xlu0 %v115, 64
    %v2283 = vpop.permute.xlu0 %2282
    %2284 = vrot.lane.b32.xlu0 %v116, 64
    %v2285 = vpop.permute.xlu0 %2284
    %2286 = vrot.lane.b32.xlu0 %v117, 64
    %v2287 = vpop.permute.xlu0 %2286
    %2288 = vrot.lane.b32.xlu0 %v118, 64
    %v2289 = vpop.permute.xlu0 %2288
    %2290 = vrot.lane.b32.xlu0 %v119, 64
    %v2291 = vpop.permute.xlu0 %2290
    %2292 = vrot.lane.b32.xlu0 %v120, 64
    %v2293 = vpop.permute.xlu0 %2292
    %2294 = vrot.lane.b32.xlu0 %v121, 64
    %v2295 = vpop.permute.xlu0 %2294
    %2296 = vrot.lane.b32.xlu0 %v122, 64
    %v2297 = vpop.permute.xlu0 %2296
    %2298 = vrot.lane.b32.xlu0 %v123, 64
    %v2299 = vpop.permute.xlu0 %2298
    %2300 = vrot.lane.b32.xlu0 %v124, 64
    %v2301 = vpop.permute.xlu0 %2300
    %vm2318 = vcmask 523264
    %v2319 = vsel %vm2318, %v693, %v2271
    %v2320 = vsel %vm2318, %v797, %v2273
    %v2321 = vsel %vm2318, %v901, %v2275
    %v2322 = vsel %vm2318, %v1005, %v2277
    %v2323 = vsel %vm2318, %v1109, %v2279
    %v2324 = vsel %vm2318, %v1213, %v2281
    %v2325 = vsel %vm2318, %v1317, %v2283
    %v2326 = vsel %vm2318, %v1421, %v2285
    %v2327 = vsel %vm2318, %v1525, %v2287
    %v2328 = vsel %vm2318, %v1629, %v2289
    %v2329 = vsel %vm2318, %v1733, %v2291
    %v2330 = vsel %vm2318, %v1837, %v2293
    %v2331 = vsel %vm2318, %v1941, %v2295
    %v2332 = vsel %vm2318, %v2045, %v2297
    %v2333 = vsel %vm2318, %v2149, %v2299
    %v2334 = vsel %vm2318, %v2253, %v2301
    %v2335 = vpack.c.bf16 %v2320, %v2319
    %v2336 = vpack.c.bf16 %v2322, %v2321
    %v2337 = vpack.c.bf16 %v2324, %v2323
    %v2338 = vpack.c.bf16 %v2326, %v2325
    %v2339 = vpack.c.bf16 %v2328, %v2327
    %v2340 = vpack.c.bf16 %v2330, %v2329
    %v2341 = vpack.c.bf16 %v2332, %v2331
    %v2342 = vpack.c.bf16 %v2334, %v2333
    %v2343 = vunpack.c.l.bf16 %v2335
    %v2344 = vunpack.c.h.bf16 %v2335
    %v2345 = vunpack.c.l.bf16 %v2336
    %v2346 = vunpack.c.h.bf16 %v2336
    %v2347 = vunpack.c.l.bf16 %v2337
    %v2348 = vunpack.c.h.bf16 %v2337
    %v2349 = vunpack.c.l.bf16 %v2338
    %v2350 = vunpack.c.h.bf16 %v2338
    %v2351 = vunpack.c.l.bf16 %v2339
    %v2352 = vunpack.c.h.bf16 %v2339
    %v2353 = vunpack.c.l.bf16 %v2340
    %v2354 = vunpack.c.h.bf16 %v2340
    %v2355 = vunpack.c.l.bf16 %v2341
    %v2356 = vunpack.c.h.bf16 %v2341
    %v2357 = vunpack.c.l.bf16 %v2342
    %v2358 = vunpack.c.h.bf16 %v2342
    %v2359 = vsub.f32 %v2319, %v2343
    %v2360 = vsub.f32 %v2320, %v2344
    %v2361 = vsub.f32 %v2321, %v2345
    %v2362 = vsub.f32 %v2322, %v2346
    %v2363 = vsub.f32 %v2323, %v2347
    %v2364 = vsub.f32 %v2324, %v2348
    %v2365 = vsub.f32 %v2325, %v2349
    %v2366 = vsub.f32 %v2326, %v2350
    %v2367 = vsub.f32 %v2327, %v2351
    %v2368 = vsub.f32 %v2328, %v2352
    %v2369 = vsub.f32 %v2329, %v2353
    %v2370 = vsub.f32 %v2330, %v2354
    %v2371 = vsub.f32 %v2331, %v2355
    %v2372 = vsub.f32 %v2332, %v2356
    %v2373 = vsub.f32 %v2333, %v2357
    %v2374 = vsub.f32 %v2334, %v2358
    %v2375 = vld [vmem:[#allocation2] sm:$0xff]
    %v2376 = vld [vmem:[#allocation2 + $0x8] sm:$0xff]
    %v2377 = vld [vmem:[#allocation2 + $0x10] sm:$0xff]
    %v2378 = vld [vmem:[#allocation2 + $0x18] sm:$0xff]
    %v2379 = vld [vmem:[#allocation2 + $0x20] sm:$0xff]
    %v2380 = vld [vmem:[#allocation2 + $0x28] sm:$0xff]
    %v2381 = vld [vmem:[#allocation2 + $0x30] sm:$0xff]
    %v2382 = vld [vmem:[#allocation2 + $0x38] sm:$0xff]
    %v2383 = vld [vmem:[#allocation2 + $0x40] sm:$0xf]
    %v2384 = vld [vmem:[#allocation4] sm:$0xff]
    %v2385 = vld [vmem:[#allocation4 + $0x8] sm:$0xff]
    %v2386 = vld [vmem:[#allocation4 + $0x10] sm:$0xff]
    %v2387 = vld [vmem:[#allocation4 + $0x18] sm:$0xff]
    %v2388 = vld [vmem:[#allocation4 + $0x20] sm:$0xff]
    %v2389 = vld [vmem:[#allocation4 + $0x28] sm:$0xff]
    %v2390 = vld [vmem:[#allocation4 + $0x30] sm:$0xff]
    %v2391 = vld [vmem:[#allocation4 + $0x38] sm:$0xff]
    %v2392 = vld [vmem:[#allocation4 + $0x40] sm:$0xf]
    %vm2393 = vcmask 556032
    %v2395 = vsel %vm2393, %v2343, 0
    %v2398 = vsel %vm2393, %v2344, 0
    %v2401 = vsel %vm2393, %v2345, 0
    %v2404 = vsel %vm2393, %v2346, 0
    %v2407 = vsel %vm2393, %v2347, 0
    %v2410 = vsel %vm2393, %v2348, 0
    %v2413 = vsel %vm2393, %v2349, 0
    %v2416 = vsel %vm2393, %v2350, 0
    %v2419 = vsel %vm2393, %v2351, 0
    %v2422 = vsel %vm2393, %v2352, 0
    %v2425 = vsel %vm2393, %v2353, 0
    %v2428 = vsel %vm2393, %v2354, 0
    %v2431 = vsel %vm2393, %v2355, 0
    %v2434 = vsel %vm2393, %v2356, 0
    %v2437 = vsel %vm2393, %v2357, 0
    %v2440 = vsel %vm2393, %v2358, 0
    %v2443 = vsel %vm441, %v2392, 0
    %2445 = vmatprep.subr.mxu0 0.0
    %2446 = vmatpush1.msra.mxu0 %v2384
    %2447 = vmatprep.subr.mxu0 0.0
    %2448 = vmatpush1.msra.mxu0 %v2385
    %2449 = vmatprep.subr.mxu0 0.0
    %2450 = vmatpush1.msra.mxu0 %v2386
    %2451 = vmatprep.subr.mxu0 0.0
    %2452 = vmatpush1.msra.mxu0 %v2387
    %2453 = vmatprep.subr.mxu0 0.0
    %2454 = vmatpush1.msra.mxu0 %v2388
    %2455 = vmatprep.subr.mxu0 0.0
    %2456 = vmatpush1.msra.mxu0 %v2389
    %2457 = vmatprep.subr.mxu0 0.0
    %2458 = vmatpush1.msra.mxu0 %v2390
    %2459 = vmatprep.subr.mxu0 0.0
    %2460 = vmatpush1.msra.mxu0 %v2391
    %2461 = vmatprep.subr.mxu0 0.0
    %2462 = vmatpush1.msra.mxu0 %v2443
    %2463 = vmatprep.subr.mxu0 0.0
    %2464 = vmatpush1.msra.mxu0 0.0
    %2465 = vmatprep.subr.mxu0 0.0
    %2466 = vmatpush1.msra.mxu0 0.0
    %2467 = vmatprep.subr.mxu0 0.0
    %2468 = vmatpush1.msra.mxu0 0.0
    %2469 = vmatprep.subr.mxu0 0.0
    %2470 = vmatpush1.msra.mxu0 0.0
    %2471 = vmatprep.subr.mxu0 0.0
    %2472 = vmatpush1.msra.mxu0 0.0
    %2473 = vmatprep.subr.mxu0 0.0
    %2474 = vmatpush1.msra.mxu0 0.0
    %2475 = vmatprep.subr.mxu0 0.0
    %2476 = vmatpush1.msra.mxu0 0.0
    %2477 = vmatprep.subr.mxu0 0.0
    %2478 = vmatpush1.msra.mxu0 0.0
    %2479 = vmatprep.subr.mxu0 0.0
    %2480 = vmatpush1.msra.mxu0 0.0
    %2481 = vmatprep.subr.mxu0 0.0
    %2482 = vmatpush1.msra.mxu0 0.0
    %2483 = vmatprep.subr.mxu0 0.0
    %2484 = vmatpush1.msra.mxu0 0.0
    %2485 = vmatprep.subr.mxu0 0.0
    %2486 = vmatpush1.msra.mxu0 0.0
    %2487 = vmatprep.subr.mxu0 0.0
    %2488 = vmatpush1.msra.mxu0 0.0
    %2489 = vmatprep.subr.mxu0 0.0
    %2490 = vmatpush1.msra.mxu0 0.0
    %2491 = vmatprep.subr.mxu0 0.0
    %2492 = vmatpush1.msra.mxu0 0.0
    %2493 = vmatprep.subr.mxu0 0.0
    %2494 = vmatpush1.msra.mxu0 0.0
    %2495 = vmatprep.subr.mxu0 0.0
    %2496 = vmatpush1.msra.mxu0 0.0
    %2497 = vmatprep.subr.mxu0 0.0
    %2498 = vmatpush1.msra.mxu0 0.0
    %2499 = vmatprep.subr.mxu0 0.0
    %2500 = vmatpush1.msra.mxu0 0.0
    %2501 = vmatprep.subr.mxu0 0.0
    %2502 = vmatpush1.msra.mxu0 0.0
    %2503 = vmatprep.subr.mxu0 0.0
    %2504 = vmatpush1.msra.mxu0 0.0
    %2505 = vmatprep.subr.mxu0 0.0
    %2506 = vmatpush1.msra.mxu0 0.0
    %2507 = vmatprep.subr.mxu0 0.0
    %2508 = vmatpush1.msra.mxu0 0.0
    %2509 = vmatprep.mubr.f32.mxu0 0.0
    %2510 = vmatmul.mubr.f32.gmra.mrb[0].mxu0 %v2395
    %v2511 = vpop.f32.mrb[0].mxu0
    %v2512 = vadd.f32 0.0, %v2511
    %v2513 = vpop.f32.mrb[0].mxu0
    %2514 = vmatprep.mubr.f32.mxu0 0.0
    %2515 = vmatmul.mubr.f32.gmra.mrb[0].mxu0 %v2398
    %v2516 = vpop.f32.mrb[0].mxu0
    %v2517 = vadd.f32 0.0, %v2516
    %v2518 = vpop.f32.mrb[0].mxu0
    %2519 = vmatprep.mubr.f32.mxu0 0.0
    %2520 = vmatmul.mubr.f32.gmra.mrb[0].mxu0 %v2401
    %v2521 = vpop.f32.mrb[0].mxu0
    %v2522 = vadd.f32 0.0, %v2521
    %v2523 = vpop.f32.mrb[0].mxu0
    %2524 = vmatprep.mubr.f32.mxu0 0.0
    %2525 = vmatmul.mubr.f32.gmra.mrb[0].mxu0 %v2404
    %v2526 = vpop.f32.mrb[0].mxu0
    %v2527 = vadd.f32 0.0, %v2526
    %v2528 = vpop.f32.mrb[0].mxu0
    %2529 = vmatprep.mubr.f32.mxu0 0.0
    %2530 = vmatmul.mubr.f32.gmra.mrb[0].mxu0 %v2407
    %v2531 = vpop.f32.mrb[0].mxu0
    %v2532 = vadd.f32 0.0, %v2531
    %v2533 = vpop.f32.mrb[0].mxu0
    %2534 = vmatprep.mubr.f32.mxu0 0.0
    %2535 = vmatmul.mubr.f32.gmra.mrb[0].mxu0 %v2410
    %v2536 = vpop.f32.mrb[0].mxu0
    %v2537 = vadd.f32 0.0, %v2536
    %v2538 = vpop.f32.mrb[0].mxu0
    %2539 = vmatprep.mubr.f32.mxu0 0.0
    %2540 = vmatmul.mubr.f32.gmra.mrb[0].mxu0 %v2413
    %v2541 = vpop.f32.mrb[0].mxu0
    %v2542 = vadd.f32 0.0, %v2541
    %v2543 = vpop.f32.mrb[0].mxu0
    %2544 = vmatprep.mubr.f32.mxu0 0.0
    %2545 = vmatmul.mubr.f32.gmra.mrb[0].mxu0 %v2416
    %v2546 = vpop.f32.mrb[0].mxu0
    %v2547 = vadd.f32 0.0, %v2546
    %v2548 = vpop.f32.mrb[0].mxu0
    %2549 = vmatprep.mubr.f32.mxu0 0.0
    %2550 = vmatmul.mubr.f32.gmra.mrb[0].mxu0 %v2419
    %v2551 = vpop.f32.mrb[0].mxu0
    %v2552 = vadd.f32 0.0, %v2551
    %v2553 = vpop.f32.mrb[0].mxu0
    %2554 = vmatprep.mubr.f32.mxu0 0.0
    %2555 = vmatmul.mubr.f32.gmra.mrb[0].mxu0 %v2422
    %v2556 = vpop.f32.mrb[0].mxu0
    %v2557 = vadd.f32 0.0, %v2556
    %v2558 = vpop.f32.mrb[0].mxu0
    %2559 = vmatprep.mubr.f32.mxu0 0.0
    %2560 = vmatmul.mubr.f32.gmra.mrb[0].mxu0 %v2425
    %v2561 = vpop.f32.mrb[0].mxu0
    %v2562 = vadd.f32 0.0, %v2561
    %v2563 = vpop.f32.mrb[0].mxu0
    %2564 = vmatprep.mubr.f32.mxu0 0.0
    %2565 = vmatmul.mubr.f32.gmra.mrb[0].mxu0 %v2428
    %v2566 = vpop.f32.mrb[0].mxu0
    %v2567 = vadd.f32 0.0, %v2566
    %v2568 = vpop.f32.mrb[0].mxu0
    %2569 = vmatprep.mubr.f32.mxu0 0.0
    %2570 = vmatmul.mubr.f32.gmra.mrb[0].mxu0 %v2431
    %v2571 = vpop.f32.mrb[0].mxu0
    %v2572 = vadd.f32 0.0, %v2571
    %v2573 = vpop.f32.mrb[0].mxu0
    %2574 = vmatprep.mubr.f32.mxu0 0.0
    %2575 = vmatmul.mubr.f32.gmra.mrb[0].mxu0 %v2434
    %v2576 = vpop.f32.mrb[0].mxu0
    %v2577 = vadd.f32 0.0, %v2576
    %v2578 = vpop.f32.mrb[0].mxu0
    %2579 = vmatprep.mubr.f32.mxu0 0.0
    %2580 = vmatmul.mubr.f32.gmra.mrb[0].mxu0 %v2437
    %v2581 = vpop.f32.mrb[0].mxu0
    %v2582 = vadd.f32 0.0, %v2581
    %v2583 = vpop.f32.mrb[0].mxu0
    %2584 = vmatprep.mubr.f32.mxu0 0.0
    %2585 = vmatmul.mubr.f32.gmra.mrb[0].mxu0 %v2440
    %v2586 = vpop.f32.mrb[0].mxu0
    %v2587 = vadd.f32 0.0, %v2586
    %v2588 = vpop.f32.mrb[0].mxu0
    %2589 = vdwg.mxu0
    %v2591 = vsel %vm441, %v2383, 0
    %2593 = vmatprep.subr.mxu0 0.0
    %2594 = vmatpush1.msra.mxu0 %v2375
    %2595 = vmatprep.subr.mxu0 0.0
    %2596 = vmatpush1.msra.mxu0 %v2376
    %2597 = vmatprep.subr.mxu0 0.0
    %2598 = vmatpush1.msra.mxu0 %v2377
    %2599 = vmatprep.subr.mxu0 0.0
    %2600 = vmatpush1.msra.mxu0 %v2378
    %2601 = vmatprep.subr.mxu0 0.0
    %2602 = vmatpush1.msra.mxu0 %v2379
    %2603 = vmatprep.subr.mxu0 0.0
    %2604 = vmatpush1.msra.mxu0 %v2380
    %2605 = vmatprep.subr.mxu0 0.0
    %2606 = vmatpush1.msra.mxu0 %v2381
    %2607 = vmatprep.subr.mxu0 0.0
    %2608 = vmatpush1.msra.mxu0 %v2382
    %2609 = vmatprep.subr.mxu0 0.0
    %2610 = vmatpush1.msra.mxu0 %v2591
    %2611 = vmatprep.subr.mxu0 0.0
    %2612 = vmatpush1.msra.mxu0 0.0
    %2613 = vmatprep.subr.mxu0 0.0
    %2614 = vmatpush1.msra.mxu0 0.0
    %2615 = vmatprep.subr.mxu0 0.0
    %2616 = vmatpush1.msra.mxu0 0.0
    %2617 = vmatprep.subr.mxu0 0.0
    %2618 = vmatpush1.msra.mxu0 0.0
    %2619 = vmatprep.subr.mxu0 0.0
    %2620 = vmatpush1.msra.mxu0 0.0
    %2621 = vmatprep.subr.mxu0 0.0
    %2622 = vmatpush1.msra.mxu0 0.0
    %2623 = vmatprep.subr.mxu0 0.0
    %2624 = vmatpush1.msra.mxu0 0.0
    %2625 = vmatprep.subr.mxu0 0.0
    %2626 = vmatpush1.msra.mxu0 0.0
    %2627 = vmatprep.subr.mxu0 0.0
    %2628 = vmatpush1.msra.mxu0 0.0
    %2629 = vmatprep.subr.mxu0 0.0
    %2630 = vmatpush1.msra.mxu0 0.0
    %2631 = vmatprep.subr.mxu0 0.0
    %2632 = vmatpush1.msra.mxu0 0.0
    %2633 = vmatprep.subr.mxu0 0.0
    %2634 = vmatpush1.msra.mxu0 0.0
    %2635 = vmatprep.subr.mxu0 0.0
    %2636 = vmatpush1.msra.mxu0 0.0
    %2637 = vmatprep.subr.mxu0 0.0
    %2638 = vmatpush1.msra.mxu0 0.0
    %2639 = vmatprep.subr.mxu0 0.0
    %2640 = vmatpush1.msra.mxu0 0.0
    %2641 = vmatprep.subr.mxu0 0.0
    %2642 = vmatpush1.msra.mxu0 0.0
    %2643 = vmatprep.subr.mxu0 0.0
    %2644 = vmatpush1.msra.mxu0 0.0
    %2645 = vmatprep.subr.mxu0 0.0
    %2646 = vmatpush1.msra.mxu0 0.0
    %2647 = vmatprep.subr.mxu0 0.0
    %2648 = vmatpush1.msra.mxu0 0.0
    %2649 = vmatprep.subr.mxu0 0.0
    %2650 = vmatpush1.msra.mxu0 0.0
    %2651 = vmatprep.subr.mxu0 0.0
    %2652 = vmatpush1.msra.mxu0 0.0
    %2653 = vmatprep.subr.mxu0 0.0
    %2654 = vmatpush1.msra.mxu0 0.0
    %2655 = vmatprep.subr.mxu0 0.0
    %2656 = vmatpush1.msra.mxu0 0.0
    %2657 = vmatprep.mubr.f32.mxu0 0.0
    %2658 = vmatmul.mubr.f32.gmra.mrb[0].mxu0 %v2395
    %v2659 = vpop.f32.mrb[0].mxu0
    %v2660 = vadd.f32 %v2512, %v2659
    %v2661 = vpop.f32.mrb[0].mxu0
    %2662 = vmatprep.mubr.f32.mxu0 0.0
    %2663 = vmatmul.mubr.f32.gmra.mrb[0].mxu0 %v2398
    %v2664 = vpop.f32.mrb[0].mxu0
    %v2665 = vadd.f32 %v2517, %v2664
    %v2666 = vpop.f32.mrb[0].mxu0
    %2667 = vmatprep.mubr.f32.mxu0 0.0
    %2668 = vmatmul.mubr.f32.gmra.mrb[0].mxu0 %v2401
    %v2669 = vpop.f32.mrb[0].mxu0
    %v2670 = vadd.f32 %v2522, %v2669
    %v2671 = vpop.f32.mrb[0].mxu0
    %2672 = vmatprep.mubr.f32.mxu0 0.0
    %2673 = vmatmul.mubr.f32.gmra.mrb[0].mxu0 %v2404
    %v2674 = vpop.f32.mrb[0].mxu0
    %v2675 = vadd.f32 %v2527, %v2674
    %v2676 = vpop.f32.mrb[0].mxu0
    %2677 = vmatprep.mubr.f32.mxu0 0.0
    %2678 = vmatmul.mubr.f32.gmra.mrb[0].mxu0 %v2407
    %v2679 = vpop.f32.mrb[0].mxu0
    %v2680 = vadd.f32 %v2532, %v2679
    %v2681 = vpop.f32.mrb[0].mxu0
    %2682 = vmatprep.mubr.f32.mxu0 0.0
    %2683 = vmatmul.mubr.f32.gmra.mrb[0].mxu0 %v2410
    %v2684 = vpop.f32.mrb[0].mxu0
    %v2685 = vadd.f32 %v2537, %v2684
    %v2686 = vpop.f32.mrb[0].mxu0
    %2687 = vmatprep.mubr.f32.mxu0 0.0
    %2688 = vmatmul.mubr.f32.gmra.mrb[0].mxu0 %v2413
    %v2689 = vpop.f32.mrb[0].mxu0
    %v2690 = vadd.f32 %v2542, %v2689
    %v2691 = vpop.f32.mrb[0].mxu0
    %2692 = vmatprep.mubr.f32.mxu0 0.0
    %2693 = vmatmul.mubr.f32.gmra.mrb[0].mxu0 %v2416
    %v2694 = vpop.f32.mrb[0].mxu0
    %v2695 = vadd.f32 %v2547, %v2694
    %v2696 = vpop.f32.mrb[0].mxu0
    %2697 = vmatprep.mubr.f32.mxu0 0.0
    %2698 = vmatmul.mubr.f32.gmra.mrb[0].mxu0 %v2419
    %v2699 = vpop.f32.mrb[0].mxu0
    %v2700 = vadd.f32 %v2552, %v2699
    %v2701 = vpop.f32.mrb[0].mxu0
    %2702 = vmatprep.mubr.f32.mxu0 0.0
    %2703 = vmatmul.mubr.f32.gmra.mrb[0].mxu0 %v2422
    %v2704 = vpop.f32.mrb[0].mxu0
    %v2705 = vadd.f32 %v2557, %v2704
    %v2706 = vpop.f32.mrb[0].mxu0
    %2707 = vmatprep.mubr.f32.mxu0 0.0
    %2708 = vmatmul.mubr.f32.gmra.mrb[0].mxu0 %v2425
    %v2709 = vpop.f32.mrb[0].mxu0
    %v2710 = vadd.f32 %v2562, %v2709
    %v2711 = vpop.f32.mrb[0].mxu0
    %2712 = vmatprep.mubr.f32.mxu0 0.0
    %2713 = vmatmul.mubr.f32.gmra.mrb[0].mxu0 %v2428
    %v2714 = vpop.f32.mrb[0].mxu0
    %v2715 = vadd.f32 %v2567, %v2714
    %v2716 = vpop.f32.mrb[0].mxu0
    %2717 = vmatprep.mubr.f32.mxu0 0.0
    %2718 = vmatmul.mubr.f32.gmra.mrb[0].mxu0 %v2431
    %v2719 = vpop.f32.mrb[0].mxu0
    %v2720 = vadd.f32 %v2572, %v2719
    %v2721 = vpop.f32.mrb[0].mxu0
    %2722 = vmatprep.mubr.f32.mxu0 0.0
    %2723 = vmatmul.mubr.f32.gmra.mrb[0].mxu0 %v2434
    %v2724 = vpop.f32.mrb[0].mxu0
    %v2725 = vadd.f32 %v2577, %v2724
    %v2726 = vpop.f32.mrb[0].mxu0
    %2727 = vmatprep.mubr.f32.mxu0 0.0
    %2728 = vmatmul.mubr.f32.gmra.mrb[0].mxu0 %v2437
    %v2729 = vpop.f32.mrb[0].mxu0
    %v2730 = vadd.f32 %v2582, %v2729
    %v2731 = vpop.f32.mrb[0].mxu0
    %2732 = vmatprep.mubr.f32.mxu0 0.0
    %2733 = vmatmul.mubr.f32.gmra.mrb[0].mxu0 %v2440
    %v2734 = vpop.f32.mrb[0].mxu0
    %v2735 = vadd.f32 %v2587, %v2734
    %v2736 = vpop.f32.mrb[0].mxu0
    %2737 = vdwg.mxu0
    %v2739 = vsel %vm2393, %v2359, 0
    %v2742 = vsel %vm2393, %v2360, 0
    %v2745 = vsel %vm2393, %v2361, 0
    %v2748 = vsel %vm2393, %v2362, 0
    %v2751 = vsel %vm2393, %v2363, 0
    %v2754 = vsel %vm2393, %v2364, 0
    %v2757 = vsel %vm2393, %v2365, 0
    %v2760 = vsel %vm2393, %v2366, 0
    %v2763 = vsel %vm2393, %v2367, 0
    %v2766 = vsel %vm2393, %v2368, 0
    %v2769 = vsel %vm2393, %v2369, 0
    %v2772 = vsel %vm2393, %v2370, 0
    %v2775 = vsel %vm2393, %v2371, 0
    %v2778 = vsel %vm2393, %v2372, 0
    %v2781 = vsel %vm2393, %v2373, 0
    %v2784 = vsel %vm2393, %v2374, 0
    %2786 = vmatprep.subr.mxu0 0.0
    %2787 = vmatpush1.msra.mxu0 %v2375
    %2788 = vmatprep.subr.mxu0 0.0
    %2789 = vmatpush1.msra.mxu0 %v2376
    %2790 = vmatprep.subr.mxu0 0.0
    %2791 = vmatpush1.msra.mxu0 %v2377
    %2792 = vmatprep.subr.mxu0 0.0
    %2793 = vmatpush1.msra.mxu0 %v2378
    %2794 = vmatprep.subr.mxu0 0.0
    %2795 = vmatpush1.msra.mxu0 %v2379
    %2796 = vmatprep.subr.mxu0 0.0
    %2797 = vmatpush1.msra.mxu0 %v2380
    %2798 = vmatprep.subr.mxu0 0.0
    %2799 = vmatpush1.msra.mxu0 %v2381
    %2800 = vmatprep.subr.mxu0 0.0
    %2801 = vmatpush1.msra.mxu0 %v2382
    %2802 = vmatprep.subr.mxu0 0.0
    %2803 = vmatpush1.msra.mxu0 %v2591
    %2804 = vmatprep.subr.mxu0 0.0
    %2805 = vmatpush1.msra.mxu0 0.0
    %2806 = vmatprep.subr.mxu0 0.0
    %2807 = vmatpush1.msra.mxu0 0.0
    %2808 = vmatprep.subr.mxu0 0.0
    %2809 = vmatpush1.msra.mxu0 0.0
    %2810 = vmatprep.subr.mxu0 0.0
    %2811 = vmatpush1.msra.mxu0 0.0
    %2812 = vmatprep.subr.mxu0 0.0
    %2813 = vmatpush1.msra.mxu0 0.0
    %2814 = vmatprep.subr.mxu0 0.0
    %2815 = vmatpush1.msra.mxu0 0.0
    %2816 = vmatprep.subr.mxu0 0.0
    %2817 = vmatpush1.msra.mxu0 0.0
    %2818 = vmatprep.subr.mxu0 0.0
    %2819 = vmatpush1.msra.mxu0 0.0
    %2820 = vmatprep.subr.mxu0 0.0
    %2821 = vmatpush1.msra.mxu0 0.0
    %2822 = vmatprep.subr.mxu0 0.0
    %2823 = vmatpush1.msra.mxu0 0.0
    %2824 = vmatprep.subr.mxu0 0.0
    %2825 = vmatpush1.msra.mxu0 0.0
    %2826 = vmatprep.subr.mxu0 0.0
    %2827 = vmatpush1.msra.mxu0 0.0
    %2828 = vmatprep.subr.mxu0 0.0
    %2829 = vmatpush1.msra.mxu0 0.0
    %2830 = vmatprep.subr.mxu0 0.0
    %2831 = vmatpush1.msra.mxu0 0.0
    %2832 = vmatprep.subr.mxu0 0.0
    %2833 = vmatpush1.msra.mxu0 0.0
    %2834 = vmatprep.subr.mxu0 0.0
    %2835 = vmatpush1.msra.mxu0 0.0
    %2836 = vmatprep.subr.mxu0 0.0
    %2837 = vmatpush1.msra.mxu0 0.0
    %2838 = vmatprep.subr.mxu0 0.0
    %2839 = vmatpush1.msra.mxu0 0.0
    %2840 = vmatprep.subr.mxu0 0.0
    %2841 = vmatpush1.msra.mxu0 0.0
    %2842 = vmatprep.subr.mxu0 0.0
    %2843 = vmatpush1.msra.mxu0 0.0
    %2844 = vmatprep.subr.mxu0 0.0
    %2845 = vmatpush1.msra.mxu0 0.0
    %2846 = vmatprep.subr.mxu0 0.0
    %2847 = vmatpush1.msra.mxu0 0.0
    %2848 = vmatprep.subr.mxu0 0.0
    %2849 = vmatpush1.msra.mxu0 0.0
    %2850 = vmatprep.mubr.f32.mxu0 0.0
    %2851 = vmatmul.mubr.f32.gmra.mrb[0].mxu0 %v2739
    %v2852 = vpop.f32.mrb[0].mxu0
    %v2853 = vadd.f32 0.0, %v2852
    %v2854 = vpop.f32.mrb[0].mxu0
    %2855 = vmatprep.mubr.f32.mxu0 0.0
    %2856 = vmatmul.mubr.f32.gmra.mrb[0].mxu0 %v2742
    %v2857 = vpop.f32.mrb[0].mxu0
    %v2858 = vadd.f32 0.0, %v2857
    %v2859 = vpop.f32.mrb[0].mxu0
    %2860 = vmatprep.mubr.f32.mxu0 0.0
    %2861 = vmatmul.mubr.f32.gmra.mrb[0].mxu0 %v2745
    %v2862 = vpop.f32.mrb[0].mxu0
    %v2863 = vadd.f32 0.0, %v2862
    %v2864 = vpop.f32.mrb[0].mxu0
    %2865 = vmatprep.mubr.f32.mxu0 0.0
    %2866 = vmatmul.mubr.f32.gmra.mrb[0].mxu0 %v2748
    %v2867 = vpop.f32.mrb[0].mxu0
    %v2868 = vadd.f32 0.0, %v2867
    %v2869 = vpop.f32.mrb[0].mxu0
    %2870 = vmatprep.mubr.f32.mxu0 0.0
    %2871 = vmatmul.mubr.f32.gmra.mrb[0].mxu0 %v2751
    %v2872 = vpop.f32.mrb[0].mxu0
    %v2873 = vadd.f32 0.0, %v2872
    %v2874 = vpop.f32.mrb[0].mxu0
    %2875 = vmatprep.mubr.f32.mxu0 0.0
    %2876 = vmatmul.mubr.f32.gmra.mrb[0].mxu0 %v2754
    %v2877 = vpop.f32.mrb[0].mxu0
    %v2878 = vadd.f32 0.0, %v2877
    %v2879 = vpop.f32.mrb[0].mxu0
    %2880 = vmatprep.mubr.f32.mxu0 0.0
    %2881 = vmatmul.mubr.f32.gmra.mrb[0].mxu0 %v2757
    %v2882 = vpop.f32.mrb[0].mxu0
    %v2883 = vadd.f32 0.0, %v2882
    %v2884 = vpop.f32.mrb[0].mxu0
    %2885 = vmatprep.mubr.f32.mxu0 0.0
    %2886 = vmatmul.mubr.f32.gmra.mrb[0].mxu0 %v2760
    %v2887 = vpop.f32.mrb[0].mxu0
    %v2888 = vadd.f32 0.0, %v2887
    %v2889 = vpop.f32.mrb[0].mxu0
    %2890 = vmatprep.mubr.f32.mxu0 0.0
    %2891 = vmatmul.mubr.f32.gmra.mrb[0].mxu0 %v2763
    %v2892 = vpop.f32.mrb[0].mxu0
    %v2893 = vadd.f32 0.0, %v2892
    %v2894 = vpop.f32.mrb[0].mxu0
    %2895 = vmatprep.mubr.f32.mxu0 0.0
    %2896 = vmatmul.mubr.f32.gmra.mrb[0].mxu0 %v2766
    %v2897 = vpop.f32.mrb[0].mxu0
    %v2898 = vadd.f32 0.0, %v2897
    %v2899 = vpop.f32.mrb[0].mxu0
    %2900 = vmatprep.mubr.f32.mxu0 0.0
    %2901 = vmatmul.mubr.f32.gmra.mrb[0].mxu0 %v2769
    %v2902 = vpop.f32.mrb[0].mxu0
    %v2903 = vadd.f32 0.0, %v2902
    %v2904 = vpop.f32.mrb[0].mxu0
    %2905 = vmatprep.mubr.f32.mxu0 0.0
    %2906 = vmatmul.mubr.f32.gmra.mrb[0].mxu0 %v2772
    %v2907 = vpop.f32.mrb[0].mxu0
    %v2908 = vadd.f32 0.0, %v2907
    %v2909 = vpop.f32.mrb[0].mxu0
    %2910 = vmatprep.mubr.f32.mxu0 0.0
    %2911 = vmatmul.mubr.f32.gmra.mrb[0].mxu0 %v2775
    %v2912 = vpop.f32.mrb[0].mxu0
    %v2913 = vadd.f32 0.0, %v2912
    %v2914 = vpop.f32.mrb[0].mxu0
    %2915 = vmatprep.mubr.f32.mxu0 0.0
    %2916 = vmatmul.mubr.f32.gmra.mrb[0].mxu0 %v2778
    %v2917 = vpop.f32.mrb[0].mxu0
    %v2918 = vadd.f32 0.0, %v2917
    %v2919 = vpop.f32.mrb[0].mxu0
    %2920 = vmatprep.mubr.f32.mxu0 0.0
    %2921 = vmatmul.mubr.f32.gmra.mrb[0].mxu0 %v2781
    %v2922 = vpop.f32.mrb[0].mxu0
    %v2923 = vadd.f32 0.0, %v2922
    %v2924 = vpop.f32.mrb[0].mxu0
    %2925 = vmatprep.mubr.f32.mxu0 0.0
    %2926 = vmatmul.mubr.f32.gmra.mrb[0].mxu0 %v2784
    %v2927 = vpop.f32.mrb[0].mxu0
    %v2928 = vadd.f32 0.0, %v2927
    %v2929 = vpop.f32.mrb[0].mxu0
    %2930 = vdwg.mxu0
    %v2931 = vadd.f32 %v2660, %v2853
    %v2932 = vadd.f32 %v2665, %v2858
    %v2933 = vadd.f32 %v2670, %v2863
    %v2934 = vadd.f32 %v2675, %v2868
    %v2935 = vadd.f32 %v2680, %v2873
    %v2936 = vadd.f32 %v2685, %v2878
    %v2937 = vadd.f32 %v2690, %v2883
    %v2938 = vadd.f32 %v2695, %v2888
    %v2939 = vadd.f32 %v2700, %v2893
    %v2940 = vadd.f32 %v2705, %v2898
    %v2941 = vadd.f32 %v2710, %v2903
    %v2942 = vadd.f32 %v2715, %v2908
    %v2943 = vadd.f32 %v2720, %v2913
    %v2944 = vadd.f32 %v2725, %v2918
    %v2945 = vadd.f32 %v2730, %v2923
    %v2946 = vadd.f32 %v2735, %v2928
    %v2947 = vld [vmem:[%s5] sm:$0x1]
    %v2949 = vlaneseq
    %v2950 = vshrl.u32 %v2949, 7
    %v2951 = vsub.s32 0, %v2950
    %v2952 = vrot.slane %v2947, %v2951
    %v2954 = vadd.f32 %v2931, %v2952
    %v2955 = vadd.f32 %v2932, %v2952
    %v2956 = vadd.f32 %v2933, %v2952
    %v2957 = vadd.f32 %v2934, %v2952
    %v2958 = vadd.f32 %v2935, %v2952
    %v2959 = vadd.f32 %v2936, %v2952
    %v2960 = vadd.f32 %v2937, %v2952
    %v2961 = vadd.f32 %v2938, %v2952
    %v2962 = vadd.f32 %v2939, %v2952
    %v2963 = vadd.f32 %v2940, %v2952
    %v2964 = vadd.f32 %v2941, %v2952
    %v2965 = vadd.f32 %v2942, %v2952
    %v2966 = vadd.f32 %v2943, %v2952
    %v2967 = vadd.f32 %v2944, %v2952
    %v2968 = vadd.f32 %v2945, %v2952
    %v2969 = vadd.f32 %v2946, %v2952
    %v2970 = vmul.f32 %v2954, 0.5
    %v2971 = vmul.f32 %v2955, 0.5
    %v2972 = vmul.f32 %v2956, 0.5
    %v2973 = vmul.f32 %v2957, 0.5
    %v2974 = vmul.f32 %v2958, 0.5
    %v2975 = vmul.f32 %v2959, 0.5
    %v2976 = vmul.f32 %v2960, 0.5
    %v2977 = vmul.f32 %v2961, 0.5
    %v2978 = vmul.f32 %v2962, 0.5
    %v2979 = vmul.f32 %v2963, 0.5
    %v2980 = vmul.f32 %v2964, 0.5
    %v2981 = vmul.f32 %v2965, 0.5
    %v2982 = vmul.f32 %v2966, 0.5
    %v2983 = vmul.f32 %v2967, 0.5
    %v2984 = vmul.f32 %v2968, 0.5
    %v2985 = vmul.f32 %v2969, 0.5
    %v2986 = vmul.f32 %v2954, %v2954
    %v2987 = vmul.f32 %v2955, %v2955
    %v2988 = vmul.f32 %v2956, %v2956
    %v2989 = vmul.f32 %v2957, %v2957
    %v2990 = vmul.f32 %v2958, %v2958
    %v2991 = vmul.f32 %v2959, %v2959
    %v2992 = vmul.f32 %v2960, %v2960
    %v2993 = vmul.f32 %v2961, %v2961
    %v2994 = vmul.f32 %v2962, %v2962
    %v2995 = vmul.f32 %v2963, %v2963
    %v2996 = vmul.f32 %v2964, %v2964
    %v2997 = vmul.f32 %v2965, %v2965
    %v2998 = vmul.f32 %v2966, %v2966
    %v2999 = vmul.f32 %v2967, %v2967
    %v3000 = vmul.f32 %v2968, %v2968
    %v3001 = vmul.f32 %v2969, %v2969
    %v3002 = vmul.f32 %v2986, %v2954
    %v3003 = vmul.f32 %v2987, %v2955
    %v3004 = vmul.f32 %v2988, %v2956
    %v3005 = vmul.f32 %v2989, %v2957
    %v3006 = vmul.f32 %v2990, %v2958
    %v3007 = vmul.f32 %v2991, %v2959
    %v3008 = vmul.f32 %v2992, %v2960
    %v3009 = vmul.f32 %v2993, %v2961
    %v3010 = vmul.f32 %v2994, %v2962
    %v3011 = vmul.f32 %v2995, %v2963
    %v3012 = vmul.f32 %v2996, %v2964
    %v3013 = vmul.f32 %v2997, %v2965
    %v3014 = vmul.f32 %v2998, %v2966
    %v3015 = vmul.f32 %v2999, %v2967
    %v3016 = vmul.f32 %v3000, %v2968
    %v3017 = vmul.f32 %v3001, %v2969
    %v3018 = vmul.f32 %v3002, 0.044715
    %v3019 = vmul.f32 %v3003, 0.044715
    %v3020 = vmul.f32 %v3004, 0.044715
    %v3021 = vmul.f32 %v3005, 0.044715
    %v3022 = vmul.f32 %v3006, 0.044715
    %v3023 = vmul.f32 %v3007, 0.044715
    %v3024 = vmul.f32 %v3008, 0.044715
    %v3025 = vmul.f32 %v3009, 0.044715
    %v3026 = vmul.f32 %v3010, 0.044715
    %v3027 = vmul.f32 %v3011, 0.044715
    %v3028 = vmul.f32 %v3012, 0.044715
    %v3029 = vmul.f32 %v3013, 0.044715
    %v3030 = vmul.f32 %v3014, 0.044715
    %v3031 = vmul.f32 %v3015, 0.044715
    %v3032 = vmul.f32 %v3016, 0.044715
    %v3033 = vmul.f32 %v3017, 0.044715
    %v3034 = vadd.f32 %v2954, %v3018
    %v3035 = vadd.f32 %v2955, %v3019
    %v3036 = vadd.f32 %v2956, %v3020
    %v3037 = vadd.f32 %v2957, %v3021
    %v3038 = vadd.f32 %v2958, %v3022
    %v3039 = vadd.f32 %v2959, %v3023
    %v3040 = vadd.f32 %v2960, %v3024
    %v3041 = vadd.f32 %v2961, %v3025
    %v3042 = vadd.f32 %v2962, %v3026
    %v3043 = vadd.f32 %v2963, %v3027
    %v3044 = vadd.f32 %v2964, %v3028
    %v3045 = vadd.f32 %v2965, %v3029
    %v3046 = vadd.f32 %v2966, %v3030
    %v3047 = vadd.f32 %v2967, %v3031
    %v3048 = vadd.f32 %v2968, %v3032
    %v3049 = vadd.f32 %v2969, %v3033
    %v3050 = vmul.f32 %v3034, 0.7978846
    %v3051 = vmul.f32 %v3035, 0.7978846
    %v3052 = vmul.f32 %v3036, 0.7978846
    %v3053 = vmul.f32 %v3037, 0.7978846
    %v3054 = vmul.f32 %v3038, 0.7978846
    %v3055 = vmul.f32 %v3039, 0.7978846
    %v3056 = vmul.f32 %v3040, 0.7978846
    %v3057 = vmul.f32 %v3041, 0.7978846
    %v3058 = vmul.f32 %v3042, 0.7978846
    %v3059 = vmul.f32 %v3043, 0.7978846
    %v3060 = vmul.f32 %v3044, 0.7978846
    %v3061 = vmul.f32 %v3045, 0.7978846
    %v3062 = vmul.f32 %v3046, 0.7978846
    %v3063 = vmul.f32 %v3047, 0.7978846
    %v3064 = vmul.f32 %v3048, 0.7978846
    %v3065 = vmul.f32 %v3049, 0.7978846
    %v3066 = vtanh.pop %v3050
    %v3067 = vtanh.pop %v3051
    %v3068 = vtanh.pop %v3052
    %v3069 = vtanh.pop %v3053
    %v3070 = vtanh.pop %v3054
    %v3071 = vtanh.pop %v3055
    %v3072 = vtanh.pop %v3056
    %v3073 = vtanh.pop %v3057
    %v3074 = vtanh.pop %v3058
    %v3075 = vtanh.pop %v3059
    %v3076 = vtanh.pop %v3060
    %v3077 = vtanh.pop %v3061
    %v3078 = vtanh.pop %v3062
    %v3079 = vtanh.pop %v3063
    %v3080 = vtanh.pop %v3064
    %v3081 = vtanh.pop %v3065
    %v3082 = vadd.f32 %v3066, 1.0
    %v3083 = vadd.f32 %v3067, 1.0
    %v3084 = vadd.f32 %v3068, 1.0
    %v3085 = vadd.f32 %v3069, 1.0
    %v3086 = vadd.f32 %v3070, 1.0
    %v3087 = vadd.f32 %v3071, 1.0
    %v3088 = vadd.f32 %v3072, 1.0
    %v3089 = vadd.f32 %v3073, 1.0
    %v3090 = vadd.f32 %v3074, 1.0
    %v3091 = vadd.f32 %v3075, 1.0
    %v3092 = vadd.f32 %v3076, 1.0
    %v3093 = vadd.f32 %v3077, 1.0
    %v3094 = vadd.f32 %v3078, 1.0
    %v3095 = vadd.f32 %v3079, 1.0
    %v3096 = vadd.f32 %v3080, 1.0
    %v3097 = vadd.f32 %v3081, 1.0
    %v3098 = vmul.f32 %v2970, %v3082
    %v3099 = vmul.f32 %v2971, %v3083
    %v3100 = vmul.f32 %v2972, %v3084
    %v3101 = vmul.f32 %v2973, %v3085
    %v3102 = vmul.f32 %v2974, %v3086
    %v3103 = vmul.f32 %v2975, %v3087
    %v3104 = vmul.f32 %v2976, %v3088
    %v3105 = vmul.f32 %v2977, %v3089
    %v3106 = vmul.f32 %v2978, %v3090
    %v3107 = vmul.f32 %v2979, %v3091
    %v3108 = vmul.f32 %v2980, %v3092
    %v3109 = vmul.f32 %v2981, %v3093
    %v3110 = vmul.f32 %v2982, %v3094
    %v3111 = vmul.f32 %v2983, %v3095
    %v3112 = vmul.f32 %v2984, %v3096
    %v3113 = vmul.f32 %v2985, %v3097
    %v3114 = vpack.c.bf16 %v3099, %v3098
    %v3115 = vpack.c.bf16 %v3101, %v3100
    %v3116 = vpack.c.bf16 %v3103, %v3102
    %v3117 = vpack.c.bf16 %v3105, %v3104
    %v3118 = vpack.c.bf16 %v3107, %v3106
    %v3119 = vpack.c.bf16 %v3109, %v3108
    %v3120 = vpack.c.bf16 %v3111, %v3110
    %v3121 = vpack.c.bf16 %v3113, %v3112
    %v3122 = vunpack.c.l.bf16 %v3114
    %v3123 = vunpack.c.h.bf16 %v3114
    %v3124 = vunpack.c.l.bf16 %v3115
    %v3125 = vunpack.c.h.bf16 %v3115
    %v3126 = vunpack.c.l.bf16 %v3116
    %v3127 = vunpack.c.h.bf16 %v3116
    %v3128 = vunpack.c.l.bf16 %v3117
    %v3129 = vunpack.c.h.bf16 %v3117
    %v3130 = vunpack.c.l.bf16 %v3118
    %v3131 = vunpack.c.h.bf16 %v3118
    %v3132 = vunpack.c.l.bf16 %v3119
    %v3133 = vunpack.c.h.bf16 %v3119
    %v3134 = vunpack.c.l.bf16 %v3120
    %v3135 = vunpack.c.h.bf16 %v3120
    %v3136 = vunpack.c.l.bf16 %v3121
    %v3137 = vunpack.c.h.bf16 %v3121
    %v3138 = vsub.f32 %v3098, %v3122
    %v3139 = vsub.f32 %v3099, %v3123
    %v3140 = vsub.f32 %v3100, %v3124
    %v3141 = vsub.f32 %v3101, %v3125
    %v3142 = vsub.f32 %v3102, %v3126
    %v3143 = vsub.f32 %v3103, %v3127
    %v3144 = vsub.f32 %v3104, %v3128
    %v3145 = vsub.f32 %v3105, %v3129
    %v3146 = vsub.f32 %v3106, %v3130
    %v3147 = vsub.f32 %v3107, %v3131
    %v3148 = vsub.f32 %v3108, %v3132
    %v3149 = vsub.f32 %v3109, %v3133
    %v3150 = vsub.f32 %v3110, %v3134
    %v3151 = vsub.f32 %v3111, %v3135
    %v3152 = vsub.f32 %v3112, %v3136
    %v3153 = vsub.f32 %v3113, %v3137
    %v3154 = vld [vmem:[%s6] sm:$0xff]
    %v3155 = vld [vmem:[%s6 + $0x8] sm:$0xff]
    %v3156 = vld [vmem:[%s6 + $0x10] sm:$0xff]
    %v3157 = vld [vmem:[%s6 + $0x18] sm:$0xff]
    %v3158 = vld [vmem:[%s6 + $0x20] sm:$0xff]
    %v3159 = vld [vmem:[%s6 + $0x28] sm:$0xff]
    %v3160 = vld [vmem:[%s6 + $0x30] sm:$0xff]
    %v3161 = vld [vmem:[%s6 + $0x38] sm:$0xff]
    %v3162 = vld [vmem:[%s6 + $0x40] sm:$0xff]
    %v3163 = vld [vmem:[%s6 + $0x48] sm:$0xff]
    %v3164 = vld [vmem:[%s6 + $0x50] sm:$0xff]
    %v3165 = vld [vmem:[%s6 + $0x58] sm:$0xff]
    %v3166 = vld [vmem:[%s6 + $0x60] sm:$0xff]
    %v3167 = vld [vmem:[%s6 + $0x68] sm:$0xff]
    %v3168 = vld [vmem:[%s6 + $0x70] sm:$0xff]
    %v3169 = vld [vmem:[%s6 + $0x78] sm:$0xff]
    %v3170 = vld [vmem:[#allocation6] sm:$0xff]
    %v3171 = vld [vmem:[#allocation6 + $0x8] sm:$0xff]
    %v3172 = vld [vmem:[#allocation6 + $0x10] sm:$0xff]
    %v3173 = vld [vmem:[#allocation6 + $0x18] sm:$0xff]
    %v3174 = vld [vmem:[#allocation6 + $0x20] sm:$0xff]
    %v3175 = vld [vmem:[#allocation6 + $0x28] sm:$0xff]
    %v3176 = vld [vmem:[#allocation6 + $0x30] sm:$0xff]
    %v3177 = vld [vmem:[#allocation6 + $0x38] sm:$0xff]
    %v3178 = vld [vmem:[#allocation6 + $0x40] sm:$0xff]
    %v3179 = vld [vmem:[#allocation6 + $0x48] sm:$0xff]
    %v3180 = vld [vmem:[#allocation6 + $0x50] sm:$0xff]
    %v3181 = vld [vmem:[#allocation6 + $0x58] sm:$0xff]
    %v3182 = vld [vmem:[#allocation6 + $0x60] sm:$0xff]
    %v3183 = vld [vmem:[#allocation6 + $0x68] sm:$0xff]
    %v3184 = vld [vmem:[#allocation6 + $0x70] sm:$0xff]
    %v3185 = vld [vmem:[#allocation6 + $0x78] sm:$0xff]
    %3186 = vmatprep.subr.mxu0 0.0
    %3187 = vmatpush1.msra.mxu0 %v3170
    %3188 = vmatprep.subr.mxu0 0.0
    %3189 = vmatpush1.msra.mxu0 %v3171
    %3190 = vmatprep.subr.mxu0 0.0
    %3191 = vmatpush1.msra.mxu0 %v3172
    %3192 = vmatprep.subr.mxu0 0.0
    %3193 = vmatpush1.msra.mxu0 %v3173
    %3194 = vmatprep.subr.mxu0 0.0
    %3195 = vmatpush1.msra.mxu0 %v3174
    %3196 = vmatprep.subr.mxu0 0.0
    %3197 = vmatpush1.msra.mxu0 %v3175
    %3198 = vmatprep.subr.mxu0 0.0
    %3199 = vmatpush1.msra.mxu0 %v3176
    %3200 = vmatprep.subr.mxu0 0.0
    %3201 = vmatpush1.msra.mxu0 %v3177
    %3202 = vmatprep.subr.mxu0 0.0
    %3203 = vmatpush1.msra.mxu0 %v3178
    %3204 = vmatprep.subr.mxu0 0.0
    %3205 = vmatpush1.msra.mxu0 %v3179
    %3206 = vmatprep.subr.mxu0 0.0
    %3207 = vmatpush1.msra.mxu0 %v3180
    %3208 = vmatprep.subr.mxu0 0.0
    %3209 = vmatpush1.msra.mxu0 %v3181
    %3210 = vmatprep.subr.mxu0 0.0
    %3211 = vmatpush1.msra.mxu0 %v3182
    %3212 = vmatprep.subr.mxu0 0.0
    %3213 = vmatpush1.msra.mxu0 %v3183
    %3214 = vmatprep.subr.mxu0 0.0
    %3215 = vmatpush1.msra.mxu0 %v3184
    %3216 = vmatprep.subr.mxu0 0.0
    %3217 = vmatpush1.msra.mxu0 %v3185
    %3218 = vmatprep.subr.mxu0 0.0
    %3219 = vmatpush1.msra.mxu0 0.0
    %3220 = vmatprep.subr.mxu0 0.0
    %3221 = vmatpush1.msra.mxu0 0.0
    %3222 = vmatprep.subr.mxu0 0.0
    %3223 = vmatpush1.msra.mxu0 0.0
    %3224 = vmatprep.subr.mxu0 0.0
    %3225 = vmatpush1.msra.mxu0 0.0
    %3226 = vmatprep.subr.mxu0 0.0
    %3227 = vmatpush1.msra.mxu0 0.0
    %3228 = vmatprep.subr.mxu0 0.0
    %3229 = vmatpush1.msra.mxu0 0.0
    %3230 = vmatprep.subr.mxu0 0.0
    %3231 = vmatpush1.msra.mxu0 0.0
    %3232 = vmatprep.subr.mxu0 0.0
    %3233 = vmatpush1.msra.mxu0 0.0
    %3234 = vmatprep.subr.mxu0 0.0
    %3235 = vmatpush1.msra.mxu0 0.0
    %3236 = vmatprep.subr.mxu0 0.0
    %3237 = vmatpush1.msra.mxu0 0.0
    %3238 = vmatprep.subr.mxu0 0.0
    %3239 = vmatpush1.msra.mxu0 0.0
    %3240 = vmatprep.subr.mxu0 0.0
    %3241 = vmatpush1.msra.mxu0 0.0
    %3242 = vmatprep.subr.mxu0 0.0
    %3243 = vmatpush1.msra.mxu0 0.0
    %3244 = vmatprep.subr.mxu0 0.0
    %3245 = vmatpush1.msra.mxu0 0.0
    %3246 = vmatprep.subr.mxu0 0.0
    %3247 = vmatpush1.msra.mxu0 0.0
    %3248 = vmatprep.subr.mxu0 0.0
    %3249 = vmatpush1.msra.mxu0 0.0
    %3250 = vmatprep.mubr.f32.mxu0 0.0
    %3251 = vmatmul.mubr.f32.gmra.mrb[0].mxu0 %v3122
    %v3252 = vpop.f32.mrb[0].mxu0
    %v3253 = vadd.f32 0.0, %v3252
    %v3254 = vpop.f32.mrb[0].mxu0
    %3255 = vmatprep.mubr.f32.mxu0 0.0
    %3256 = vmatmul.mubr.f32.gmra.mrb[0].mxu0 %v3123
    %v3257 = vpop.f32.mrb[0].mxu0
    %v3258 = vadd.f32 0.0, %v3257
    %v3259 = vpop.f32.mrb[0].mxu0
    %3260 = vmatprep.mubr.f32.mxu0 0.0
    %3261 = vmatmul.mubr.f32.gmra.mrb[0].mxu0 %v3124
    %v3262 = vpop.f32.mrb[0].mxu0
    %v3263 = vadd.f32 0.0, %v3262
    %v3264 = vpop.f32.mrb[0].mxu0
    %3265 = vmatprep.mubr.f32.mxu0 0.0
    %3266 = vmatmul.mubr.f32.gmra.mrb[0].mxu0 %v3125
    %v3267 = vpop.f32.mrb[0].mxu0
    %v3268 = vadd.f32 0.0, %v3267
    %v3269 = vpop.f32.mrb[0].mxu0
    %3270 = vmatprep.mubr.f32.mxu0 0.0
    %3271 = vmatmul.mubr.f32.gmra.mrb[0].mxu0 %v3126
    %v3272 = vpop.f32.mrb[0].mxu0
    %v3273 = vadd.f32 0.0, %v3272
    %v3274 = vpop.f32.mrb[0].mxu0
    %3275 = vmatprep.mubr.f32.mxu0 0.0
    %3276 = vmatmul.mubr.f32.gmra.mrb[0].mxu0 %v3127
    %v3277 = vpop.f32.mrb[0].mxu0
    %v3278 = vadd.f32 0.0, %v3277
    %v3279 = vpop.f32.mrb[0].mxu0
    %3280 = vmatprep.mubr.f32.mxu0 0.0
    %3281 = vmatmul.mubr.f32.gmra.mrb[0].mxu0 %v3128
    %v3282 = vpop.f32.mrb[0].mxu0
    %v3283 = vadd.f32 0.0, %v3282
    %v3284 = vpop.f32.mrb[0].mxu0
    %3285 = vmatprep.mubr.f32.mxu0 0.0
    %3286 = vmatmul.mubr.f32.gmra.mrb[0].mxu0 %v3129
    %v3287 = vpop.f32.mrb[0].mxu0
    %v3288 = vadd.f32 0.0, %v3287
    %v3289 = vpop.f32.mrb[0].mxu0
    %3290 = vmatprep.mubr.f32.mxu0 0.0
    %3291 = vmatmul.mubr.f32.gmra.mrb[0].mxu0 %v3130
    %v3292 = vpop.f32.mrb[0].mxu0
    %v3293 = vadd.f32 0.0, %v3292
    %v3294 = vpop.f32.mrb[0].mxu0
    %3295 = vmatprep.mubr.f32.mxu0 0.0
    %3296 = vmatmul.mubr.f32.gmra.mrb[0].mxu0 %v3131
    %v3297 = vpop.f32.mrb[0].mxu0
    %v3298 = vadd.f32 0.0, %v3297
    %v3299 = vpop.f32.mrb[0].mxu0
    %3300 = vmatprep.mubr.f32.mxu0 0.0
    %3301 = vmatmul.mubr.f32.gmra.mrb[0].mxu0 %v3132
    %v3302 = vpop.f32.mrb[0].mxu0
    %v3303 = vadd.f32 0.0, %v3302
    %v3304 = vpop.f32.mrb[0].mxu0
    %3305 = vmatprep.mubr.f32.mxu0 0.0
    %3306 = vmatmul.mubr.f32.gmra.mrb[0].mxu0 %v3133
    %v3307 = vpop.f32.mrb[0].mxu0
    %v3308 = vadd.f32 0.0, %v3307
    %v3309 = vpop.f32.mrb[0].mxu0
    %3310 = vmatprep.mubr.f32.mxu0 0.0
    %3311 = vmatmul.mubr.f32.gmra.mrb[0].mxu0 %v3134
    %v3312 = vpop.f32.mrb[0].mxu0
    %v3313 = vadd.f32 0.0, %v3312
    %v3314 = vpop.f32.mrb[0].mxu0
    %3315 = vmatprep.mubr.f32.mxu0 0.0
    %3316 = vmatmul.mubr.f32.gmra.mrb[0].mxu0 %v3135
    %v3317 = vpop.f32.mrb[0].mxu0
    %v3318 = vadd.f32 0.0, %v3317
    %v3319 = vpop.f32.mrb[0].mxu0
    %3320 = vmatprep.mubr.f32.mxu0 0.0
    %3321 = vmatmul.mubr.f32.gmra.mrb[0].mxu0 %v3136
    %v3322 = vpop.f32.mrb[0].mxu0
    %v3323 = vadd.f32 0.0, %v3322
    %v3324 = vpop.f32.mrb[0].mxu0
    %3325 = vmatprep.mubr.f32.mxu0 0.0
    %3326 = vmatmul.mubr.f32.gmra.mrb[0].mxu0 %v3137
    %v3327 = vpop.f32.mrb[0].mxu0
    %v3328 = vadd.f32 0.0, %v3327
    %v3329 = vpop.f32.mrb[0].mxu0
    %3330 = vdwg.mxu0
    %3331 = vmatprep.subr.mxu0 0.0
    %3332 = vmatpush1.msra.mxu0 %v3154
    %3333 = vmatprep.subr.mxu0 0.0
    %3334 = vmatpush1.msra.mxu0 %v3155
    %3335 = vmatprep.subr.mxu0 0.0
    %3336 = vmatpush1.msra.mxu0 %v3156
    %3337 = vmatprep.subr.mxu0 0.0
    %3338 = vmatpush1.msra.mxu0 %v3157
    %3339 = vmatprep.subr.mxu0 0.0
    %3340 = vmatpush1.msra.mxu0 %v3158
    %3341 = vmatprep.subr.mxu0 0.0
    %3342 = vmatpush1.msra.mxu0 %v3159
    %3343 = vmatprep.subr.mxu0 0.0
    %3344 = vmatpush1.msra.mxu0 %v3160
    %3345 = vmatprep.subr.mxu0 0.0
    %3346 = vmatpush1.msra.mxu0 %v3161
    %3347 = vmatprep.subr.mxu0 0.0
    %3348 = vmatpush1.msra.mxu0 %v3162
    %3349 = vmatprep.subr.mxu0 0.0
    %3350 = vmatpush1.msra.mxu0 %v3163
    %3351 = vmatprep.subr.mxu0 0.0
    %3352 = vmatpush1.msra.mxu0 %v3164
    %3353 = vmatprep.subr.mxu0 0.0
    %3354 = vmatpush1.msra.mxu0 %v3165
    %3355 = vmatprep.subr.mxu0 0.0
    %3356 = vmatpush1.msra.mxu0 %v3166
    %3357 = vmatprep.subr.mxu0 0.0
    %3358 = vmatpush1.msra.mxu0 %v3167
    %3359 = vmatprep.subr.mxu0 0.0
    %3360 = vmatpush1.msra.mxu0 %v3168
    %3361 = vmatprep.subr.mxu0 0.0
    %3362 = vmatpush1.msra.mxu0 %v3169
    %3363 = vmatprep.subr.mxu0 0.0
    %3364 = vmatpush1.msra.mxu0 0.0
    %3365 = vmatprep.subr.mxu0 0.0
    %3366 = vmatpush1.msra.mxu0 0.0
    %3367 = vmatprep.subr.mxu0 0.0
    %3368 = vmatpush1.msra.mxu0 0.0
    %3369 = vmatprep.subr.mxu0 0.0
    %3370 = vmatpush1.msra.mxu0 0.0
    %3371 = vmatprep.subr.mxu0 0.0
    %3372 = vmatpush1.msra.mxu0 0.0
    %3373 = vmatprep.subr.mxu0 0.0
    %3374 = vmatpush1.msra.mxu0 0.0
    %3375 = vmatprep.subr.mxu0 0.0
    %3376 = vmatpush1.msra.mxu0 0.0
    %3377 = vmatprep.subr.mxu0 0.0
    %3378 = vmatpush1.msra.mxu0 0.0
    %3379 = vmatprep.subr.mxu0 0.0
    %3380 = vmatpush1.msra.mxu0 0.0
    %3381 = vmatprep.subr.mxu0 0.0
    %3382 = vmatpush1.msra.mxu0 0.0
    %3383 = vmatprep.subr.mxu0 0.0
    %3384 = vmatpush1.msra.mxu0 0.0
    %3385 = vmatprep.subr.mxu0 0.0
    %3386 = vmatpush1.msra.mxu0 0.0
    %3387 = vmatprep.subr.mxu0 0.0
    %3388 = vmatpush1.msra.mxu0 0.0
    %3389 = vmatprep.subr.mxu0 0.0
    %3390 = vmatpush1.msra.mxu0 0.0
    %3391 = vmatprep.subr.mxu0 0.0
    %3392 = vmatpush1.msra.mxu0 0.0
    %3393 = vmatprep.subr.mxu0 0.0
    %3394 = vmatpush1.msra.mxu0 0.0
    %3395 = vmatprep.mubr.f32.mxu0 0.0
    %3396 = vmatmul.mubr.f32.gmra.mrb[0].mxu0 %v3122
    %v3397 = vpop.f32.mrb[0].mxu0
    %v3398 = vadd.f32 %v3253, %v3397
    %v3399 = vpop.f32.mrb[0].mxu0
    %3400 = vmatprep.mubr.f32.mxu0 0.0
    %3401 = vmatmul.mubr.f32.gmra.mrb[0].mxu0 %v3123
    %v3402 = vpop.f32.mrb[0].mxu0
    %v3403 = vadd.f32 %v3258, %v3402
    %v3404 = vpop.f32.mrb[0].mxu0
    %3405 = vmatprep.mubr.f32.mxu0 0.0
    %3406 = vmatmul.mubr.f32.gmra.mrb[0].mxu0 %v3124
    %v3407 = vpop.f32.mrb[0].mxu0
    %v3408 = vadd.f32 %v3263, %v3407
    %v3409 = vpop.f32.mrb[0].mxu0
    %3410 = vmatprep.mubr.f32.mxu0 0.0
    %3411 = vmatmul.mubr.f32.gmra.mrb[0].mxu0 %v3125
    %v3412 = vpop.f32.mrb[0].mxu0
    %v3413 = vadd.f32 %v3268, %v3412
    %v3414 = vpop.f32.mrb[0].mxu0
    %3415 = vmatprep.mubr.f32.mxu0 0.0
    %3416 = vmatmul.mubr.f32.gmra.mrb[0].mxu0 %v3126
    %v3417 = vpop.f32.mrb[0].mxu0
    %v3418 = vadd.f32 %v3273, %v3417
    %v3419 = vpop.f32.mrb[0].mxu0
    %3420 = vmatprep.mubr.f32.mxu0 0.0
    %3421 = vmatmul.mubr.f32.gmra.mrb[0].mxu0 %v3127
    %v3422 = vpop.f32.mrb[0].mxu0
    %v3423 = vadd.f32 %v3278, %v3422
    %v3424 = vpop.f32.mrb[0].mxu0
    %3425 = vmatprep.mubr.f32.mxu0 0.0
    %3426 = vmatmul.mubr.f32.gmra.mrb[0].mxu0 %v3128
    %v3427 = vpop.f32.mrb[0].mxu0
    %v3428 = vadd.f32 %v3283, %v3427
    %v3429 = vpop.f32.mrb[0].mxu0
    %3430 = vmatprep.mubr.f32.mxu0 0.0
    %3431 = vmatmul.mubr.f32.gmra.mrb[0].mxu0 %v3129
    %v3432 = vpop.f32.mrb[0].mxu0
    %v3433 = vadd.f32 %v3288, %v3432
    %v3434 = vpop.f32.mrb[0].mxu0
    %3435 = vmatprep.mubr.f32.mxu0 0.0
    %3436 = vmatmul.mubr.f32.gmra.mrb[0].mxu0 %v3130
    %v3437 = vpop.f32.mrb[0].mxu0
    %v3438 = vadd.f32 %v3293, %v3437
    %v3439 = vpop.f32.mrb[0].mxu0
    %3440 = vmatprep.mubr.f32.mxu0 0.0
    %3441 = vmatmul.mubr.f32.gmra.mrb[0].mxu0 %v3131
    %v3442 = vpop.f32.mrb[0].mxu0
    %v3443 = vadd.f32 %v3298, %v3442
    %v3444 = vpop.f32.mrb[0].mxu0
    %3445 = vmatprep.mubr.f32.mxu0 0.0
    %3446 = vmatmul.mubr.f32.gmra.mrb[0].mxu0 %v3132
    %v3447 = vpop.f32.mrb[0].mxu0
    %v3448 = vadd.f32 %v3303, %v3447
    %v3449 = vpop.f32.mrb[0].mxu0
    %3450 = vmatprep.mubr.f32.mxu0 0.0
    %3451 = vmatmul.mubr.f32.gmra.mrb[0].mxu0 %v3133
    %v3452 = vpop.f32.mrb[0].mxu0
    %v3453 = vadd.f32 %v3308, %v3452
    %v3454 = vpop.f32.mrb[0].mxu0
    %3455 = vmatprep.mubr.f32.mxu0 0.0
    %3456 = vmatmul.mubr.f32.gmra.mrb[0].mxu0 %v3134
    %v3457 = vpop.f32.mrb[0].mxu0
    %v3458 = vadd.f32 %v3313, %v3457
    %v3459 = vpop.f32.mrb[0].mxu0
    %3460 = vmatprep.mubr.f32.mxu0 0.0
    %3461 = vmatmul.mubr.f32.gmra.mrb[0].mxu0 %v3135
    %v3462 = vpop.f32.mrb[0].mxu0
    %v3463 = vadd.f32 %v3318, %v3462
    %v3464 = vpop.f32.mrb[0].mxu0
    %3465 = vmatprep.mubr.f32.mxu0 0.0
    %3466 = vmatmul.mubr.f32.gmra.mrb[0].mxu0 %v3136
    %v3467 = vpop.f32.mrb[0].mxu0
    %v3468 = vadd.f32 %v3323, %v3467
    %v3469 = vpop.f32.mrb[0].mxu0
    %3470 = vmatprep.mubr.f32.mxu0 0.0
    %3471 = vmatmul.mubr.f32.gmra.mrb[0].mxu0 %v3137
    %v3472 = vpop.f32.mrb[0].mxu0
    %v3473 = vadd.f32 %v3328, %v3472
    %v3474 = vpop.f32.mrb[0].mxu0
    %3475 = vdwg.mxu0
    %3476 = vmatprep.subr.mxu0 0.0
    %3477 = vmatpush1.msra.mxu0 %v3154
    %3478 = vmatprep.subr.mxu0 0.0
    %3479 = vmatpush1.msra.mxu0 %v3155
    %3480 = vmatprep.subr.mxu0 0.0
    %3481 = vmatpush1.msra.mxu0 %v3156
    %3482 = vmatprep.subr.mxu0 0.0
    %3483 = vmatpush1.msra.mxu0 %v3157
    %3484 = vmatprep.subr.mxu0 0.0
    %3485 = vmatpush1.msra.mxu0 %v3158
    %3486 = vmatprep.subr.mxu0 0.0
    %3487 = vmatpush1.msra.mxu0 %v3159
    %3488 = vmatprep.subr.mxu0 0.0
    %3489 = vmatpush1.msra.mxu0 %v3160
    %3490 = vmatprep.subr.mxu0 0.0
    %3491 = vmatpush1.msra.mxu0 %v3161
    %3492 = vmatprep.subr.mxu0 0.0
    %3493 = vmatpush1.msra.mxu0 %v3162
    %3494 = vmatprep.subr.mxu0 0.0
    %3495 = vmatpush1.msra.mxu0 %v3163
    %3496 = vmatprep.subr.mxu0 0.0
    %3497 = vmatpush1.msra.mxu0 %v3164
    %3498 = vmatprep.subr.mxu0 0.0
    %3499 = vmatpush1.msra.mxu0 %v3165
    %3500 = vmatprep.subr.mxu0 0.0
    %3501 = vmatpush1.msra.mxu0 %v3166
    %3502 = vmatprep.subr.mxu0 0.0
    %3503 = vmatpush1.msra.mxu0 %v3167
    %3504 = vmatprep.subr.mxu0 0.0
    %3505 = vmatpush1.msra.mxu0 %v3168
    %3506 = vmatprep.subr.mxu0 0.0
    %3507 = vmatpush1.msra.mxu0 %v3169
    %3508 = vmatprep.subr.mxu0 0.0
    %3509 = vmatpush1.msra.mxu0 0.0
    %3510 = vmatprep.subr.mxu0 0.0
    %3511 = vmatpush1.msra.mxu0 0.0
    %3512 = vmatprep.subr.mxu0 0.0
    %3513 = vmatpush1.msra.mxu0 0.0
    %3514 = vmatprep.subr.mxu0 0.0
    %3515 = vmatpush1.msra.mxu0 0.0
    %3516 = vmatprep.subr.mxu0 0.0
    %3517 = vmatpush1.msra.mxu0 0.0
    %3518 = vmatprep.subr.mxu0 0.0
    %3519 = vmatpush1.msra.mxu0 0.0
    %3520 = vmatprep.subr.mxu0 0.0
    %3521 = vmatpush1.msra.mxu0 0.0
    %3522 = vmatprep.subr.mxu0 0.0
    %3523 = vmatpush1.msra.mxu0 0.0
    %3524 = vmatprep.subr.mxu0 0.0
    %3525 = vmatpush1.msra.mxu0 0.0
    %3526 = vmatprep.subr.mxu0 0.0
    %3527 = vmatpush1.msra.mxu0 0.0
    %3528 = vmatprep.subr.mxu0 0.0
    %3529 = vmatpush1.msra.mxu0 0.0
    %3530 = vmatprep.subr.mxu0 0.0
    %3531 = vmatpush1.msra.mxu0 0.0
    %3532 = vmatprep.subr.mxu0 0.0
    %3533 = vmatpush1.msra.mxu0 0.0
    %3534 = vmatprep.subr.mxu0 0.0
    %3535 = vmatpush1.msra.mxu0 0.0
    %3536 = vmatprep.subr.mxu0 0.0
    %3537 = vmatpush1.msra.mxu0 0.0
    %3538 = vmatprep.subr.mxu0 0.0
    %3539 = vmatpush1.msra.mxu0 0.0
    %3540 = vmatprep.mubr.f32.mxu0 0.0
    %3541 = vmatmul.mubr.f32.gmra.mrb[0].mxu0 %v3138
    %v3542 = vpop.f32.mrb[0].mxu0
    %v3543 = vadd.f32 0.0, %v3542
    %v3544 = vpop.f32.mrb[0].mxu0
    %3545 = vmatprep.mubr.f32.mxu0 0.0
    %3546 = vmatmul.mubr.f32.gmra.mrb[0].mxu0 %v3139
    %v3547 = vpop.f32.mrb[0].mxu0
    %v3548 = vadd.f32 0.0, %v3547
    %v3549 = vpop.f32.mrb[0].mxu0
    %3550 = vmatprep.mubr.f32.mxu0 0.0
    %3551 = vmatmul.mubr.f32.gmra.mrb[0].mxu0 %v3140
    %v3552 = vpop.f32.mrb[0].mxu0
    %v3553 = vadd.f32 0.0, %v3552
    %v3554 = vpop.f32.mrb[0].mxu0
    %3555 = vmatprep.mubr.f32.mxu0 0.0
    %3556 = vmatmul.mubr.f32.gmra.mrb[0].mxu0 %v3141
    %v3557 = vpop.f32.mrb[0].mxu0
    %v3558 = vadd.f32 0.0, %v3557
    %v3559 = vpop.f32.mrb[0].mxu0
    %3560 = vmatprep.mubr.f32.mxu0 0.0
    %3561 = vmatmul.mubr.f32.gmra.mrb[0].mxu0 %v3142
    %v3562 = vpop.f32.mrb[0].mxu0
    %v3563 = vadd.f32 0.0, %v3562
    %v3564 = vpop.f32.mrb[0].mxu0
    %3565 = vmatprep.mubr.f32.mxu0 0.0
    %3566 = vmatmul.mubr.f32.gmra.mrb[0].mxu0 %v3143
    %v3567 = vpop.f32.mrb[0].mxu0
    %v3568 = vadd.f32 0.0, %v3567
    %v3569 = vpop.f32.mrb[0].mxu0
    %3570 = vmatprep.mubr.f32.mxu0 0.0
    %3571 = vmatmul.mubr.f32.gmra.mrb[0].mxu0 %v3144
    %v3572 = vpop.f32.mrb[0].mxu0
    %v3573 = vadd.f32 0.0, %v3572
    %v3574 = vpop.f32.mrb[0].mxu0
    %3575 = vmatprep.mubr.f32.mxu0 0.0
    %3576 = vmatmul.mubr.f32.gmra.mrb[0].mxu0 %v3145
    %v3577 = vpop.f32.mrb[0].mxu0
    %v3578 = vadd.f32 0.0, %v3577
    %v3579 = vpop.f32.mrb[0].mxu0
    %3580 = vmatprep.mubr.f32.mxu0 0.0
    %3581 = vmatmul.mubr.f32.gmra.mrb[0].mxu0 %v3146
    %v3582 = vpop.f32.mrb[0].mxu0
    %v3583 = vadd.f32 0.0, %v3582
    %v3584 = vpop.f32.mrb[0].mxu0
    %3585 = vmatprep.mubr.f32.mxu0 0.0
    %3586 = vmatmul.mubr.f32.gmra.mrb[0].mxu0 %v3147
    %v3587 = vpop.f32.mrb[0].mxu0
    %v3588 = vadd.f32 0.0, %v3587
    %v3589 = vpop.f32.mrb[0].mxu0
    %3590 = vmatprep.mubr.f32.mxu0 0.0
    %3591 = vmatmul.mubr.f32.gmra.mrb[0].mxu0 %v3148
    %v3592 = vpop.f32.mrb[0].mxu0
    %v3593 = vadd.f32 0.0, %v3592
    %v3594 = vpop.f32.mrb[0].mxu0
    %3595 = vmatprep.mubr.f32.mxu0 0.0
    %3596 = vmatmul.mubr.f32.gmra.mrb[0].mxu0 %v3149
    %v3597 = vpop.f32.mrb[0].mxu0
    %v3598 = vadd.f32 0.0, %v3597
    %v3599 = vpop.f32.mrb[0].mxu0
    %3600 = vmatprep.mubr.f32.mxu0 0.0
    %3601 = vmatmul.mubr.f32.gmra.mrb[0].mxu0 %v3150
    %v3602 = vpop.f32.mrb[0].mxu0
    %v3603 = vadd.f32 0.0, %v3602
    %v3604 = vpop.f32.mrb[0].mxu0
    %3605 = vmatprep.mubr.f32.mxu0 0.0
    %3606 = vmatmul.mubr.f32.gmra.mrb[0].mxu0 %v3151
    %v3607 = vpop.f32.mrb[0].mxu0
    %v3608 = vadd.f32 0.0, %v3607
    %v3609 = vpop.f32.mrb[0].mxu0
    %3610 = vmatprep.mubr.f32.mxu0 0.0
    %3611 = vmatmul.mubr.f32.gmra.mrb[0].mxu0 %v3152
    %v3612 = vpop.f32.mrb[0].mxu0
    %v3613 = vadd.f32 0.0, %v3612
    %v3614 = vpop.f32.mrb[0].mxu0
    %3615 = vmatprep.mubr.f32.mxu0 0.0
    %3616 = vmatmul.mubr.f32.gmra.mrb[0].mxu0 %v3153
    %v3617 = vpop.f32.mrb[0].mxu0
    %v3618 = vadd.f32 0.0, %v3617
    %v3619 = vpop.f32.mrb[0].mxu0
    %3620 = vdwg.mxu0
    %v3621 = vadd.f32 %v3398, %v3543
    %v3622 = vadd.f32 %v3403, %v3548
    %v3623 = vadd.f32 %v3408, %v3553
    %v3624 = vadd.f32 %v3413, %v3558
    %v3625 = vadd.f32 %v3418, %v3563
    %v3626 = vadd.f32 %v3423, %v3568
    %v3627 = vadd.f32 %v3428, %v3573
    %v3628 = vadd.f32 %v3433, %v3578
    %v3629 = vadd.f32 %v3438, %v3583
    %v3630 = vadd.f32 %v3443, %v3588
    %v3631 = vadd.f32 %v3448, %v3593
    %v3632 = vadd.f32 %v3453, %v3598
    %v3633 = vadd.f32 %v3458, %v3603
    %v3634 = vadd.f32 %v3463, %v3608
    %v3635 = vadd.f32 %v3468, %v3613
    %v3636 = vadd.f32 %v3473, %v3618
    %v3637 = vld [vmem:[%s8] sm:$0x1]
    %v3639 = vlaneseq
    %v3640 = vshrl.u32 %v3639, 7
    %v3641 = vsub.s32 0, %v3640
    %v3642 = vrot.slane %v3637, %v3641
    %v3644 = vadd.f32 %v3621, %v3642
    %v3645 = vadd.f32 %v3622, %v3642
    %v3646 = vadd.f32 %v3623, %v3642
    %v3647 = vadd.f32 %v3624, %v3642
    %v3648 = vadd.f32 %v3625, %v3642
    %v3649 = vadd.f32 %v3626, %v3642
    %v3650 = vadd.f32 %v3627, %v3642
    %v3651 = vadd.f32 %v3628, %v3642
    %v3652 = vadd.f32 %v3629, %v3642
    %v3653 = vadd.f32 %v3630, %v3642
    %v3654 = vadd.f32 %v3631, %v3642
    %v3655 = vadd.f32 %v3632, %v3642
    %v3656 = vadd.f32 %v3633, %v3642
    %v3657 = vadd.f32 %v3634, %v3642
    %v3658 = vadd.f32 %v3635, %v3642
    %v3659 = vadd.f32 %v3636, %v3642
    %v3660 = vmul.f32 %v3644, 0.5
    %v3661 = vmul.f32 %v3645, 0.5
    %v3662 = vmul.f32 %v3646, 0.5
    %v3663 = vmul.f32 %v3647, 0.5
    %v3664 = vmul.f32 %v3648, 0.5
    %v3665 = vmul.f32 %v3649, 0.5
    %v3666 = vmul.f32 %v3650, 0.5
    %v3667 = vmul.f32 %v3651, 0.5
    %v3668 = vmul.f32 %v3652, 0.5
    %v3669 = vmul.f32 %v3653, 0.5
    %v3670 = vmul.f32 %v3654, 0.5
    %v3671 = vmul.f32 %v3655, 0.5
    %v3672 = vmul.f32 %v3656, 0.5
    %v3673 = vmul.f32 %v3657, 0.5
    %v3674 = vmul.f32 %v3658, 0.5
    %v3675 = vmul.f32 %v3659, 0.5
    %v3676 = vmul.f32 %v3644, %v3644
    %v3677 = vmul.f32 %v3645, %v3645
    %v3678 = vmul.f32 %v3646, %v3646
    %v3679 = vmul.f32 %v3647, %v3647
    %v3680 = vmul.f32 %v3648, %v3648
    %v3681 = vmul.f32 %v3649, %v3649
    %v3682 = vmul.f32 %v3650, %v3650
    %v3683 = vmul.f32 %v3651, %v3651
    %v3684 = vmul.f32 %v3652, %v3652
    %v3685 = vmul.f32 %v3653, %v3653
    %v3686 = vmul.f32 %v3654, %v3654
    %v3687 = vmul.f32 %v3655, %v3655
    %v3688 = vmul.f32 %v3656, %v3656
    %v3689 = vmul.f32 %v3657, %v3657
    %v3690 = vmul.f32 %v3658, %v3658
    %v3691 = vmul.f32 %v3659, %v3659
    %v3692 = vmul.f32 %v3676, %v3644
    %v3693 = vmul.f32 %v3677, %v3645
    %v3694 = vmul.f32 %v3678, %v3646
    %v3695 = vmul.f32 %v3679, %v3647
    %v3696 = vmul.f32 %v3680, %v3648
    %v3697 = vmul.f32 %v3681, %v3649
    %v3698 = vmul.f32 %v3682, %v3650
    %v3699 = vmul.f32 %v3683, %v3651
    %v3700 = vmul.f32 %v3684, %v3652
    %v3701 = vmul.f32 %v3685, %v3653
    %v3702 = vmul.f32 %v3686, %v3654
    %v3703 = vmul.f32 %v3687, %v3655
    %v3704 = vmul.f32 %v3688, %v3656
    %v3705 = vmul.f32 %v3689, %v3657
    %v3706 = vmul.f32 %v3690, %v3658
    %v3707 = vmul.f32 %v3691, %v3659
    %v3708 = vmul.f32 %v3692, 0.044715
    %v3709 = vmul.f32 %v3693, 0.044715
    %v3710 = vmul.f32 %v3694, 0.044715
    %v3711 = vmul.f32 %v3695, 0.044715
    %v3712 = vmul.f32 %v3696, 0.044715
    %v3713 = vmul.f32 %v3697, 0.044715
    %v3714 = vmul.f32 %v3698, 0.044715
    %v3715 = vmul.f32 %v3699, 0.044715
    %v3716 = vmul.f32 %v3700, 0.044715
    %v3717 = vmul.f32 %v3701, 0.044715
    %v3718 = vmul.f32 %v3702, 0.044715
    %v3719 = vmul.f32 %v3703, 0.044715
    %v3720 = vmul.f32 %v3704, 0.044715
    %v3721 = vmul.f32 %v3705, 0.044715
    %v3722 = vmul.f32 %v3706, 0.044715
    %v3723 = vmul.f32 %v3707, 0.044715
    %v3724 = vadd.f32 %v3644, %v3708
    %v3725 = vadd.f32 %v3645, %v3709
    %v3726 = vadd.f32 %v3646, %v3710
    %v3727 = vadd.f32 %v3647, %v3711
    %v3728 = vadd.f32 %v3648, %v3712
    %v3729 = vadd.f32 %v3649, %v3713
    %v3730 = vadd.f32 %v3650, %v3714
    %v3731 = vadd.f32 %v3651, %v3715
    %v3732 = vadd.f32 %v3652, %v3716
    %v3733 = vadd.f32 %v3653, %v3717
    %v3734 = vadd.f32 %v3654, %v3718
    %v3735 = vadd.f32 %v3655, %v3719
    %v3736 = vadd.f32 %v3656, %v3720
    %v3737 = vadd.f32 %v3657, %v3721
    %v3738 = vadd.f32 %v3658, %v3722
    %v3739 = vadd.f32 %v3659, %v3723
    %v3740 = vmul.f32 %v3724, 0.7978846
    %v3741 = vmul.f32 %v3725, 0.7978846
    %v3742 = vmul.f32 %v3726, 0.7978846
    %v3743 = vmul.f32 %v3727, 0.7978846
    %v3744 = vmul.f32 %v3728, 0.7978846
    %v3745 = vmul.f32 %v3729, 0.7978846
    %v3746 = vmul.f32 %v3730, 0.7978846
    %v3747 = vmul.f32 %v3731, 0.7978846
    %v3748 = vmul.f32 %v3732, 0.7978846
    %v3749 = vmul.f32 %v3733, 0.7978846
    %v3750 = vmul.f32 %v3734, 0.7978846
    %v3751 = vmul.f32 %v3735, 0.7978846
    %v3752 = vmul.f32 %v3736, 0.7978846
    %v3753 = vmul.f32 %v3737, 0.7978846
    %v3754 = vmul.f32 %v3738, 0.7978846
    %v3755 = vmul.f32 %v3739, 0.7978846
    %v3756 = vtanh.pop %v3740
    %v3757 = vtanh.pop %v3741
    %v3758 = vtanh.pop %v3742
    %v3759 = vtanh.pop %v3743
    %v3760 = vtanh.pop %v3744
    %v3761 = vtanh.pop %v3745
    %v3762 = vtanh.pop %v3746
    %v3763 = vtanh.pop %v3747
    %v3764 = vtanh.pop %v3748
    %v3765 = vtanh.pop %v3749
    %v3766 = vtanh.pop %v3750
    %v3767 = vtanh.pop %v3751
    %v3768 = vtanh.pop %v3752
    %v3769 = vtanh.pop %v3753
    %v3770 = vtanh.pop %v3754
    %v3771 = vtanh.pop %v3755
    %v3772 = vadd.f32 %v3756, 1.0
    %v3773 = vadd.f32 %v3757, 1.0
    %v3774 = vadd.f32 %v3758, 1.0
    %v3775 = vadd.f32 %v3759, 1.0
    %v3776 = vadd.f32 %v3760, 1.0
    %v3777 = vadd.f32 %v3761, 1.0
    %v3778 = vadd.f32 %v3762, 1.0
    %v3779 = vadd.f32 %v3763, 1.0
    %v3780 = vadd.f32 %v3764, 1.0
    %v3781 = vadd.f32 %v3765, 1.0
    %v3782 = vadd.f32 %v3766, 1.0
    %v3783 = vadd.f32 %v3767, 1.0
    %v3784 = vadd.f32 %v3768, 1.0
    %v3785 = vadd.f32 %v3769, 1.0
    %v3786 = vadd.f32 %v3770, 1.0
    %v3787 = vadd.f32 %v3771, 1.0
    %v3788 = vmul.f32 %v3660, %v3772
    %v3789 = vmul.f32 %v3661, %v3773
    %v3790 = vmul.f32 %v3662, %v3774
    %v3791 = vmul.f32 %v3663, %v3775
    %v3792 = vmul.f32 %v3664, %v3776
    %v3793 = vmul.f32 %v3665, %v3777
    %v3794 = vmul.f32 %v3666, %v3778
    %v3795 = vmul.f32 %v3667, %v3779
    %v3796 = vmul.f32 %v3668, %v3780
    %v3797 = vmul.f32 %v3669, %v3781
    %v3798 = vmul.f32 %v3670, %v3782
    %v3799 = vmul.f32 %v3671, %v3783
    %v3800 = vmul.f32 %v3672, %v3784
    %v3801 = vmul.f32 %v3673, %v3785
    %v3802 = vmul.f32 %v3674, %v3786
    %v3803 = vmul.f32 %v3675, %v3787
    %v3804 = vpack.c.bf16 %v3789, %v3788
    %v3805 = vpack.c.bf16 %v3791, %v3790
    %v3806 = vpack.c.bf16 %v3793, %v3792
    %v3807 = vpack.c.bf16 %v3795, %v3794
    %v3808 = vpack.c.bf16 %v3797, %v3796
    %v3809 = vpack.c.bf16 %v3799, %v3798
    %v3810 = vpack.c.bf16 %v3801, %v3800
    %v3811 = vpack.c.bf16 %v3803, %v3802
    %v3812 = vunpack.c.l.bf16 %v3804
    %v3813 = vunpack.c.h.bf16 %v3804
    %v3814 = vunpack.c.l.bf16 %v3805
    %v3815 = vunpack.c.h.bf16 %v3805
    %v3816 = vunpack.c.l.bf16 %v3806
    %v3817 = vunpack.c.h.bf16 %v3806
    %v3818 = vunpack.c.l.bf16 %v3807
    %v3819 = vunpack.c.h.bf16 %v3807
    %v3820 = vunpack.c.l.bf16 %v3808
    %v3821 = vunpack.c.h.bf16 %v3808
    %v3822 = vunpack.c.l.bf16 %v3809
    %v3823 = vunpack.c.h.bf16 %v3809
    %v3824 = vunpack.c.l.bf16 %v3810
    %v3825 = vunpack.c.h.bf16 %v3810
    %v3826 = vunpack.c.l.bf16 %v3811
    %v3827 = vunpack.c.h.bf16 %v3811
    %v3828 = vsub.f32 %v3788, %v3812
    %v3829 = vsub.f32 %v3789, %v3813
    %v3830 = vsub.f32 %v3790, %v3814
    %v3831 = vsub.f32 %v3791, %v3815
    %v3832 = vsub.f32 %v3792, %v3816
    %v3833 = vsub.f32 %v3793, %v3817
    %v3834 = vsub.f32 %v3794, %v3818
    %v3835 = vsub.f32 %v3795, %v3819
    %v3836 = vsub.f32 %v3796, %v3820
    %v3837 = vsub.f32 %v3797, %v3821
    %v3838 = vsub.f32 %v3798, %v3822
    %v3839 = vsub.f32 %v3799, %v3823
    %v3840 = vsub.f32 %v3800, %v3824
    %v3841 = vsub.f32 %v3801, %v3825
    %v3842 = vsub.f32 %v3802, %v3826
    %v3843 = vsub.f32 %v3803, %v3827
    %v3844 = vld [vmem:[#allocation7] sm:$0xff]
    %v3845 = vld [vmem:[#allocation7 + $0x8] sm:$0xff]
    %v3846 = vld [vmem:[#allocation7 + $0x10] sm:$0xff]
    %v3847 = vld [vmem:[#allocation7 + $0x18] sm:$0xff]
    %v3848 = vld [vmem:[#allocation7 + $0x20] sm:$0xff]
    %v3849 = vld [vmem:[#allocation7 + $0x28] sm:$0xff]
    %v3850 = vld [vmem:[#allocation7 + $0x30] sm:$0xff]
    %v3851 = vld [vmem:[#allocation7 + $0x38] sm:$0xff]
    %v3852 = vld [vmem:[#allocation7 + $0x40] sm:$0xff]
    %v3853 = vld [vmem:[#allocation7 + $0x48] sm:$0xff]
    %v3854 = vld [vmem:[#allocation7 + $0x50] sm:$0xff]
    %v3855 = vld [vmem:[#allocation7 + $0x58] sm:$0xff]
    %v3856 = vld [vmem:[#allocation7 + $0x60] sm:$0xff]
    %v3857 = vld [vmem:[#allocation7 + $0x68] sm:$0xff]
    %v3858 = vld [vmem:[#allocation7 + $0x70] sm:$0xff]
    %v3859 = vld [vmem:[#allocation7 + $0x78] sm:$0xff]
    %v3860 = vld [vmem:[#allocation9] sm:$0xff]
    %v3861 = vld [vmem:[#allocation9 + $0x8] sm:$0xff]
    %v3862 = vld [vmem:[#allocation9 + $0x10] sm:$0xff]
    %v3863 = vld [vmem:[#allocation9 + $0x18] sm:$0xff]
    %v3864 = vld [vmem:[#allocation9 + $0x20] sm:$0xff]
    %v3865 = vld [vmem:[#allocation9 + $0x28] sm:$0xff]
    %v3866 = vld [vmem:[#allocation9 + $0x30] sm:$0xff]
    %v3867 = vld [vmem:[#allocation9 + $0x38] sm:$0xff]
    %v3868 = vld [vmem:[#allocation9 + $0x40] sm:$0xff]
    %v3869 = vld [vmem:[#allocation9 + $0x48] sm:$0xff]
    %v3870 = vld [vmem:[#allocation9 + $0x50] sm:$0xff]
    %v3871 = vld [vmem:[#allocation9 + $0x58] sm:$0xff]
    %v3872 = vld [vmem:[#allocation9 + $0x60] sm:$0xff]
    %v3873 = vld [vmem:[#allocation9 + $0x68] sm:$0xff]
    %v3874 = vld [vmem:[#allocation9 + $0x70] sm:$0xff]
    %v3875 = vld [vmem:[#allocation9 + $0x78] sm:$0xff]
    %3876 = vmatprep.subr.mxu0 0.0
    %3877 = vmatpush1.msra.mxu0 %v3860
    %3878 = vmatprep.subr.mxu0 0.0
    %3879 = vmatpush1.msra.mxu0 %v3861
    %3880 = vmatprep.subr.mxu0 0.0
    %3881 = vmatpush1.msra.mxu0 %v3862
    %3882 = vmatprep.subr.mxu0 0.0
    %3883 = vmatpush1.msra.mxu0 %v3863
    %3884 = vmatprep.subr.mxu0 0.0
    %3885 = vmatpush1.msra.mxu0 %v3864
    %3886 = vmatprep.subr.mxu0 0.0
    %3887 = vmatpush1.msra.mxu0 %v3865
    %3888 = vmatprep.subr.mxu0 0.0
    %3889 = vmatpush1.msra.mxu0 %v3866
    %3890 = vmatprep.subr.mxu0 0.0
    %3891 = vmatpush1.msra.mxu0 %v3867
    %3892 = vmatprep.subr.mxu0 0.0
    %3893 = vmatpush1.msra.mxu0 %v3868
    %3894 = vmatprep.subr.mxu0 0.0
    %3895 = vmatpush1.msra.mxu0 %v3869
    %3896 = vmatprep.subr.mxu0 0.0
    %3897 = vmatpush1.msra.mxu0 %v3870
    %3898 = vmatprep.subr.mxu0 0.0
    %3899 = vmatpush1.msra.mxu0 %v3871
    %3900 = vmatprep.subr.mxu0 0.0
    %3901 = vmatpush1.msra.mxu0 %v3872
    %3902 = vmatprep.subr.mxu0 0.0
    %3903 = vmatpush1.msra.mxu0 %v3873
    %3904 = vmatprep.subr.mxu0 0.0
    %3905 = vmatpush1.msra.mxu0 %v3874
    %3906 = vmatprep.subr.mxu0 0.0
    %3907 = vmatpush1.msra.mxu0 %v3875
    %3908 = vmatprep.subr.mxu0 0.0
    %3909 = vmatpush1.msra.mxu0 0.0
    %3910 = vmatprep.subr.mxu0 0.0
    %3911 = vmatpush1.msra.mxu0 0.0
    %3912 = vmatprep.subr.mxu0 0.0
    %3913 = vmatpush1.msra.mxu0 0.0
    %3914 = vmatprep.subr.mxu0 0.0
    %3915 = vmatpush1.msra.mxu0 0.0
    %3916 = vmatprep.subr.mxu0 0.0
    %3917 = vmatpush1.msra.mxu0 0.0
    %3918 = vmatprep.subr.mxu0 0.0
    %3919 = vmatpush1.msra.mxu0 0.0
    %3920 = vmatprep.subr.mxu0 0.0
    %3921 = vmatpush1.msra.mxu0 0.0
    %3922 = vmatprep.subr.mxu0 0.0
    %3923 = vmatpush1.msra.mxu0 0.0
    %3924 = vmatprep.subr.mxu0 0.0
    %3925 = vmatpush1.msra.mxu0 0.0
    %3926 = vmatprep.subr.mxu0 0.0
    %3927 = vmatpush1.msra.mxu0 0.0
    %3928 = vmatprep.subr.mxu0 0.0
    %3929 = vmatpush1.msra.mxu0 0.0
    %3930 = vmatprep.subr.mxu0 0.0
    %3931 = vmatpush1.msra.mxu0 0.0
    %3932 = vmatprep.subr.mxu0 0.0
    %3933 = vmatpush1.msra.mxu0 0.0
    %3934 = vmatprep.subr.mxu0 0.0
    %3935 = vmatpush1.msra.mxu0 0.0
    %3936 = vmatprep.subr.mxu0 0.0
    %3937 = vmatpush1.msra.mxu0 0.0
    %3938 = vmatprep.subr.mxu0 0.0
    %3939 = vmatpush1.msra.mxu0 0.0
    %3940 = vmatprep.mubr.f32.mxu0 0.0
    %3941 = vmatmul.mubr.f32.gmra.mrb[0].mxu0 %v3812
    %v3942 = vpop.f32.mrb[0].mxu0
    %v3943 = vadd.f32 0.0, %v3942
    %v3944 = vpop.f32.mrb[0].mxu0
    %3945 = vmatprep.mubr.f32.mxu0 0.0
    %3946 = vmatmul.mubr.f32.gmra.mrb[0].mxu0 %v3813
    %v3947 = vpop.f32.mrb[0].mxu0
    %v3948 = vadd.f32 0.0, %v3947
    %v3949 = vpop.f32.mrb[0].mxu0
    %3950 = vmatprep.mubr.f32.mxu0 0.0
    %3951 = vmatmul.mubr.f32.gmra.mrb[0].mxu0 %v3814
    %v3952 = vpop.f32.mrb[0].mxu0
    %v3953 = vadd.f32 0.0, %v3952
    %v3954 = vpop.f32.mrb[0].mxu0
    %3955 = vmatprep.mubr.f32.mxu0 0.0
    %3956 = vmatmul.mubr.f32.gmra.mrb[0].mxu0 %v3815
    %v3957 = vpop.f32.mrb[0].mxu0
    %v3958 = vadd.f32 0.0, %v3957
    %v3959 = vpop.f32.mrb[0].mxu0
    %3960 = vmatprep.mubr.f32.mxu0 0.0
    %3961 = vmatmul.mubr.f32.gmra.mrb[0].mxu0 %v3816
    %v3962 = vpop.f32.mrb[0].mxu0
    %v3963 = vadd.f32 0.0, %v3962
    %v3964 = vpop.f32.mrb[0].mxu0
    %3965 = vmatprep.mubr.f32.mxu0 0.0
    %3966 = vmatmul.mubr.f32.gmra.mrb[0].mxu0 %v3817
    %v3967 = vpop.f32.mrb[0].mxu0
    %v3968 = vadd.f32 0.0, %v3967
    %v3969 = vpop.f32.mrb[0].mxu0
    %3970 = vmatprep.mubr.f32.mxu0 0.0
    %3971 = vmatmul.mubr.f32.gmra.mrb[0].mxu0 %v3818
    %v3972 = vpop.f32.mrb[0].mxu0
    %v3973 = vadd.f32 0.0, %v3972
    %v3974 = vpop.f32.mrb[0].mxu0
    %3975 = vmatprep.mubr.f32.mxu0 0.0
    %3976 = vmatmul.mubr.f32.gmra.mrb[0].mxu0 %v3819
    %v3977 = vpop.f32.mrb[0].mxu0
    %v3978 = vadd.f32 0.0, %v3977
    %v3979 = vpop.f32.mrb[0].mxu0
    %3980 = vmatprep.mubr.f32.mxu0 0.0
    %3981 = vmatmul.mubr.f32.gmra.mrb[0].mxu0 %v3820
    %v3982 = vpop.f32.mrb[0].mxu0
    %v3983 = vadd.f32 0.0, %v3982
    %v3984 = vpop.f32.mrb[0].mxu0
    %3985 = vmatprep.mubr.f32.mxu0 0.0
    %3986 = vmatmul.mubr.f32.gmra.mrb[0].mxu0 %v3821
    %v3987 = vpop.f32.mrb[0].mxu0
    %v3988 = vadd.f32 0.0, %v3987
    %v3989 = vpop.f32.mrb[0].mxu0
    %3990 = vmatprep.mubr.f32.mxu0 0.0
    %3991 = vmatmul.mubr.f32.gmra.mrb[0].mxu0 %v3822
    %v3992 = vpop.f32.mrb[0].mxu0
    %v3993 = vadd.f32 0.0, %v3992
    %v3994 = vpop.f32.mrb[0].mxu0
    %3995 = vmatprep.mubr.f32.mxu0 0.0
    %3996 = vmatmul.mubr.f32.gmra.mrb[0].mxu0 %v3823
    %v3997 = vpop.f32.mrb[0].mxu0
    %v3998 = vadd.f32 0.0, %v3997
    %v3999 = vpop.f32.mrb[0].mxu0
    %4000 = vmatprep.mubr.f32.mxu0 0.0
    %4001 = vmatmul.mubr.f32.gmra.mrb[0].mxu0 %v3824
    %v4002 = vpop.f32.mrb[0].mxu0
    %v4003 = vadd.f32 0.0, %v4002
    %v4004 = vpop.f32.mrb[0].mxu0
    %4005 = vmatprep.mubr.f32.mxu0 0.0
    %4006 = vmatmul.mubr.f32.gmra.mrb[0].mxu0 %v3825
    %v4007 = vpop.f32.mrb[0].mxu0
    %v4008 = vadd.f32 0.0, %v4007
    %v4009 = vpop.f32.mrb[0].mxu0
    %4010 = vmatprep.mubr.f32.mxu0 0.0
    %4011 = vmatmul.mubr.f32.gmra.mrb[0].mxu0 %v3826
    %v4012 = vpop.f32.mrb[0].mxu0
    %v4013 = vadd.f32 0.0, %v4012
    %v4014 = vpop.f32.mrb[0].mxu0
    %4015 = vmatprep.mubr.f32.mxu0 0.0
    %4016 = vmatmul.mubr.f32.gmra.mrb[0].mxu0 %v3827
    %v4017 = vpop.f32.mrb[0].mxu0
    %v4018 = vadd.f32 0.0, %v4017
    %v4019 = vpop.f32.mrb[0].mxu0
    %4020 = vdwg.mxu0
    %4021 = vmatprep.subr.mxu0 0.0
    %4022 = vmatpush1.msra.mxu0 %v3844
    %4023 = vmatprep.subr.mxu0 0.0
    %4024 = vmatpush1.msra.mxu0 %v3845
    %4025 = vmatprep.subr.mxu0 0.0
    %4026 = vmatpush1.msra.mxu0 %v3846
    %4027 = vmatprep.subr.mxu0 0.0
    %4028 = vmatpush1.msra.mxu0 %v3847
    %4029 = vmatprep.subr.mxu0 0.0
    %4030 = vmatpush1.msra.mxu0 %v3848
    %4031 = vmatprep.subr.mxu0 0.0
    %4032 = vmatpush1.msra.mxu0 %v3849
    %4033 = vmatprep.subr.mxu0 0.0
    %4034 = vmatpush1.msra.mxu0 %v3850
    %4035 = vmatprep.subr.mxu0 0.0
    %4036 = vmatpush1.msra.mxu0 %v3851
    %4037 = vmatprep.subr.mxu0 0.0
    %4038 = vmatpush1.msra.mxu0 %v3852
    %4039 = vmatprep.subr.mxu0 0.0
    %4040 = vmatpush1.msra.mxu0 %v3853
    %4041 = vmatprep.subr.mxu0 0.0
    %4042 = vmatpush1.msra.mxu0 %v3854
    %4043 = vmatprep.subr.mxu0 0.0
    %4044 = vmatpush1.msra.mxu0 %v3855
    %4045 = vmatprep.subr.mxu0 0.0
    %4046 = vmatpush1.msra.mxu0 %v3856
    %4047 = vmatprep.subr.mxu0 0.0
    %4048 = vmatpush1.msra.mxu0 %v3857
    %4049 = vmatprep.subr.mxu0 0.0
    %4050 = vmatpush1.msra.mxu0 %v3858
    %4051 = vmatprep.subr.mxu0 0.0
    %4052 = vmatpush1.msra.mxu0 %v3859
    %4053 = vmatprep.subr.mxu0 0.0
    %4054 = vmatpush1.msra.mxu0 0.0
    %4055 = vmatprep.subr.mxu0 0.0
    %4056 = vmatpush1.msra.mxu0 0.0
    %4057 = vmatprep.subr.mxu0 0.0
    %4058 = vmatpush1.msra.mxu0 0.0
    %4059 = vmatprep.subr.mxu0 0.0
    %4060 = vmatpush1.msra.mxu0 0.0
    %4061 = vmatprep.subr.mxu0 0.0
    %4062 = vmatpush1.msra.mxu0 0.0
    %4063 = vmatprep.subr.mxu0 0.0
    %4064 = vmatpush1.msra.mxu0 0.0
    %4065 = vmatprep.subr.mxu0 0.0
    %4066 = vmatpush1.msra.mxu0 0.0
    %4067 = vmatprep.subr.mxu0 0.0
    %4068 = vmatpush1.msra.mxu0 0.0
    %4069 = vmatprep.subr.mxu0 0.0
    %4070 = vmatpush1.msra.mxu0 0.0
    %4071 = vmatprep.subr.mxu0 0.0
    %4072 = vmatpush1.msra.mxu0 0.0
    %4073 = vmatprep.subr.mxu0 0.0
    %4074 = vmatpush1.msra.mxu0 0.0
    %4075 = vmatprep.subr.mxu0 0.0
    %4076 = vmatpush1.msra.mxu0 0.0
    %4077 = vmatprep.subr.mxu0 0.0
    %4078 = vmatpush1.msra.mxu0 0.0
    %4079 = vmatprep.subr.mxu0 0.0
    %4080 = vmatpush1.msra.mxu0 0.0
    %4081 = vmatprep.subr.mxu0 0.0
    %4082 = vmatpush1.msra.mxu0 0.0
    %4083 = vmatprep.subr.mxu0 0.0
    %4084 = vmatpush1.msra.mxu0 0.0
    %4085 = vmatprep.mubr.f32.mxu0 0.0
    %4086 = vmatmul.mubr.f32.gmra.mrb[0].mxu0 %v3812
    %v4087 = vpop.f32.mrb[0].mxu0
    %v4088 = vadd.f32 %v3943, %v4087
    %v4089 = vpop.f32.mrb[0].mxu0
    %4090 = vmatprep.mubr.f32.mxu0 0.0
    %4091 = vmatmul.mubr.f32.gmra.mrb[0].mxu0 %v3813
    %v4092 = vpop.f32.mrb[0].mxu0
    %v4093 = vadd.f32 %v3948, %v4092
    %v4094 = vpop.f32.mrb[0].mxu0
    %4095 = vmatprep.mubr.f32.mxu0 0.0
    %4096 = vmatmul.mubr.f32.gmra.mrb[0].mxu0 %v3814
    %v4097 = vpop.f32.mrb[0].mxu0
    %v4098 = vadd.f32 %v3953, %v4097
    %v4099 = vpop.f32.mrb[0].mxu0
    %4100 = vmatprep.mubr.f32.mxu0 0.0
    %4101 = vmatmul.mubr.f32.gmra.mrb[0].mxu0 %v3815
    %v4102 = vpop.f32.mrb[0].mxu0
    %v4103 = vadd.f32 %v3958, %v4102
    %v4104 = vpop.f32.mrb[0].mxu0
    %4105 = vmatprep.mubr.f32.mxu0 0.0
    %4106 = vmatmul.mubr.f32.gmra.mrb[0].mxu0 %v3816
    %v4107 = vpop.f32.mrb[0].mxu0
    %v4108 = vadd.f32 %v3963, %v4107
    %v4109 = vpop.f32.mrb[0].mxu0
    %4110 = vmatprep.mubr.f32.mxu0 0.0
    %4111 = vmatmul.mubr.f32.gmra.mrb[0].mxu0 %v3817
    %v4112 = vpop.f32.mrb[0].mxu0
    %v4113 = vadd.f32 %v3968, %v4112
    %v4114 = vpop.f32.mrb[0].mxu0
    %4115 = vmatprep.mubr.f32.mxu0 0.0
    %4116 = vmatmul.mubr.f32.gmra.mrb[0].mxu0 %v3818
    %v4117 = vpop.f32.mrb[0].mxu0
    %v4118 = vadd.f32 %v3973, %v4117
    %v4119 = vpop.f32.mrb[0].mxu0
    %4120 = vmatprep.mubr.f32.mxu0 0.0
    %4121 = vmatmul.mubr.f32.gmra.mrb[0].mxu0 %v3819
    %v4122 = vpop.f32.mrb[0].mxu0
    %v4123 = vadd.f32 %v3978, %v4122
    %v4124 = vpop.f32.mrb[0].mxu0
    %4125 = vmatprep.mubr.f32.mxu0 0.0
    %4126 = vmatmul.mubr.f32.gmra.mrb[0].mxu0 %v3820
    %v4127 = vpop.f32.mrb[0].mxu0
    %v4128 = vadd.f32 %v3983, %v4127
    %v4129 = vpop.f32.mrb[0].mxu0
    %4130 = vmatprep.mubr.f32.mxu0 0.0
    %4131 = vmatmul.mubr.f32.gmra.mrb[0].mxu0 %v3821
    %v4132 = vpop.f32.mrb[0].mxu0
    %v4133 = vadd.f32 %v3988, %v4132
    %v4134 = vpop.f32.mrb[0].mxu0
    %4135 = vmatprep.mubr.f32.mxu0 0.0
    %4136 = vmatmul.mubr.f32.gmra.mrb[0].mxu0 %v3822
    %v4137 = vpop.f32.mrb[0].mxu0
    %v4138 = vadd.f32 %v3993, %v4137
    %v4139 = vpop.f32.mrb[0].mxu0
    %4140 = vmatprep.mubr.f32.mxu0 0.0
    %4141 = vmatmul.mubr.f32.gmra.mrb[0].mxu0 %v3823
    %v4142 = vpop.f32.mrb[0].mxu0
    %v4143 = vadd.f32 %v3998, %v4142
    %v4144 = vpop.f32.mrb[0].mxu0
    %4145 = vmatprep.mubr.f32.mxu0 0.0
    %4146 = vmatmul.mubr.f32.gmra.mrb[0].mxu0 %v3824
    %v4147 = vpop.f32.mrb[0].mxu0
    %v4148 = vadd.f32 %v4003, %v4147
    %v4149 = vpop.f32.mrb[0].mxu0
    %4150 = vmatprep.mubr.f32.mxu0 0.0
    %4151 = vmatmul.mubr.f32.gmra.mrb[0].mxu0 %v3825
    %v4152 = vpop.f32.mrb[0].mxu0
    %v4153 = vadd.f32 %v4008, %v4152
    %v4154 = vpop.f32.mrb[0].mxu0
    %4155 = vmatprep.mubr.f32.mxu0 0.0
    %4156 = vmatmul.mubr.f32.gmra.mrb[0].mxu0 %v3826
    %v4157 = vpop.f32.mrb[0].mxu0
    %v4158 = vadd.f32 %v4013, %v4157
    %v4159 = vpop.f32.mrb[0].mxu0
    %4160 = vmatprep.mubr.f32.mxu0 0.0
    %4161 = vmatmul.mubr.f32.gmra.mrb[0].mxu0 %v3827
    %v4162 = vpop.f32.mrb[0].mxu0
    %v4163 = vadd.f32 %v4018, %v4162
    %v4164 = vpop.f32.mrb[0].mxu0
    %4165 = vdwg.mxu0
    %4166 = vmatprep.subr.mxu0 0.0
    %4167 = vmatpush1.msra.mxu0 %v3844
    %4168 = vmatprep.subr.mxu0 0.0
    %4169 = vmatpush1.msra.mxu0 %v3845
    %4170 = vmatprep.subr.mxu0 0.0
    %4171 = vmatpush1.msra.mxu0 %v3846
    %4172 = vmatprep.subr.mxu0 0.0
    %4173 = vmatpush1.msra.mxu0 %v3847
    %4174 = vmatprep.subr.mxu0 0.0
    %4175 = vmatpush1.msra.mxu0 %v3848
    %4176 = vmatprep.subr.mxu0 0.0
    %4177 = vmatpush1.msra.mxu0 %v3849
    %4178 = vmatprep.subr.mxu0 0.0
    %4179 = vmatpush1.msra.mxu0 %v3850
    %4180 = vmatprep.subr.mxu0 0.0
    %4181 = vmatpush1.msra.mxu0 %v3851
    %4182 = vmatprep.subr.mxu0 0.0
    %4183 = vmatpush1.msra.mxu0 %v3852
    %4184 = vmatprep.subr.mxu0 0.0
    %4185 = vmatpush1.msra.mxu0 %v3853
    %4186 = vmatprep.subr.mxu0 0.0
    %4187 = vmatpush1.msra.mxu0 %v3854
    %4188 = vmatprep.subr.mxu0 0.0
    %4189 = vmatpush1.msra.mxu0 %v3855
    %4190 = vmatprep.subr.mxu0 0.0
    %4191 = vmatpush1.msra.mxu0 %v3856
    %4192 = vmatprep.subr.mxu0 0.0
    %4193 = vmatpush1.msra.mxu0 %v3857
    %4194 = vmatprep.subr.mxu0 0.0
    %4195 = vmatpush1.msra.mxu0 %v3858
    %4196 = vmatprep.subr.mxu0 0.0
    %4197 = vmatpush1.msra.mxu0 %v3859
    %4198 = vmatprep.subr.mxu0 0.0
    %4199 = vmatpush1.msra.mxu0 0.0
    %4200 = vmatprep.subr.mxu0 0.0
    %4201 = vmatpush1.msra.mxu0 0.0
    %4202 = vmatprep.subr.mxu0 0.0
    %4203 = vmatpush1.msra.mxu0 0.0
    %4204 = vmatprep.subr.mxu0 0.0
    %4205 = vmatpush1.msra.mxu0 0.0
    %4206 = vmatprep.subr.mxu0 0.0
    %4207 = vmatpush1.msra.mxu0 0.0
    %4208 = vmatprep.subr.mxu0 0.0
    %4209 = vmatpush1.msra.mxu0 0.0
    %4210 = vmatprep.subr.mxu0 0.0
    %4211 = vmatpush1.msra.mxu0 0.0
    %4212 = vmatprep.subr.mxu0 0.0
    %4213 = vmatpush1.msra.mxu0 0.0
    %4214 = vmatprep.subr.mxu0 0.0
    %4215 = vmatpush1.msra.mxu0 0.0
    %4216 = vmatprep.subr.mxu0 0.0
    %4217 = vmatpush1.msra.mxu0 0.0
    %4218 = vmatprep.subr.mxu0 0.0
    %4219 = vmatpush1.msra.mxu0 0.0
    %4220 = vmatprep.subr.mxu0 0.0
    %4221 = vmatpush1.msra.mxu0 0.0
    %4222 = vmatprep.subr.mxu0 0.0
    %4223 = vmatpush1.msra.mxu0 0.0
    %4224 = vmatprep.subr.mxu0 0.0
    %4225 = vmatpush1.msra.mxu0 0.0
    %4226 = vmatprep.subr.mxu0 0.0
    %4227 = vmatpush1.msra.mxu0 0.0
    %4228 = vmatprep.subr.mxu0 0.0
    %4229 = vmatpush1.msra.mxu0 0.0
    %4230 = vmatprep.mubr.f32.mxu0 0.0
    %4231 = vmatmul.mubr.f32.gmra.mrb[0].mxu0 %v3828
    %v4232 = vpop.f32.mrb[0].mxu0
    %v4233 = vadd.f32 0.0, %v4232
    %v4234 = vpop.f32.mrb[0].mxu0
    %4235 = vmatprep.mubr.f32.mxu0 0.0
    %4236 = vmatmul.mubr.f32.gmra.mrb[0].mxu0 %v3829
    %v4237 = vpop.f32.mrb[0].mxu0
    %v4238 = vadd.f32 0.0, %v4237
    %v4239 = vpop.f32.mrb[0].mxu0
    %4240 = vmatprep.mubr.f32.mxu0 0.0
    %4241 = vmatmul.mubr.f32.gmra.mrb[0].mxu0 %v3830
    %v4242 = vpop.f32.mrb[0].mxu0
    %v4243 = vadd.f32 0.0, %v4242
    %v4244 = vpop.f32.mrb[0].mxu0
    %4245 = vmatprep.mubr.f32.mxu0 0.0
    %4246 = vmatmul.mubr.f32.gmra.mrb[0].mxu0 %v3831
    %v4247 = vpop.f32.mrb[0].mxu0
    %v4248 = vadd.f32 0.0, %v4247
    %v4249 = vpop.f32.mrb[0].mxu0
    %4250 = vmatprep.mubr.f32.mxu0 0.0
    %4251 = vmatmul.mubr.f32.gmra.mrb[0].mxu0 %v3832
    %v4252 = vpop.f32.mrb[0].mxu0
    %v4253 = vadd.f32 0.0, %v4252
    %v4254 = vpop.f32.mrb[0].mxu0
    %4255 = vmatprep.mubr.f32.mxu0 0.0
    %4256 = vmatmul.mubr.f32.gmra.mrb[0].mxu0 %v3833
    %v4257 = vpop.f32.mrb[0].mxu0
    %v4258 = vadd.f32 0.0, %v4257
    %v4259 = vpop.f32.mrb[0].mxu0
    %4260 = vmatprep.mubr.f32.mxu0 0.0
    %4261 = vmatmul.mubr.f32.gmra.mrb[0].mxu0 %v3834
    %v4262 = vpop.f32.mrb[0].mxu0
    %v4263 = vadd.f32 0.0, %v4262
    %v4264 = vpop.f32.mrb[0].mxu0
    %4265 = vmatprep.mubr.f32.mxu0 0.0
    %4266 = vmatmul.mubr.f32.gmra.mrb[0].mxu0 %v3835
    %v4267 = vpop.f32.mrb[0].mxu0
    %v4268 = vadd.f32 0.0, %v4267
    %v4269 = vpop.f32.mrb[0].mxu0
    %4270 = vmatprep.mubr.f32.mxu0 0.0
    %4271 = vmatmul.mubr.f32.gmra.mrb[0].mxu0 %v3836
    %v4272 = vpop.f32.mrb[0].mxu0
    %v4273 = vadd.f32 0.0, %v4272
    %v4274 = vpop.f32.mrb[0].mxu0
    %4275 = vmatprep.mubr.f32.mxu0 0.0
    %4276 = vmatmul.mubr.f32.gmra.mrb[0].mxu0 %v3837
    %v4277 = vpop.f32.mrb[0].mxu0
    %v4278 = vadd.f32 0.0, %v4277
    %v4279 = vpop.f32.mrb[0].mxu0
    %4280 = vmatprep.mubr.f32.mxu0 0.0
    %4281 = vmatmul.mubr.f32.gmra.mrb[0].mxu0 %v3838
    %v4282 = vpop.f32.mrb[0].mxu0
    %v4283 = vadd.f32 0.0, %v4282
    %v4284 = vpop.f32.mrb[0].mxu0
    %4285 = vmatprep.mubr.f32.mxu0 0.0
    %4286 = vmatmul.mubr.f32.gmra.mrb[0].mxu0 %v3839
    %v4287 = vpop.f32.mrb[0].mxu0
    %v4288 = vadd.f32 0.0, %v4287
    %v4289 = vpop.f32.mrb[0].mxu0
    %4290 = vmatprep.mubr.f32.mxu0 0.0
    %4291 = vmatmul.mubr.f32.gmra.mrb[0].mxu0 %v3840
    %v4292 = vpop.f32.mrb[0].mxu0
    %v4293 = vadd.f32 0.0, %v4292
    %v4294 = vpop.f32.mrb[0].mxu0
    %4295 = vmatprep.mubr.f32.mxu0 0.0
    %4296 = vmatmul.mubr.f32.gmra.mrb[0].mxu0 %v3841
    %v4297 = vpop.f32.mrb[0].mxu0
    %v4298 = vadd.f32 0.0, %v4297
    %v4299 = vpop.f32.mrb[0].mxu0
    %4300 = vmatprep.mubr.f32.mxu0 0.0
    %4301 = vmatmul.mubr.f32.gmra.mrb[0].mxu0 %v3842
    %v4302 = vpop.f32.mrb[0].mxu0
    %v4303 = vadd.f32 0.0, %v4302
    %v4304 = vpop.f32.mrb[0].mxu0
    %4305 = vmatprep.mubr.f32.mxu0 0.0
    %4306 = vmatmul.mubr.f32.gmra.mrb[0].mxu0 %v3843
    %v4307 = vpop.f32.mrb[0].mxu0
    %v4308 = vadd.f32 0.0, %v4307
    %v4309 = vpop.f32.mrb[0].mxu0
    %4310 = vdwg.mxu0
    %v4311 = vadd.f32 %v4088, %v4233
    %v4312 = vadd.f32 %v4093, %v4238
    %v4313 = vadd.f32 %v4098, %v4243
    %v4314 = vadd.f32 %v4103, %v4248
    %v4315 = vadd.f32 %v4108, %v4253
    %v4316 = vadd.f32 %v4113, %v4258
    %v4317 = vadd.f32 %v4118, %v4263
    %v4318 = vadd.f32 %v4123, %v4268
    %v4319 = vadd.f32 %v4128, %v4273
    %v4320 = vadd.f32 %v4133, %v4278
    %v4321 = vadd.f32 %v4138, %v4283
    %v4322 = vadd.f32 %v4143, %v4288
    %v4323 = vadd.f32 %v4148, %v4293
    %v4324 = vadd.f32 %v4153, %v4298
    %v4325 = vadd.f32 %v4158, %v4303
    %v4326 = vadd.f32 %v4163, %v4308
    %v4327 = vld [vmem:[%s11] sm:$0x1]
    %v4329 = vlaneseq
    %v4330 = vshrl.u32 %v4329, 7
    %v4331 = vsub.s32 0, %v4330
    %v4332 = vrot.slane %v4327, %v4331
    %v4334 = vadd.f32 %v4311, %v4332
    %v4335 = vadd.f32 %v4312, %v4332
    %v4336 = vadd.f32 %v4313, %v4332
    %v4337 = vadd.f32 %v4314, %v4332
    %v4338 = vadd.f32 %v4315, %v4332
    %v4339 = vadd.f32 %v4316, %v4332
    %v4340 = vadd.f32 %v4317, %v4332
    %v4341 = vadd.f32 %v4318, %v4332
    %v4342 = vadd.f32 %v4319, %v4332
    %v4343 = vadd.f32 %v4320, %v4332
    %v4344 = vadd.f32 %v4321, %v4332
    %v4345 = vadd.f32 %v4322, %v4332
    %v4346 = vadd.f32 %v4323, %v4332
    %v4347 = vadd.f32 %v4324, %v4332
    %v4348 = vadd.f32 %v4325, %v4332
    %v4349 = vadd.f32 %v4326, %v4332
    %v4350 = vmul.f32 %v109, %v4334
    %v4351 = vmul.f32 %v110, %v4335
    %v4352 = vmul.f32 %v111, %v4336
    %v4353 = vmul.f32 %v112, %v4337
    %v4354 = vmul.f32 %v113, %v4338
    %v4355 = vmul.f32 %v114, %v4339
    %v4356 = vmul.f32 %v115, %v4340
    %v4357 = vmul.f32 %v116, %v4341
    %v4358 = vmul.f32 %v117, %v4342
    %v4359 = vmul.f32 %v118, %v4343
    %v4360 = vmul.f32 %v119, %v4344
    %v4361 = vmul.f32 %v120, %v4345
    %v4362 = vmul.f32 %v121, %v4346
    %v4363 = vmul.f32 %v122, %v4347
    %v4364 = vmul.f32 %v123, %v4348
    %v4365 = vmul.f32 %v124, %v4349
    %v4366 = vadd.f32 %v109, %v4350
    %v4367 = vadd.f32 %v110, %v4351
    %v4368 = vadd.f32 %v111, %v4352
    %v4369 = vadd.f32 %v112, %v4353
    %v4370 = vadd.f32 %v113, %v4354
    %v4371 = vadd.f32 %v114, %v4355
    %v4372 = vadd.f32 %v115, %v4356
    %v4373 = vadd.f32 %v116, %v4357
    %v4374 = vadd.f32 %v117, %v4358
    %v4375 = vadd.f32 %v118, %v4359
    %v4376 = vadd.f32 %v119, %v4360
    %v4377 = vadd.f32 %v120, %v4361
    %v4378 = vadd.f32 %v121, %v4362
    %v4379 = vadd.f32 %v122, %v4363
    %v4380 = vadd.f32 %v123, %v4364
    %v4381 = vadd.f32 %v124, %v4365
    %vm4382 = vcmask 15360
    %4383 = vst.msk [vmem:[%s12] sm:$0xff] %vm4382, %v4366
    %4384 = vst.msk [vmem:[%s12 + $0x8] sm:$0xff] %vm4382, %v4367
    %4385 = vst.msk [vmem:[%s12 + $0x10] sm:$0xff] %vm4382, %v4368
    %4386 = vst.msk [vmem:[%s12 + $0x18] sm:$0xff] %vm4382, %v4369
    %4387 = vst.msk [vmem:[%s12 + $0x20] sm:$0xff] %vm4382, %v4370
    %4388 = vst.msk [vmem:[%s12 + $0x28] sm:$0xff] %vm4382, %v4371
    %4389 = vst.msk [vmem:[%s12 + $0x30] sm:$0xff] %vm4382, %v4372
    %4390 = vst.msk [vmem:[%s12 + $0x38] sm:$0xff] %vm4382, %v4373
    %4391 = vst.msk [vmem:[%s12 + $0x40] sm:$0xff] %vm4382, %v4374
    %4392 = vst.msk [vmem:[%s12 + $0x48] sm:$0xff] %vm4382, %v4375
    %4393 = vst.msk [vmem:[%s12 + $0x50] sm:$0xff] %vm4382, %v4376
    %4394 = vst.msk [vmem:[%s12 + $0x58] sm:$0xff] %vm4382, %v4377
    %4395 = vst.msk [vmem:[%s12 + $0x60] sm:$0xff] %vm4382, %v4378
    %4396 = vst.msk [vmem:[%s12 + $0x68] sm:$0xff] %vm4382, %v4379
    %4397 = vst.msk [vmem:[%s12 + $0x70] sm:$0xff] %vm4382, %v4380
    %4398 = vst.msk [vmem:[%s12 + $0x78] sm:$0xff] %vm4382, %v4381
    // Predicated region
    $region70: #{tpu_custom_call.1} parent=1 // pred_check
      _
    $region71: #{tpu_custom_call.1} parent=1 // pred_check_branch
      %4400 = sbr.rel (0) target = $region73
    $region72: #{tpu_custom_call.1} parent=1 // pred_region
      _
    $region73: #{tpu_custom_call.1} parent=1 // pred_fallthru
      _
    // Predicated region
    $region74: #{tpu_custom_call.1} parent=1 // pred_check
      _
    $region75: #{tpu_custom_call.1} parent=1 // pred_check_branch
      %4402 = sbr.rel (0) target = $region77
    $region76: #{tpu_custom_call.1} parent=1 // pred_region
      _
    $region77: #{tpu_custom_call.1} parent=1 // pred_fallthru
      _
    %4403 = vsyncpa [#allocation3], 1
    %4404 = vsyncpa [#allocation5], 1
    %4405 = vsyncpa [#allocation8], 1

</llo_original>
